<compile_context>
chip_gen: v6e
topology: v6e:2x2x1
jax: 0.10.0
libtpu: 0.0.40
codegen_flags: <defaults>
</compile_context>

<pallas_src>
import functools

import jax
import jax.numpy as jnp
from jax.experimental import pallas as pl
from jax.experimental.pallas import tpu as pltpu

NEG_SLOPE = 0.1           # intended negative slope (see note above)
LANE = 128                # lane granule: batch-tile rows are multiples of this
DEFAULT_TILE_B = 2048     # batch rows per grid step (step-overhead amortization)


def _round_up(n, m):
    return ((n + m - 1) // m) * m


def _cdiv(a, b):
    return (a + b - 1) // b


def _leaky_relu(x):
    # f32 elementwise on the VPU (v5e has no bf16 VALU path; slots have slack).
    return jnp.where(x > 0, x, NEG_SLOPE * x)


def _tile_plan(batch, tile_b):
    """Pick (tile_rows, padded_batch, num_tiles).

    - tiles are multiples of LANE so the (out_dim, tb) store is lane-dense,
    - when more than one tile is needed, use an even tile count with balanced
      sizes so v7x's 2 TensorCores (dimension_semantics="parallel") split the
      grid evenly instead of one core chewing a padding-heavy trailing tile.
    """
    n = max(1, _cdiv(batch, tile_b))
    if n > 1 and (n % 2):
        n += 1
    tb = _round_up(_cdiv(batch, n), LANE)
    return tb, tb * n, n


def discriminator_kernel(x_ref, w1_ref, b1_ref, w2_ref, b2_ref, w3t_ref, b3t_ref,
                         o_ref):
    hi = jax.lax.Precision.HIGHEST
    x = x_ref[...]                                           # (tb, in_dim) f32

    # fc1 + LeakyReLU
    h = jnp.dot(x, w1_ref[...], preferred_element_type=jnp.float32,
                precision=hi) + b1_ref[...]
    h = _leaky_relu(h)

    # fc2 + LeakyReLU
    h = jnp.dot(h, w2_ref[...], preferred_element_type=jnp.float32,
                precision=hi) + b2_ref[...]
    h = _leaky_relu(h)

    # fc3, computed directly in transposed orientation (out_dim, tb) so the
    # HBM store is lane-dense along the batch axis (no masked narrow stores).
    # 'ok,bk->ob' is the standard A.B^T contraction (flash-attn q.k^T pattern).
    out_t = jnp.einsum("ok,bk->ob", w3t_ref[...], h,
                       preferred_element_type=jnp.float32,
                       precision=hi) + b3t_ref[...]
    o_ref[...] = out_t.astype(o_ref.dtype)


@functools.partial(jax.jit, static_argnames=("tile_b",))
def discriminator_forward(x, params, *, tile_b=DEFAULT_TILE_B):
    """x: (B, input_size) f32.  params: dict of f32 arrays (w1,b1,w2,b2,w3,b3),
    weights stored as (in_features, out_features), biases as (1, out_features)."""
    w1, b1, w2, b2, w3, b3 = (params[k] for k in
                              ("w1", "b1", "w2", "b2", "w3", "b3"))
    B, in_dim = x.shape
    hid = w1.shape[1]
    out_dim = w3.shape[1]

    tb, b_pad, n_tiles = _tile_plan(B, tile_b)

    # Only the batch axis is padded (to a multiple of the tile); feature dims
    # keep their natural sizes so DMA / stores carry no padding bytes.
    x_p = jnp.pad(x, ((0, b_pad - B), (0, 0)))

    # fc3 weight/bias pre-transposed once (tiny, VMEM-resident) so the kernel
    # emits the result in (out_dim, tb) orientation.
    w3t = w3.T                         # (out_dim, hid)
    b3t = b3.reshape(out_dim, 1)       # (out_dim, 1)

    flops = 2 * b_pad * (in_dim * hid + hid * hid + hid * out_dim)
    bytes_accessed = (
        x_p.size * 4                                               # f32 x in
        + (w1.size + b1.size + w2.size + b2.size + w3.size + b3.size) * 4
        + b_pad * out_dim * 4)                                     # f32 out

    out_t = pl.pallas_call(
        discriminator_kernel,
        out_shape=jax.ShapeDtypeStruct((out_dim, b_pad), jnp.float32),
        grid=(n_tiles,),
        in_specs=[
            pl.BlockSpec((tb, in_dim), lambda i: (i, 0)),     # x: batch-tiled
            pl.BlockSpec((in_dim, hid), lambda i: (0, 0)),    # w1: resident
            pl.BlockSpec((1, hid), lambda i: (0, 0)),         # b1: resident
            pl.BlockSpec((hid, hid), lambda i: (0, 0)),       # w2: resident
            pl.BlockSpec((1, hid), lambda i: (0, 0)),         # b2: resident
            pl.BlockSpec((out_dim, hid), lambda i: (0, 0)),   # w3^T: resident
            pl.BlockSpec((out_dim, 1), lambda i: (0, 0)),     # b3^T: resident
        ],
        out_specs=pl.BlockSpec((out_dim, tb), lambda i: (0, i)),
        compiler_params=pltpu.CompilerParams(
            dimension_semantics=("parallel",)),               # megacore on v7x
        cost_estimate=pl.CostEstimate(
            flops=flops, transcendentals=0, bytes_accessed=bytes_accessed),
    )(x_p, w1, b1, w2, b2, w3t, b3t)

    return out_t[:, :B].T                                     # (B, out_dim)


def init_params(key, input_size, hidden_dim, output_size):
    """Deterministic init mimicking torch.nn.Linear default (U(+-1/sqrt(fan_in))).
    Weights stored as (in_features, out_features), f32."""
    def linear(k, fan_in, fan_out):
        kw, kb = jax.random.split(k)
        bound = 1.0 / (fan_in ** 0.5)
        w = jax.random.uniform(kw, (fan_in, fan_out), jnp.float32, -bound, bound)
        b = jax.random.uniform(kb, (1, fan_out), jnp.float32, -bound, bound)
        return w, b

    k1, k2, k3 = jax.random.split(key, 3)
    w1, b1 = linear(k1, input_size, hidden_dim)
    w2, b2 = linear(k2, hidden_dim, hidden_dim)
    w3, b3 = linear(k3, hidden_dim, output_size)
    return {"w1": w1, "b1": b1, "w2": w2, "b2": b2, "w3": w3, "b3": b3}


def reference_forward(x, p):
    hi = jax.lax.Precision.HIGHEST
    h = _leaky_relu(jnp.dot(x, p["w1"], precision=hi) + p["b1"])
    h = _leaky_relu(jnp.dot(h, p["w2"], precision=hi) + p["b2"])
    return jnp.dot(h, p["w3"], precision=hi) + p["b3"]


if __name__ == "__main__":
    key = jax.random.PRNGKey(0)
    k_params, k_x1, k_x2 = jax.random.split(key, 3)

    input_size = 16
    hidden_dim = 32
    output_size = 1
    params = init_params(k_params, input_size, hidden_dim, output_size)

    # Small batch: single grid step, batch padded up to one 128-row tile.
    x_small = jax.random.normal(k_x1, (8, input_size), jnp.float32)
    out_small = jax.block_until_ready(discriminator_forward(x_small, params))
    ref_small = reference_forward(x_small, params)
    assert out_small.shape == (8, output_size)
    assert jnp.allclose(out_small, ref_small, atol=1e-4, rtol=1e-4)

    # Larger batch exercising the balanced multi-tile path (forces 2 grid steps).
    x_big = jax.random.normal(k_x2, (300, input_size), jnp.float32)
    out_big = jax.block_until_ready(
        discriminator_forward(x_big, params, tile_b=256))
    ref_big = reference_forward(x_big, params)
    assert out_big.shape == (300, output_size)
    assert jnp.allclose(out_big, ref_big, atol=1e-4, rtol=1e-4)

    print("KERNEL_OK")
</pallas_src>

<mosaic_0001>
module attributes {stable_mosaic.version = 11 : i64} {
  func.func @discriminator_kernel(%arg0: i32, %arg1: memref<128x16xf32, #tpu.memory_space<vmem>>, %arg2: memref<16x32xf32, #tpu.memory_space<vmem>>, %arg3: memref<1x32xf32, #tpu.memory_space<vmem>>, %arg4: memref<32x32xf32, #tpu.memory_space<vmem>>, %arg5: memref<1x32xf32, #tpu.memory_space<vmem>>, %arg6: memref<1x32xf32, #tpu.memory_space<vmem>>, %arg7: memref<1x1xf32, #tpu.memory_space<vmem>>, %arg8: memref<1x128xf32, #tpu.memory_space<vmem>>) attributes {dimension_semantics = [#tpu.dimension_semantics<parallel>], iteration_bounds = array<i64: 1>, scalar_prefetch = 0 : i64, scratch_operands = 0 : i64, tpu.core_type = #tpu.core_type<tc>, window_params = [{transform_indices = @transform_0, window_bounds = array<i64: 128, 16>}, {pipeline_mode = #tpu.pipeline_mode<synchronous>, transform_indices = @transform_1, window_bounds = array<i64: 16, 32>}, {pipeline_mode = #tpu.pipeline_mode<synchronous>, transform_indices = @transform_2, window_bounds = array<i64: 1, 32>}, {pipeline_mode = #tpu.pipeline_mode<synchronous>, transform_indices = @transform_3, window_bounds = array<i64: 32, 32>}, {pipeline_mode = #tpu.pipeline_mode<synchronous>, transform_indices = @transform_4, window_bounds = array<i64: 1, 32>}, {pipeline_mode = #tpu.pipeline_mode<synchronous>, transform_indices = @transform_5, window_bounds = array<i64: 1, 32>}, {pipeline_mode = #tpu.pipeline_mode<synchronous>, transform_indices = @transform_6, window_bounds = array<i64: 1, 1>}, {transform_indices = @transform_7, window_bounds = array<i64: 1, 128>}]} {
    %c0 = arith.constant 0 : index
    %c0_0 = arith.constant 0 : index
    %0 = vector.load %arg1[%c0, %c0_0] : memref<128x16xf32, #tpu.memory_space<vmem>>, vector<128x16xf32>
    %c0_1 = arith.constant 0 : index
    %c0_2 = arith.constant 0 : index
    %1 = vector.load %arg2[%c0_1, %c0_2] : memref<16x32xf32, #tpu.memory_space<vmem>>, vector<16x32xf32>
    %cst = arith.constant dense<0.000000e+00> : vector<128x32xf32>
    %2 = tpu.matmul %0, %1, %cst {dimension_numbers = #tpu.dot_dimension_numbers<[1], [0], [0], [1], [0, 0, 1, 1], [], []>, precision = #tpu.contract_precision<fp32>} : vector<128x16xf32>, vector<16x32xf32>, vector<128x32xf32> -> vector<128x32xf32>
    %c0_3 = arith.constant 0 : index
    %c0_4 = arith.constant 0 : index
    %3 = vector.load %arg3[%c0_3, %c0_4] : memref<1x32xf32, #tpu.memory_space<vmem>>, vector<1x32xf32>
    %4 = vector.broadcast %3 : vector<1x32xf32> to vector<128x32xf32>
    %5 = arith.addf %2, %4 : vector<128x32xf32>
    %cst_5 = arith.constant 0.000000e+00 : f32
    %6 = vector.broadcast %cst_5 : f32 to vector<128x32xf32>
    %7 = arith.cmpf ogt, %5, %6 : vector<128x32xf32>
    %cst_6 = arith.constant 1.000000e-01 : f32
    %8 = vector.broadcast %cst_6 : f32 to vector<128x32xf32>
    %9 = arith.mulf %8, %5 : vector<128x32xf32>
    %10 = arith.select %7, %5, %9 : vector<128x32xi1>, vector<128x32xf32>
    %c0_7 = arith.constant 0 : index
    %c0_8 = arith.constant 0 : index
    %11 = vector.load %arg4[%c0_7, %c0_8] : memref<32x32xf32, #tpu.memory_space<vmem>>, vector<32x32xf32>
    %cst_9 = arith.constant dense<0.000000e+00> : vector<128x32xf32>
    %12 = tpu.matmul %10, %11, %cst_9 {dimension_numbers = #tpu.dot_dimension_numbers<[1], [0], [0], [1], [0, 0, 1, 1], [], []>, precision = #tpu.contract_precision<fp32>} : vector<128x32xf32>, vector<32x32xf32>, vector<128x32xf32> -> vector<128x32xf32>
    %c0_10 = arith.constant 0 : index
    %c0_11 = arith.constant 0 : index
    %13 = vector.load %arg5[%c0_10, %c0_11] : memref<1x32xf32, #tpu.memory_space<vmem>>, vector<1x32xf32>
    %14 = vector.broadcast %13 : vector<1x32xf32> to vector<128x32xf32>
    %15 = arith.addf %12, %14 : vector<128x32xf32>
    %cst_12 = arith.constant 0.000000e+00 : f32
    %16 = vector.broadcast %cst_12 : f32 to vector<128x32xf32>
    %17 = arith.cmpf ogt, %15, %16 : vector<128x32xf32>
    %cst_13 = arith.constant 1.000000e-01 : f32
    %18 = vector.broadcast %cst_13 : f32 to vector<128x32xf32>
    %19 = arith.mulf %18, %15 : vector<128x32xf32>
    %20 = arith.select %17, %15, %19 : vector<128x32xi1>, vector<128x32xf32>
    %c0_14 = arith.constant 0 : index
    %c0_15 = arith.constant 0 : index
    %21 = vector.load %arg6[%c0_14, %c0_15] : memref<1x32xf32, #tpu.memory_space<vmem>>, vector<1x32xf32>
    "tpu.trace_start"() <{level = 10 : i32, message = "ok,bk->ob"}> : () -> ()
    %cst_16 = arith.constant dense<0.000000e+00> : vector<1x128xf32>
    %22 = tpu.matmul %21, %20, %cst_16 {dimension_numbers = #tpu.dot_dimension_numbers<[1], [1], [0], [0], [0, 0, 1, 0], [], []>, precision = #tpu.contract_precision<fp32>} : vector<1x32xf32>, vector<128x32xf32>, vector<1x128xf32> -> vector<1x128xf32>
    "tpu.trace_stop"() : () -> ()
    %c0_17 = arith.constant 0 : index
    %c0_18 = arith.constant 0 : index
    %23 = vector.load %arg7[%c0_17, %c0_18] : memref<1x1xf32, #tpu.memory_space<vmem>>, vector<1x1xf32>
    %24 = vector.broadcast %23 : vector<1x1xf32> to vector<1x128xf32>
    %25 = arith.addf %22, %24 : vector<1x128xf32>
    %c0_19 = arith.constant 0 : index
    %c0_20 = arith.constant 0 : index
    %26 = vector.load %arg8[%c0_19, %c0_20] : memref<1x128xf32, #tpu.memory_space<vmem>>, vector<1x128xf32>
    tpu.vector_store %arg8[%c0_19, %c0_20], %25 {strides = array<i32>} : memref<1x128xf32, #tpu.memory_space<vmem>>, vector<1x128xf32>,
    return
  }
  func.func @transform_0(%arg0: i32) -> (i32, i32) {
    %c0_i32 = arith.constant 0 : i32
    %c0_i32_0 = arith.constant 0 : i32
    return %arg0, %c0_i32 : i32, i32
  }
  func.func @transform_1(%arg0: i32) -> (i32, i32) {
    %c0_i32 = arith.constant 0 : i32
    %c0_i32_0 = arith.constant 0 : i32
    %c0_i32_1 = arith.constant 0 : i32
    return %c0_i32, %c0_i32_0 : i32, i32
  }
  func.func @transform_2(%arg0: i32) -> (i32, i32) {
    %c0_i32 = arith.constant 0 : i32
    %c0_i32_0 = arith.constant 0 : i32
    %c0_i32_1 = arith.constant 0 : i32
    return %c0_i32, %c0_i32_0 : i32, i32
  }
  func.func @transform_3(%arg0: i32) -> (i32, i32) {
    %c0_i32 = arith.constant 0 : i32
    %c0_i32_0 = arith.constant 0 : i32
    %c0_i32_1 = arith.constant 0 : i32
    return %c0_i32, %c0_i32_0 : i32, i32
  }
  func.func @transform_4(%arg0: i32) -> (i32, i32) {
    %c0_i32 = arith.constant 0 : i32
    %c0_i32_0 = arith.constant 0 : i32
    %c0_i32_1 = arith.constant 0 : i32
    return %c0_i32, %c0_i32_0 : i32, i32
  }
  func.func @transform_5(%arg0: i32) -> (i32, i32) {
    %c0_i32 = arith.constant 0 : i32
    %c0_i32_0 = arith.constant 0 : i32
    %c0_i32_1 = arith.constant 0 : i32
    return %c0_i32, %c0_i32_0 : i32, i32
  }
  func.func @transform_6(%arg0: i32) -> (i32, i32) {
    %c0_i32 = arith.constant 0 : i32
    %c0_i32_0 = arith.constant 0 : i32
    %c0_i32_1 = arith.constant 0 : i32
    return %c0_i32, %c0_i32_0 : i32, i32
  }
  func.func @transform_7(%arg0: i32) -> (i32, i32) {
    %c0_i32 = arith.constant 0 : i32
    %c0_i32_0 = arith.constant 0 : i32
    return %c0_i32, %arg0 : i32, i32
  }
}

</mosaic_0001>

<llo_original>
// kernel: discriminator_forward.1
$region0: #{discriminator_forward.1}
  #allocation0 [shape = 'u32[]', space=smem, size = 0x4, offset = 0x4, fixed_abs, tag = 'smem constant byte address 0x4 - core index']
  #allocation1 [shape = 'u32[144,128]{1,0:T(1,128)}', space=vmem, size = 0x12000, scoped, tag = 'internal scratch']
  #allocation2 [shape = 'f32[1,1]{1,0:T(1,128)S(1)}', space=vmem, size = 0x200, scoped, tag = 'scoped memory for discriminator_forward.1']
  %s0 = inlined_call_operand.vmem [shape: f32[128,16], index: 0, kind: input, shape index: {}]
  %s1 = inlined_call_operand.vmem [shape: f32[16,32], index: 1, kind: input, shape index: {}]
  %s2 = inlined_call_operand.vmem [shape: f32[1,32], index: 2, kind: input, shape index: {}]
  %s3 = inlined_call_operand.vmem [shape: f32[32,32], index: 3, kind: input, shape index: {}]
  %s4 = inlined_call_operand.vmem [shape: f32[1,32], index: 4, kind: input, shape index: {}]
  %s5 = inlined_call_operand.vmem [shape: f32[1,32], index: 5, kind: input, shape index: {}]
  %s6 = inlined_call_operand.<no memory space> [shape: f32[1,1], index: 6, kind: input, shape index: {}]
  %s7 = inlined_call_operand.vmem [shape: f32[1,128], index: 7, kind: output, shape index: {}]
  %s8 = sld [smem:[#allocation0]]
  $region38: #{discriminator_forward.1} parent=0
    _
  %s10 = ssub.s32 1, %s8
  %s11 = scalar_select 0, %s10, %s8
  %v12 = vstv %s6
  %13 = vst [vmem:[#allocation2] sm:$0x1] %v12
  // Predicated region
  $region2: #{discriminator_forward.1} parent=0 // pred_check
    _
  $region3: #{discriminator_forward.1} parent=0 // pred_check_branch
    %15 = sbr.rel (0) target = $region5
  $region4: #{discriminator_forward.1} parent=0 // pred_region
    _
  $region5: #{discriminator_forward.1} parent=0 // pred_fallthru
    _
  // Predicated region
  $region6: #{discriminator_forward.1} parent=0 // pred_check
    _
  $region7: #{discriminator_forward.1} parent=0 // pred_check_branch
    %17 = sbr.rel (0) target = $region9
  $region8: #{discriminator_forward.1} parent=0 // pred_region
    _
  $region9: #{discriminator_forward.1} parent=0 // pred_fallthru
    _
  // Predicated region
  $region10: #{discriminator_forward.1} parent=0 // pred_check
    _
  $region11: #{discriminator_forward.1} parent=0 // pred_check_branch
    %19 = sbr.rel (0) target = $region13
  $region12: #{discriminator_forward.1} parent=0 // pred_region
    _
  $region13: #{discriminator_forward.1} parent=0 // pred_fallthru
    _
  // Predicated region
  $region14: #{discriminator_forward.1} parent=0 // pred_check
    _
  $region15: #{discriminator_forward.1} parent=0 // pred_check_branch
    %21 = sbr.rel (0) target = $region17
  $region16: #{discriminator_forward.1} parent=0 // pred_region
    _
  $region17: #{discriminator_forward.1} parent=0 // pred_fallthru
    _
  // Predicated region
  $region18: #{discriminator_forward.1} parent=0 // pred_check
    _
  $region19: #{discriminator_forward.1} parent=0 // pred_check_branch
    %23 = sbr.rel (0) target = $region21
  $region20: #{discriminator_forward.1} parent=0 // pred_region
    _
  $region21: #{discriminator_forward.1} parent=0 // pred_fallthru
    _
  // Predicated region
  $region22: #{discriminator_forward.1} parent=0 // pred_check
    _
  $region23: #{discriminator_forward.1} parent=0 // pred_check_branch
    %25 = sbr.rel (0) target = $region25
  $region24: #{discriminator_forward.1} parent=0 // pred_region
    _
  $region25: #{discriminator_forward.1} parent=0 // pred_fallthru
    _
  // Predicated region
  $region26: #{discriminator_forward.1} parent=0 // pred_check
    _
  $region27: #{discriminator_forward.1} parent=0 // pred_check_branch
    %27 = sbr.rel (0) target = $region29
  $region28: #{discriminator_forward.1} parent=0 // pred_region
    _
  $region29: #{discriminator_forward.1} parent=0 // pred_fallthru
    _
  %v28 = vld [vmem:[%s0] sm:$0xff]
  %v29 = vld [vmem:[%s0 + $0x8] sm:$0xff]
  %v30 = vld [vmem:[%s0 + $0x10] sm:$0xff]
  %v31 = vld [vmem:[%s0 + $0x18] sm:$0xff]
  %v32 = vld [vmem:[%s0 + $0x20] sm:$0xff]
  %v33 = vld [vmem:[%s0 + $0x28] sm:$0xff]
  %v34 = vld [vmem:[%s0 + $0x30] sm:$0xff]
  %v35 = vld [vmem:[%s0 + $0x38] sm:$0xff]
  %v36 = vld [vmem:[%s0 + $0x40] sm:$0xff]
  %v37 = vld [vmem:[%s0 + $0x48] sm:$0xff]
  %v38 = vld [vmem:[%s0 + $0x50] sm:$0xff]
  %v39 = vld [vmem:[%s0 + $0x58] sm:$0xff]
  %v40 = vld [vmem:[%s0 + $0x60] sm:$0xff]
  %v41 = vld [vmem:[%s0 + $0x68] sm:$0xff]
  %v42 = vld [vmem:[%s0 + $0x70] sm:$0xff]
  %v43 = vld [vmem:[%s0 + $0x78] sm:$0xff]
  %v44 = vld [vmem:[%s1] sm:$0xff]
  %v45 = vld [vmem:[%s1 + $0x8] sm:$0xff]
  %v46 = vld [vmem:[%s2] sm:$0x1]
  %v48 = vlaneseq
  %v49 = vshrl.u32 %v48, 7
  %v50 = vsub.s32 0, %v49
  %v51 = vrot.slane %v46, %v50
  %vm53 = vcmask 130048
  %v55 = vsel %vm53, %v28, 0
  %v58 = vsel %vm53, %v29, 0
  %v61 = vsel %vm53, %v30, 0
  %v64 = vsel %vm53, %v31, 0
  %v67 = vsel %vm53, %v32, 0
  %v70 = vsel %vm53, %v33, 0
  %v73 = vsel %vm53, %v34, 0
  %v76 = vsel %vm53, %v35, 0
  %v79 = vsel %vm53, %v36, 0
  %v82 = vsel %vm53, %v37, 0
  %v85 = vsel %vm53, %v38, 0
  %v88 = vsel %vm53, %v39, 0
  %v91 = vsel %vm53, %v40, 0
  %v94 = vsel %vm53, %v41, 0
  %v97 = vsel %vm53, %v42, 0
  %v100 = vsel %vm53, %v43, 0
  %102 = vmatprep.subr.mxu0 0.0
  %103 = vmatpush1.msra.mxu0 0.0
  %104 = vmatprep.subr.mxu0 0.0
  %105 = vmatpush1.msra.mxu0 0.0
  %106 = vmatprep.subr.mxu0 0.0
  %107 = vmatpush1.msra.mxu0 0.0
  %108 = vmatprep.subr.mxu0 0.0
  %109 = vmatpush1.msra.mxu0 0.0
  %110 = vmatprep.subr.mxu0 0.0
  %111 = vmatpush1.msra.mxu0 0.0
  %112 = vmatprep.subr.mxu0 0.0
  %113 = vmatpush1.msra.mxu0 0.0
  %114 = vmatprep.subr.mxu0 0.0
  %115 = vmatpush1.msra.mxu0 0.0
  %116 = vmatprep.subr.mxu0 0.0
  %117 = vmatpush1.msra.mxu0 0.0
  %118 = vmatprep.subr.mxu0 0.0
  %119 = vmatpush1.msra.mxu0 0.0
  %120 = vmatprep.subr.mxu0 0.0
  %121 = vmatpush1.msra.mxu0 0.0
  %122 = vmatprep.subr.mxu0 0.0
  %123 = vmatpush1.msra.mxu0 0.0
  %124 = vmatprep.subr.mxu0 0.0
  %125 = vmatpush1.msra.mxu0 0.0
  %126 = vmatprep.subr.mxu0 0.0
  %127 = vmatpush1.msra.mxu0 0.0
  %128 = vmatprep.subr.mxu0 0.0
  %129 = vmatpush1.msra.mxu0 0.0
  %130 = vmatprep.subr.mxu0 0.0
  %v131 = vand.u32 %v45, 4294901760
  %132 = vmatpush1.msra.mxu0 %v131
  %133 = vmatprep.subr.mxu0 0.0
  %v134 = vand.u32 %v44, 4294901760
  %135 = vmatpush1.msra.mxu0 %v134
  %136 = vmatprep.subr.mxu0 0.0
  %137 = vmatpush2.msra.mxu0 0.0
  %138 = vmatprep.subr.mxu0 0.0
  %139 = vmatpush2.msra.mxu0 0.0
  %140 = vmatprep.subr.mxu0 0.0
  %141 = vmatpush2.msra.mxu0 0.0
  %142 = vmatprep.subr.mxu0 0.0
  %143 = vmatpush2.msra.mxu0 0.0
  %144 = vmatprep.subr.mxu0 0.0
  %145 = vmatpush2.msra.mxu0 0.0
  %146 = vmatprep.subr.mxu0 0.0
  %147 = vmatpush2.msra.mxu0 0.0
  %148 = vmatprep.subr.mxu0 0.0
  %149 = vmatpush2.msra.mxu0 0.0
  %150 = vmatprep.subr.mxu0 0.0
  %151 = vmatpush2.msra.mxu0 0.0
  %152 = vmatprep.subr.mxu0 0.0
  %153 = vmatpush2.msra.mxu0 0.0
  %154 = vmatprep.subr.mxu0 0.0
  %155 = vmatpush2.msra.mxu0 0.0
  %156 = vmatprep.subr.mxu0 0.0
  %157 = vmatpush2.msra.mxu0 0.0
  %158 = vmatprep.subr.mxu0 0.0
  %159 = vmatpush2.msra.mxu0 0.0
  %160 = vmatprep.subr.mxu0 0.0
  %161 = vmatpush2.msra.mxu0 0.0
  %162 = vmatprep.subr.mxu0 0.0
  %163 = vmatpush2.msra.mxu0 0.0
  %164 = vmatprep.subr.mxu0 0.0
  %165 = vmatpush2.msra.mxu0 0.0
  %166 = vmatprep.subr.mxu0 0.0
  %167 = vmatpush2.msra.mxu0 0.0
  %168 = vmatprep.mubr.f32.mxu0 0.0
  %v169 = vand.u32 %v55, 4294901760
  %v170 = vsub.f32 %v55, %v169
  %v171 = vand.u32 %v170, 4294901760
  %v172 = vsub.f32 %v170, %v171
  %v173 = vand.u32 %v172, 4294901760
  %174 = vmatmul.mubr.f32.gmra.mxu0 %v173
  %v175 = vpop.f32.mrf.mxu0
  %v176 = vadd.f32 %v51, %v175
  %v177 = vpop.f32.mrf.mxu0
  %178 = vmatprep.mubr.f32.mxu0 0.0
  %v179 = vand.u32 %v58, 4294901760
  %v180 = vsub.f32 %v58, %v179
  %v181 = vand.u32 %v180, 4294901760
  %v182 = vsub.f32 %v180, %v181
  %v183 = vand.u32 %v182, 4294901760
  %184 = vmatmul.mubr.f32.gmra.mxu0 %v183
  %v185 = vpop.f32.mrf.mxu0
  %v186 = vadd.f32 %v51, %v185
  %v187 = vpop.f32.mrf.mxu0
  %188 = vmatprep.mubr.f32.mxu0 0.0
  %v189 = vand.u32 %v61, 4294901760
  %v190 = vsub.f32 %v61, %v189
  %v191 = vand.u32 %v190, 4294901760
  %v192 = vsub.f32 %v190, %v191
  %v193 = vand.u32 %v192, 4294901760
  %194 = vmatmul.mubr.f32.gmra.mxu0 %v193
  %v195 = vpop.f32.mrf.mxu0
  %v196 = vadd.f32 %v51, %v195
  %v197 = vpop.f32.mrf.mxu0
  %198 = vmatprep.mubr.f32.mxu0 0.0
  %v199 = vand.u32 %v64, 4294901760
  %v200 = vsub.f32 %v64, %v199
  %v201 = vand.u32 %v200, 4294901760
  %v202 = vsub.f32 %v200, %v201
  %v203 = vand.u32 %v202, 4294901760
  %204 = vmatmul.mubr.f32.gmra.mxu0 %v203
  %v205 = vpop.f32.mrf.mxu0
  %v206 = vadd.f32 %v51, %v205
  %v207 = vpop.f32.mrf.mxu0
  %208 = vmatprep.mubr.f32.mxu0 0.0
  %v209 = vand.u32 %v67, 4294901760
  %v210 = vsub.f32 %v67, %v209
  %v211 = vand.u32 %v210, 4294901760
  %v212 = vsub.f32 %v210, %v211
  %v213 = vand.u32 %v212, 4294901760
  %214 = vmatmul.mubr.f32.gmra.mxu0 %v213
  %v215 = vpop.f32.mrf.mxu0
  %v216 = vadd.f32 %v51, %v215
  %v217 = vpop.f32.mrf.mxu0
  %218 = vmatprep.mubr.f32.mxu0 0.0
  %v219 = vand.u32 %v70, 4294901760
  %v220 = vsub.f32 %v70, %v219
  %v221 = vand.u32 %v220, 4294901760
  %v222 = vsub.f32 %v220, %v221
  %v223 = vand.u32 %v222, 4294901760
  %224 = vmatmul.mubr.f32.gmra.mxu0 %v223
  %v225 = vpop.f32.mrf.mxu0
  %v226 = vadd.f32 %v51, %v225
  %v227 = vpop.f32.mrf.mxu0
  %228 = vmatprep.mubr.f32.mxu0 0.0
  %v229 = vand.u32 %v73, 4294901760
  %v230 = vsub.f32 %v73, %v229
  %v231 = vand.u32 %v230, 4294901760
  %v232 = vsub.f32 %v230, %v231
  %v233 = vand.u32 %v232, 4294901760
  %234 = vmatmul.mubr.f32.gmra.mxu0 %v233
  %v235 = vpop.f32.mrf.mxu0
  %v236 = vadd.f32 %v51, %v235
  %v237 = vpop.f32.mrf.mxu0
  %238 = vmatprep.mubr.f32.mxu0 0.0
  %v239 = vand.u32 %v76, 4294901760
  %v240 = vsub.f32 %v76, %v239
  %v241 = vand.u32 %v240, 4294901760
  %v242 = vsub.f32 %v240, %v241
  %v243 = vand.u32 %v242, 4294901760
  %244 = vmatmul.mubr.f32.gmra.mxu0 %v243
  %v245 = vpop.f32.mrf.mxu0
  %v246 = vadd.f32 %v51, %v245
  %v247 = vpop.f32.mrf.mxu0
  %248 = vmatprep.mubr.f32.mxu0 0.0
  %v249 = vand.u32 %v79, 4294901760
  %v250 = vsub.f32 %v79, %v249
  %v251 = vand.u32 %v250, 4294901760
  %v252 = vsub.f32 %v250, %v251
  %v253 = vand.u32 %v252, 4294901760
  %254 = vmatmul.mubr.f32.gmra.mxu0 %v253
  %v255 = vpop.f32.mrf.mxu0
  %v256 = vadd.f32 %v51, %v255
  %v257 = vpop.f32.mrf.mxu0
  %258 = vmatprep.mubr.f32.mxu0 0.0
  %v259 = vand.u32 %v82, 4294901760
  %v260 = vsub.f32 %v82, %v259
  %v261 = vand.u32 %v260, 4294901760
  %v262 = vsub.f32 %v260, %v261
  %v263 = vand.u32 %v262, 4294901760
  %264 = vmatmul.mubr.f32.gmra.mxu0 %v263
  %v265 = vpop.f32.mrf.mxu0
  %v266 = vadd.f32 %v51, %v265
  %v267 = vpop.f32.mrf.mxu0
  %268 = vmatprep.mubr.f32.mxu0 0.0
  %v269 = vand.u32 %v85, 4294901760
  %v270 = vsub.f32 %v85, %v269
  %v271 = vand.u32 %v270, 4294901760
  %v272 = vsub.f32 %v270, %v271
  %v273 = vand.u32 %v272, 4294901760
  %274 = vmatmul.mubr.f32.gmra.mxu0 %v273
  %v275 = vpop.f32.mrf.mxu0
  %v276 = vadd.f32 %v51, %v275
  %v277 = vpop.f32.mrf.mxu0
  %278 = vmatprep.mubr.f32.mxu0 0.0
  %v279 = vand.u32 %v88, 4294901760
  %v280 = vsub.f32 %v88, %v279
  %v281 = vand.u32 %v280, 4294901760
  %v282 = vsub.f32 %v280, %v281
  %v283 = vand.u32 %v282, 4294901760
  %284 = vmatmul.mubr.f32.gmra.mxu0 %v283
  %v285 = vpop.f32.mrf.mxu0
  %v286 = vadd.f32 %v51, %v285
  %v287 = vpop.f32.mrf.mxu0
  %288 = vmatprep.mubr.f32.mxu0 0.0
  %v289 = vand.u32 %v91, 4294901760
  %v290 = vsub.f32 %v91, %v289
  %v291 = vand.u32 %v290, 4294901760
  %v292 = vsub.f32 %v290, %v291
  %v293 = vand.u32 %v292, 4294901760
  %294 = vmatmul.mubr.f32.gmra.mxu0 %v293
  %v295 = vpop.f32.mrf.mxu0
  %v296 = vadd.f32 %v51, %v295
  %v297 = vpop.f32.mrf.mxu0
  %298 = vmatprep.mubr.f32.mxu0 0.0
  %v299 = vand.u32 %v94, 4294901760
  %v300 = vsub.f32 %v94, %v299
  %v301 = vand.u32 %v300, 4294901760
  %v302 = vsub.f32 %v300, %v301
  %v303 = vand.u32 %v302, 4294901760
  %304 = vmatmul.mubr.f32.gmra.mxu0 %v303
  %v305 = vpop.f32.mrf.mxu0
  %v306 = vadd.f32 %v51, %v305
  %v307 = vpop.f32.mrf.mxu0
  %308 = vmatprep.mubr.f32.mxu0 0.0
  %v309 = vand.u32 %v97, 4294901760
  %v310 = vsub.f32 %v97, %v309
  %v311 = vand.u32 %v310, 4294901760
  %v312 = vsub.f32 %v310, %v311
  %v313 = vand.u32 %v312, 4294901760
  %314 = vmatmul.mubr.f32.gmra.mxu0 %v313
  %v315 = vpop.f32.mrf.mxu0
  %v316 = vadd.f32 %v51, %v315
  %v317 = vpop.f32.mrf.mxu0
  %318 = vmatprep.mubr.f32.mxu0 0.0
  %v319 = vand.u32 %v100, 4294901760
  %v320 = vsub.f32 %v100, %v319
  %v321 = vand.u32 %v320, 4294901760
  %v322 = vsub.f32 %v320, %v321
  %v323 = vand.u32 %v322, 4294901760
  %324 = vmatmul.mubr.f32.gmra.mxu0 %v323
  %v325 = vpop.f32.mrf.mxu0
  %v326 = vadd.f32 %v51, %v325
  %v327 = vpop.f32.mrf.mxu0
  %328 = vdwg.mxu0
  %329 = vmatprep.subr.mxu0 0.0
  %330 = vmatpush1.msra.mxu0 0.0
  %331 = vmatprep.subr.mxu0 0.0
  %332 = vmatpush1.msra.mxu0 0.0
  %333 = vmatprep.subr.mxu0 0.0
  %334 = vmatpush1.msra.mxu0 0.0
  %335 = vmatprep.subr.mxu0 0.0
  %336 = vmatpush1.msra.mxu0 0.0
  %337 = vmatprep.subr.mxu0 0.0
  %338 = vmatpush1.msra.mxu0 0.0
  %339 = vmatprep.subr.mxu0 0.0
  %340 = vmatpush1.msra.mxu0 0.0
  %341 = vmatprep.subr.mxu0 0.0
  %342 = vmatpush1.msra.mxu0 0.0
  %343 = vmatprep.subr.mxu0 0.0
  %344 = vmatpush1.msra.mxu0 0.0
  %345 = vmatprep.subr.mxu0 0.0
  %346 = vmatpush1.msra.mxu0 0.0
  %347 = vmatprep.subr.mxu0 0.0
  %348 = vmatpush1.msra.mxu0 0.0
  %349 = vmatprep.subr.mxu0 0.0
  %350 = vmatpush1.msra.mxu0 0.0
  %351 = vmatprep.subr.mxu0 0.0
  %352 = vmatpush1.msra.mxu0 0.0
  %353 = vmatprep.subr.mxu0 0.0
  %354 = vmatpush1.msra.mxu0 0.0
  %355 = vmatprep.subr.mxu0 0.0
  %356 = vmatpush1.msra.mxu0 0.0
  %357 = vmatprep.subr.mxu0 0.0
  %v358 = vand.u32 %v45, 4294901760
  %v359 = vsub.f32 %v45, %v358
  %v360 = vand.u32 %v359, 4294901760
  %v361 = vsub.f32 %v359, %v360
  %v362 = vand.u32 %v361, 4294901760
  %363 = vmatpush1.msra.mxu0 %v362
  %364 = vmatprep.subr.mxu0 0.0
  %v365 = vand.u32 %v44, 4294901760
  %v366 = vsub.f32 %v44, %v365
  %v367 = vand.u32 %v366, 4294901760
  %v368 = vsub.f32 %v366, %v367
  %v369 = vand.u32 %v368, 4294901760
  %370 = vmatpush1.msra.mxu0 %v369
  %371 = vmatprep.subr.mxu0 0.0
  %372 = vmatpush2.msra.mxu0 0.0
  %373 = vmatprep.subr.mxu0 0.0
  %374 = vmatpush2.msra.mxu0 0.0
  %375 = vmatprep.subr.mxu0 0.0
  %376 = vmatpush2.msra.mxu0 0.0
  %377 = vmatprep.subr.mxu0 0.0
  %378 = vmatpush2.msra.mxu0 0.0
  %379 = vmatprep.subr.mxu0 0.0
  %380 = vmatpush2.msra.mxu0 0.0
  %381 = vmatprep.subr.mxu0 0.0
  %382 = vmatpush2.msra.mxu0 0.0
  %383 = vmatprep.subr.mxu0 0.0
  %384 = vmatpush2.msra.mxu0 0.0
  %385 = vmatprep.subr.mxu0 0.0
  %386 = vmatpush2.msra.mxu0 0.0
  %387 = vmatprep.subr.mxu0 0.0
  %388 = vmatpush2.msra.mxu0 0.0
  %389 = vmatprep.subr.mxu0 0.0
  %390 = vmatpush2.msra.mxu0 0.0
  %391 = vmatprep.subr.mxu0 0.0
  %392 = vmatpush2.msra.mxu0 0.0
  %393 = vmatprep.subr.mxu0 0.0
  %394 = vmatpush2.msra.mxu0 0.0
  %395 = vmatprep.subr.mxu0 0.0
  %396 = vmatpush2.msra.mxu0 0.0
  %397 = vmatprep.subr.mxu0 0.0
  %398 = vmatpush2.msra.mxu0 0.0
  %399 = vmatprep.subr.mxu0 0.0
  %400 = vmatpush2.msra.mxu0 0.0
  %401 = vmatprep.subr.mxu0 0.0
  %402 = vmatpush2.msra.mxu0 0.0
  %403 = vmatprep.mubr.f32.mxu0 0.0
  %v404 = vand.u32 %v55, 4294901760
  %405 = vmatmul.mubr.f32.gmra.mxu0 %v404
  %v406 = vpop.f32.mrf.mxu0
  %v407 = vadd.f32 %v176, %v406
  %v408 = vpop.f32.mrf.mxu0
  %409 = vmatprep.mubr.f32.mxu0 0.0
  %v410 = vand.u32 %v58, 4294901760
  %411 = vmatmul.mubr.f32.gmra.mxu0 %v410
  %v412 = vpop.f32.mrf.mxu0
  %v413 = vadd.f32 %v186, %v412
  %v414 = vpop.f32.mrf.mxu0
  %415 = vmatprep.mubr.f32.mxu0 0.0
  %v416 = vand.u32 %v61, 4294901760
  %417 = vmatmul.mubr.f32.gmra.mxu0 %v416
  %v418 = vpop.f32.mrf.mxu0
  %v419 = vadd.f32 %v196, %v418
  %v420 = vpop.f32.mrf.mxu0
  %421 = vmatprep.mubr.f32.mxu0 0.0
  %v422 = vand.u32 %v64, 4294901760
  %423 = vmatmul.mubr.f32.gmra.mxu0 %v422
  %v424 = vpop.f32.mrf.mxu0
  %v425 = vadd.f32 %v206, %v424
  %v426 = vpop.f32.mrf.mxu0
  %427 = vmatprep.mubr.f32.mxu0 0.0
  %v428 = vand.u32 %v67, 4294901760
  %429 = vmatmul.mubr.f32.gmra.mxu0 %v428
  %v430 = vpop.f32.mrf.mxu0
  %v431 = vadd.f32 %v216, %v430
  %v432 = vpop.f32.mrf.mxu0
  %433 = vmatprep.mubr.f32.mxu0 0.0
  %v434 = vand.u32 %v70, 4294901760
  %435 = vmatmul.mubr.f32.gmra.mxu0 %v434
  %v436 = vpop.f32.mrf.mxu0
  %v437 = vadd.f32 %v226, %v436
  %v438 = vpop.f32.mrf.mxu0
  %439 = vmatprep.mubr.f32.mxu0 0.0
  %v440 = vand.u32 %v73, 4294901760
  %441 = vmatmul.mubr.f32.gmra.mxu0 %v440
  %v442 = vpop.f32.mrf.mxu0
  %v443 = vadd.f32 %v236, %v442
  %v444 = vpop.f32.mrf.mxu0
  %445 = vmatprep.mubr.f32.mxu0 0.0
  %v446 = vand.u32 %v76, 4294901760
  %447 = vmatmul.mubr.f32.gmra.mxu0 %v446
  %v448 = vpop.f32.mrf.mxu0
  %v449 = vadd.f32 %v246, %v448
  %v450 = vpop.f32.mrf.mxu0
  %451 = vmatprep.mubr.f32.mxu0 0.0
  %v452 = vand.u32 %v79, 4294901760
  %453 = vmatmul.mubr.f32.gmra.mxu0 %v452
  %v454 = vpop.f32.mrf.mxu0
  %v455 = vadd.f32 %v256, %v454
  %v456 = vpop.f32.mrf.mxu0
  %457 = vmatprep.mubr.f32.mxu0 0.0
  %v458 = vand.u32 %v82, 4294901760
  %459 = vmatmul.mubr.f32.gmra.mxu0 %v458
  %v460 = vpop.f32.mrf.mxu0
  %v461 = vadd.f32 %v266, %v460
  %v462 = vpop.f32.mrf.mxu0
  %463 = vmatprep.mubr.f32.mxu0 0.0
  %v464 = vand.u32 %v85, 4294901760
  %465 = vmatmul.mubr.f32.gmra.mxu0 %v464
  %v466 = vpop.f32.mrf.mxu0
  %v467 = vadd.f32 %v276, %v466
  %v468 = vpop.f32.mrf.mxu0
  %469 = vmatprep.mubr.f32.mxu0 0.0
  %v470 = vand.u32 %v88, 4294901760
  %471 = vmatmul.mubr.f32.gmra.mxu0 %v470
  %v472 = vpop.f32.mrf.mxu0
  %v473 = vadd.f32 %v286, %v472
  %v474 = vpop.f32.mrf.mxu0
  %475 = vmatprep.mubr.f32.mxu0 0.0
  %v476 = vand.u32 %v91, 4294901760
  %477 = vmatmul.mubr.f32.gmra.mxu0 %v476
  %v478 = vpop.f32.mrf.mxu0
  %v479 = vadd.f32 %v296, %v478
  %v480 = vpop.f32.mrf.mxu0
  %481 = vmatprep.mubr.f32.mxu0 0.0
  %v482 = vand.u32 %v94, 4294901760
  %483 = vmatmul.mubr.f32.gmra.mxu0 %v482
  %v484 = vpop.f32.mrf.mxu0
  %v485 = vadd.f32 %v306, %v484
  %v486 = vpop.f32.mrf.mxu0
  %487 = vmatprep.mubr.f32.mxu0 0.0
  %v488 = vand.u32 %v97, 4294901760
  %489 = vmatmul.mubr.f32.gmra.mxu0 %v488
  %v490 = vpop.f32.mrf.mxu0
  %v491 = vadd.f32 %v316, %v490
  %v492 = vpop.f32.mrf.mxu0
  %493 = vmatprep.mubr.f32.mxu0 0.0
  %v494 = vand.u32 %v100, 4294901760
  %495 = vmatmul.mubr.f32.gmra.mxu0 %v494
  %v496 = vpop.f32.mrf.mxu0
  %v497 = vadd.f32 %v326, %v496
  %v498 = vpop.f32.mrf.mxu0
  %499 = vdwg.mxu0
  %500 = vmatprep.subr.mxu0 0.0
  %501 = vmatpush1.msra.mxu0 0.0
  %502 = vmatprep.subr.mxu0 0.0
  %503 = vmatpush1.msra.mxu0 0.0
  %504 = vmatprep.subr.mxu0 0.0
  %505 = vmatpush1.msra.mxu0 0.0
  %506 = vmatprep.subr.mxu0 0.0
  %507 = vmatpush1.msra.mxu0 0.0
  %508 = vmatprep.subr.mxu0 0.0
  %509 = vmatpush1.msra.mxu0 0.0
  %510 = vmatprep.subr.mxu0 0.0
  %511 = vmatpush1.msra.mxu0 0.0
  %512 = vmatprep.subr.mxu0 0.0
  %513 = vmatpush1.msra.mxu0 0.0
  %514 = vmatprep.subr.mxu0 0.0
  %515 = vmatpush1.msra.mxu0 0.0
  %516 = vmatprep.subr.mxu0 0.0
  %517 = vmatpush1.msra.mxu0 0.0
  %518 = vmatprep.subr.mxu0 0.0
  %519 = vmatpush1.msra.mxu0 0.0
  %520 = vmatprep.subr.mxu0 0.0
  %521 = vmatpush1.msra.mxu0 0.0
  %522 = vmatprep.subr.mxu0 0.0
  %523 = vmatpush1.msra.mxu0 0.0
  %524 = vmatprep.subr.mxu0 0.0
  %525 = vmatpush1.msra.mxu0 0.0
  %526 = vmatprep.subr.mxu0 0.0
  %527 = vmatpush1.msra.mxu0 0.0
  %528 = vmatprep.subr.mxu0 0.0
  %v529 = vand.u32 %v45, 4294901760
  %v530 = vsub.f32 %v45, %v529
  %531 = vmatpush1.msra.mxu0 %v530
  %532 = vmatprep.subr.mxu0 0.0
  %v533 = vand.u32 %v44, 4294901760
  %v534 = vsub.f32 %v44, %v533
  %535 = vmatpush1.msra.mxu0 %v534
  %536 = vmatprep.subr.mxu0 0.0
  %537 = vmatpush2.msra.mxu0 0.0
  %538 = vmatprep.subr.mxu0 0.0
  %539 = vmatpush2.msra.mxu0 0.0
  %540 = vmatprep.subr.mxu0 0.0
  %541 = vmatpush2.msra.mxu0 0.0
  %542 = vmatprep.subr.mxu0 0.0
  %543 = vmatpush2.msra.mxu0 0.0
  %544 = vmatprep.subr.mxu0 0.0
  %545 = vmatpush2.msra.mxu0 0.0
  %546 = vmatprep.subr.mxu0 0.0
  %547 = vmatpush2.msra.mxu0 0.0
  %548 = vmatprep.subr.mxu0 0.0
  %549 = vmatpush2.msra.mxu0 0.0
  %550 = vmatprep.subr.mxu0 0.0
  %551 = vmatpush2.msra.mxu0 0.0
  %552 = vmatprep.subr.mxu0 0.0
  %553 = vmatpush2.msra.mxu0 0.0
  %554 = vmatprep.subr.mxu0 0.0
  %555 = vmatpush2.msra.mxu0 0.0
  %556 = vmatprep.subr.mxu0 0.0
  %557 = vmatpush2.msra.mxu0 0.0
  %558 = vmatprep.subr.mxu0 0.0
  %559 = vmatpush2.msra.mxu0 0.0
  %560 = vmatprep.subr.mxu0 0.0
  %561 = vmatpush2.msra.mxu0 0.0
  %562 = vmatprep.subr.mxu0 0.0
  %563 = vmatpush2.msra.mxu0 0.0
  %564 = vmatprep.subr.mxu0 0.0
  %565 = vmatpush2.msra.mxu0 0.0
  %566 = vmatprep.subr.mxu0 0.0
  %567 = vmatpush2.msra.mxu0 0.0
  %568 = vmatprep.mubr.f32.mxu0 0.0
  %v569 = vand.u32 %v55, 4294901760
  %v570 = vsub.f32 %v55, %v569
  %571 = vmatmul.mubr.f32.gmra.mxu0 %v570
  %v572 = vpop.f32.mrf.mxu0
  %v573 = vadd.f32 %v407, %v572
  %v574 = vpop.f32.mrf.mxu0
  %575 = vmatprep.mubr.f32.mxu0 0.0
  %v576 = vand.u32 %v58, 4294901760
  %v577 = vsub.f32 %v58, %v576
  %578 = vmatmul.mubr.f32.gmra.mxu0 %v577
  %v579 = vpop.f32.mrf.mxu0
  %v580 = vadd.f32 %v413, %v579
  %v581 = vpop.f32.mrf.mxu0
  %582 = vmatprep.mubr.f32.mxu0 0.0
  %v583 = vand.u32 %v61, 4294901760
  %v584 = vsub.f32 %v61, %v583
  %585 = vmatmul.mubr.f32.gmra.mxu0 %v584
  %v586 = vpop.f32.mrf.mxu0
  %v587 = vadd.f32 %v419, %v586
  %v588 = vpop.f32.mrf.mxu0
  %589 = vmatprep.mubr.f32.mxu0 0.0
  %v590 = vand.u32 %v64, 4294901760
  %v591 = vsub.f32 %v64, %v590
  %592 = vmatmul.mubr.f32.gmra.mxu0 %v591
  %v593 = vpop.f32.mrf.mxu0
  %v594 = vadd.f32 %v425, %v593
  %v595 = vpop.f32.mrf.mxu0
  %596 = vmatprep.mubr.f32.mxu0 0.0
  %v597 = vand.u32 %v67, 4294901760
  %v598 = vsub.f32 %v67, %v597
  %599 = vmatmul.mubr.f32.gmra.mxu0 %v598
  %v600 = vpop.f32.mrf.mxu0
  %v601 = vadd.f32 %v431, %v600
  %v602 = vpop.f32.mrf.mxu0
  %603 = vmatprep.mubr.f32.mxu0 0.0
  %v604 = vand.u32 %v70, 4294901760
  %v605 = vsub.f32 %v70, %v604
  %606 = vmatmul.mubr.f32.gmra.mxu0 %v605
  %v607 = vpop.f32.mrf.mxu0
  %v608 = vadd.f32 %v437, %v607
  %v609 = vpop.f32.mrf.mxu0
  %610 = vmatprep.mubr.f32.mxu0 0.0
  %v611 = vand.u32 %v73, 4294901760
  %v612 = vsub.f32 %v73, %v611
  %613 = vmatmul.mubr.f32.gmra.mxu0 %v612
  %v614 = vpop.f32.mrf.mxu0
  %v615 = vadd.f32 %v443, %v614
  %v616 = vpop.f32.mrf.mxu0
  %617 = vmatprep.mubr.f32.mxu0 0.0
  %v618 = vand.u32 %v76, 4294901760
  %v619 = vsub.f32 %v76, %v618
  %620 = vmatmul.mubr.f32.gmra.mxu0 %v619
  %v621 = vpop.f32.mrf.mxu0
  %v622 = vadd.f32 %v449, %v621
  %v623 = vpop.f32.mrf.mxu0
  %624 = vmatprep.mubr.f32.mxu0 0.0
  %v625 = vand.u32 %v79, 4294901760
  %v626 = vsub.f32 %v79, %v625
  %627 = vmatmul.mubr.f32.gmra.mxu0 %v626
  %v628 = vpop.f32.mrf.mxu0
  %v629 = vadd.f32 %v455, %v628
  %v630 = vpop.f32.mrf.mxu0
  %631 = vmatprep.mubr.f32.mxu0 0.0
  %v632 = vand.u32 %v82, 4294901760
  %v633 = vsub.f32 %v82, %v632
  %634 = vmatmul.mubr.f32.gmra.mxu0 %v633
  %v635 = vpop.f32.mrf.mxu0
  %v636 = vadd.f32 %v461, %v635
  %v637 = vpop.f32.mrf.mxu0
  %638 = vmatprep.mubr.f32.mxu0 0.0
  %v639 = vand.u32 %v85, 4294901760
  %v640 = vsub.f32 %v85, %v639
  %641 = vmatmul.mubr.f32.gmra.mxu0 %v640
  %v642 = vpop.f32.mrf.mxu0
  %v643 = vadd.f32 %v467, %v642
  %v644 = vpop.f32.mrf.mxu0
  %645 = vmatprep.mubr.f32.mxu0 0.0
  %v646 = vand.u32 %v88, 4294901760
  %v647 = vsub.f32 %v88, %v646
  %648 = vmatmul.mubr.f32.gmra.mxu0 %v647
  %v649 = vpop.f32.mrf.mxu0
  %v650 = vadd.f32 %v473, %v649
  %v651 = vpop.f32.mrf.mxu0
  %652 = vmatprep.mubr.f32.mxu0 0.0
  %v653 = vand.u32 %v91, 4294901760
  %v654 = vsub.f32 %v91, %v653
  %655 = vmatmul.mubr.f32.gmra.mxu0 %v654
  %v656 = vpop.f32.mrf.mxu0
  %v657 = vadd.f32 %v479, %v656
  %v658 = vpop.f32.mrf.mxu0
  %659 = vmatprep.mubr.f32.mxu0 0.0
  %v660 = vand.u32 %v94, 4294901760
  %v661 = vsub.f32 %v94, %v660
  %662 = vmatmul.mubr.f32.gmra.mxu0 %v661
  %v663 = vpop.f32.mrf.mxu0
  %v664 = vadd.f32 %v485, %v663
  %v665 = vpop.f32.mrf.mxu0
  %666 = vmatprep.mubr.f32.mxu0 0.0
  %v667 = vand.u32 %v97, 4294901760
  %v668 = vsub.f32 %v97, %v667
  %669 = vmatmul.mubr.f32.gmra.mxu0 %v668
  %v670 = vpop.f32.mrf.mxu0
  %v671 = vadd.f32 %v491, %v670
  %v672 = vpop.f32.mrf.mxu0
  %673 = vmatprep.mubr.f32.mxu0 0.0
  %v674 = vand.u32 %v100, 4294901760
  %v675 = vsub.f32 %v100, %v674
  %676 = vmatmul.mubr.f32.gmra.mxu0 %v675
  %v677 = vpop.f32.mrf.mxu0
  %v678 = vadd.f32 %v497, %v677
  %v679 = vpop.f32.mrf.mxu0
  %680 = vdwg.mxu0
  %681 = vmatprep.subr.mxu0 0.0
  %682 = vmatpush1.msra.mxu0 0.0
  %683 = vmatprep.subr.mxu0 0.0
  %684 = vmatpush1.msra.mxu0 0.0
  %685 = vmatprep.subr.mxu0 0.0
  %686 = vmatpush1.msra.mxu0 0.0
  %687 = vmatprep.subr.mxu0 0.0
  %688 = vmatpush1.msra.mxu0 0.0
  %689 = vmatprep.subr.mxu0 0.0
  %690 = vmatpush1.msra.mxu0 0.0
  %691 = vmatprep.subr.mxu0 0.0
  %692 = vmatpush1.msra.mxu0 0.0
  %693 = vmatprep.subr.mxu0 0.0
  %694 = vmatpush1.msra.mxu0 0.0
  %695 = vmatprep.subr.mxu0 0.0
  %696 = vmatpush1.msra.mxu0 0.0
  %697 = vmatprep.subr.mxu0 0.0
  %698 = vmatpush1.msra.mxu0 0.0
  %699 = vmatprep.subr.mxu0 0.0
  %700 = vmatpush1.msra.mxu0 0.0
  %701 = vmatprep.subr.mxu0 0.0
  %702 = vmatpush1.msra.mxu0 0.0
  %703 = vmatprep.subr.mxu0 0.0
  %704 = vmatpush1.msra.mxu0 0.0
  %705 = vmatprep.subr.mxu0 0.0
  %706 = vmatpush1.msra.mxu0 0.0
  %707 = vmatprep.subr.mxu0 0.0
  %708 = vmatpush1.msra.mxu0 0.0
  %709 = vmatprep.subr.mxu0 0.0
  %v710 = vand.u32 %v45, 4294901760
  %711 = vmatpush1.msra.mxu0 %v710
  %712 = vmatprep.subr.mxu0 0.0
  %v713 = vand.u32 %v44, 4294901760
  %714 = vmatpush1.msra.mxu0 %v713
  %715 = vmatprep.subr.mxu0 0.0
  %716 = vmatpush2.msra.mxu0 0.0
  %717 = vmatprep.subr.mxu0 0.0
  %718 = vmatpush2.msra.mxu0 0.0
  %719 = vmatprep.subr.mxu0 0.0
  %720 = vmatpush2.msra.mxu0 0.0
  %721 = vmatprep.subr.mxu0 0.0
  %722 = vmatpush2.msra.mxu0 0.0
  %723 = vmatprep.subr.mxu0 0.0
  %724 = vmatpush2.msra.mxu0 0.0
  %725 = vmatprep.subr.mxu0 0.0
  %726 = vmatpush2.msra.mxu0 0.0
  %727 = vmatprep.subr.mxu0 0.0
  %728 = vmatpush2.msra.mxu0 0.0
  %729 = vmatprep.subr.mxu0 0.0
  %730 = vmatpush2.msra.mxu0 0.0
  %731 = vmatprep.subr.mxu0 0.0
  %732 = vmatpush2.msra.mxu0 0.0
  %733 = vmatprep.subr.mxu0 0.0
  %734 = vmatpush2.msra.mxu0 0.0
  %735 = vmatprep.subr.mxu0 0.0
  %736 = vmatpush2.msra.mxu0 0.0
  %737 = vmatprep.subr.mxu0 0.0
  %738 = vmatpush2.msra.mxu0 0.0
  %739 = vmatprep.subr.mxu0 0.0
  %740 = vmatpush2.msra.mxu0 0.0
  %741 = vmatprep.subr.mxu0 0.0
  %742 = vmatpush2.msra.mxu0 0.0
  %743 = vmatprep.subr.mxu0 0.0
  %744 = vmatpush2.msra.mxu0 0.0
  %745 = vmatprep.subr.mxu0 0.0
  %746 = vmatpush2.msra.mxu0 0.0
  %747 = vmatprep.mubr.f32.mxu0 0.0
  %v748 = vand.u32 %v55, 4294901760
  %v749 = vsub.f32 %v55, %v748
  %v750 = vand.u32 %v749, 4294901760
  %751 = vmatmul.mubr.f32.gmra.mxu0 %v750
  %v752 = vpop.f32.mrf.mxu0
  %v753 = vadd.f32 %v573, %v752
  %v754 = vpop.f32.mrf.mxu0
  %755 = vmatprep.mubr.f32.mxu0 0.0
  %v756 = vand.u32 %v58, 4294901760
  %v757 = vsub.f32 %v58, %v756
  %v758 = vand.u32 %v757, 4294901760
  %759 = vmatmul.mubr.f32.gmra.mxu0 %v758
  %v760 = vpop.f32.mrf.mxu0
  %v761 = vadd.f32 %v580, %v760
  %v762 = vpop.f32.mrf.mxu0
  %763 = vmatprep.mubr.f32.mxu0 0.0
  %v764 = vand.u32 %v61, 4294901760
  %v765 = vsub.f32 %v61, %v764
  %v766 = vand.u32 %v765, 4294901760
  %767 = vmatmul.mubr.f32.gmra.mxu0 %v766
  %v768 = vpop.f32.mrf.mxu0
  %v769 = vadd.f32 %v587, %v768
  %v770 = vpop.f32.mrf.mxu0
  %771 = vmatprep.mubr.f32.mxu0 0.0
  %v772 = vand.u32 %v64, 4294901760
  %v773 = vsub.f32 %v64, %v772
  %v774 = vand.u32 %v773, 4294901760
  %775 = vmatmul.mubr.f32.gmra.mxu0 %v774
  %v776 = vpop.f32.mrf.mxu0
  %v777 = vadd.f32 %v594, %v776
  %v778 = vpop.f32.mrf.mxu0
  %779 = vmatprep.mubr.f32.mxu0 0.0
  %v780 = vand.u32 %v67, 4294901760
  %v781 = vsub.f32 %v67, %v780
  %v782 = vand.u32 %v781, 4294901760
  %783 = vmatmul.mubr.f32.gmra.mxu0 %v782
  %v784 = vpop.f32.mrf.mxu0
  %v785 = vadd.f32 %v601, %v784
  %v786 = vpop.f32.mrf.mxu0
  %787 = vmatprep.mubr.f32.mxu0 0.0
  %v788 = vand.u32 %v70, 4294901760
  %v789 = vsub.f32 %v70, %v788
  %v790 = vand.u32 %v789, 4294901760
  %791 = vmatmul.mubr.f32.gmra.mxu0 %v790
  %v792 = vpop.f32.mrf.mxu0
  %v793 = vadd.f32 %v608, %v792
  %v794 = vpop.f32.mrf.mxu0
  %795 = vmatprep.mubr.f32.mxu0 0.0
  %v796 = vand.u32 %v73, 4294901760
  %v797 = vsub.f32 %v73, %v796
  %v798 = vand.u32 %v797, 4294901760
  %799 = vmatmul.mubr.f32.gmra.mxu0 %v798
  %v800 = vpop.f32.mrf.mxu0
  %v801 = vadd.f32 %v615, %v800
  %v802 = vpop.f32.mrf.mxu0
  %803 = vmatprep.mubr.f32.mxu0 0.0
  %v804 = vand.u32 %v76, 4294901760
  %v805 = vsub.f32 %v76, %v804
  %v806 = vand.u32 %v805, 4294901760
  %807 = vmatmul.mubr.f32.gmra.mxu0 %v806
  %v808 = vpop.f32.mrf.mxu0
  %v809 = vadd.f32 %v622, %v808
  %v810 = vpop.f32.mrf.mxu0
  %811 = vmatprep.mubr.f32.mxu0 0.0
  %v812 = vand.u32 %v79, 4294901760
  %v813 = vsub.f32 %v79, %v812
  %v814 = vand.u32 %v813, 4294901760
  %815 = vmatmul.mubr.f32.gmra.mxu0 %v814
  %v816 = vpop.f32.mrf.mxu0
  %v817 = vadd.f32 %v629, %v816
  %v818 = vpop.f32.mrf.mxu0
  %819 = vmatprep.mubr.f32.mxu0 0.0
  %v820 = vand.u32 %v82, 4294901760
  %v821 = vsub.f32 %v82, %v820
  %v822 = vand.u32 %v821, 4294901760
  %823 = vmatmul.mubr.f32.gmra.mxu0 %v822
  %v824 = vpop.f32.mrf.mxu0
  %v825 = vadd.f32 %v636, %v824
  %v826 = vpop.f32.mrf.mxu0
  %827 = vmatprep.mubr.f32.mxu0 0.0
  %v828 = vand.u32 %v85, 4294901760
  %v829 = vsub.f32 %v85, %v828
  %v830 = vand.u32 %v829, 4294901760
  %831 = vmatmul.mubr.f32.gmra.mxu0 %v830
  %v832 = vpop.f32.mrf.mxu0
  %v833 = vadd.f32 %v643, %v832
  %v834 = vpop.f32.mrf.mxu0
  %835 = vmatprep.mubr.f32.mxu0 0.0
  %v836 = vand.u32 %v88, 4294901760
  %v837 = vsub.f32 %v88, %v836
  %v838 = vand.u32 %v837, 4294901760
  %839 = vmatmul.mubr.f32.gmra.mxu0 %v838
  %v840 = vpop.f32.mrf.mxu0
  %v841 = vadd.f32 %v650, %v840
  %v842 = vpop.f32.mrf.mxu0
  %843 = vmatprep.mubr.f32.mxu0 0.0
  %v844 = vand.u32 %v91, 4294901760
  %v845 = vsub.f32 %v91, %v844
  %v846 = vand.u32 %v845, 4294901760
  %847 = vmatmul.mubr.f32.gmra.mxu0 %v846
  %v848 = vpop.f32.mrf.mxu0
  %v849 = vadd.f32 %v657, %v848
  %v850 = vpop.f32.mrf.mxu0
  %851 = vmatprep.mubr.f32.mxu0 0.0
  %v852 = vand.u32 %v94, 4294901760
  %v853 = vsub.f32 %v94, %v852
  %v854 = vand.u32 %v853, 4294901760
  %855 = vmatmul.mubr.f32.gmra.mxu0 %v854
  %v856 = vpop.f32.mrf.mxu0
  %v857 = vadd.f32 %v664, %v856
  %v858 = vpop.f32.mrf.mxu0
  %859 = vmatprep.mubr.f32.mxu0 0.0
  %v860 = vand.u32 %v97, 4294901760
  %v861 = vsub.f32 %v97, %v860
  %v862 = vand.u32 %v861, 4294901760
  %863 = vmatmul.mubr.f32.gmra.mxu0 %v862
  %v864 = vpop.f32.mrf.mxu0
  %v865 = vadd.f32 %v671, %v864
  %v866 = vpop.f32.mrf.mxu0
  %867 = vmatprep.mubr.f32.mxu0 0.0
  %v868 = vand.u32 %v100, 4294901760
  %v869 = vsub.f32 %v100, %v868
  %v870 = vand.u32 %v869, 4294901760
  %871 = vmatmul.mubr.f32.gmra.mxu0 %v870
  %v872 = vpop.f32.mrf.mxu0
  %v873 = vadd.f32 %v678, %v872
  %v874 = vpop.f32.mrf.mxu0
  %875 = vdwg.mxu0
  %876 = vmatprep.subr.mxu0 0.0
  %877 = vmatpush1.msra.mxu0 0.0
  %878 = vmatprep.subr.mxu0 0.0
  %879 = vmatpush1.msra.mxu0 0.0
  %880 = vmatprep.subr.mxu0 0.0
  %881 = vmatpush1.msra.mxu0 0.0
  %882 = vmatprep.subr.mxu0 0.0
  %883 = vmatpush1.msra.mxu0 0.0
  %884 = vmatprep.subr.mxu0 0.0
  %885 = vmatpush1.msra.mxu0 0.0
  %886 = vmatprep.subr.mxu0 0.0
  %887 = vmatpush1.msra.mxu0 0.0
  %888 = vmatprep.subr.mxu0 0.0
  %889 = vmatpush1.msra.mxu0 0.0
  %890 = vmatprep.subr.mxu0 0.0
  %891 = vmatpush1.msra.mxu0 0.0
  %892 = vmatprep.subr.mxu0 0.0
  %893 = vmatpush1.msra.mxu0 0.0
  %894 = vmatprep.subr.mxu0 0.0
  %895 = vmatpush1.msra.mxu0 0.0
  %896 = vmatprep.subr.mxu0 0.0
  %897 = vmatpush1.msra.mxu0 0.0
  %898 = vmatprep.subr.mxu0 0.0
  %899 = vmatpush1.msra.mxu0 0.0
  %900 = vmatprep.subr.mxu0 0.0
  %901 = vmatpush1.msra.mxu0 0.0
  %902 = vmatprep.subr.mxu0 0.0
  %903 = vmatpush1.msra.mxu0 0.0
  %904 = vmatprep.subr.mxu0 0.0
  %v905 = vand.u32 %v45, 4294901760
  %v906 = vsub.f32 %v45, %v905
  %v907 = vand.u32 %v906, 4294901760
  %908 = vmatpush1.msra.mxu0 %v907
  %909 = vmatprep.subr.mxu0 0.0
  %v910 = vand.u32 %v44, 4294901760
  %v911 = vsub.f32 %v44, %v910
  %v912 = vand.u32 %v911, 4294901760
  %913 = vmatpush1.msra.mxu0 %v912
  %914 = vmatprep.subr.mxu0 0.0
  %915 = vmatpush2.msra.mxu0 0.0
  %916 = vmatprep.subr.mxu0 0.0
  %917 = vmatpush2.msra.mxu0 0.0
  %918 = vmatprep.subr.mxu0 0.0
  %919 = vmatpush2.msra.mxu0 0.0
  %920 = vmatprep.subr.mxu0 0.0
  %921 = vmatpush2.msra.mxu0 0.0
  %922 = vmatprep.subr.mxu0 0.0
  %923 = vmatpush2.msra.mxu0 0.0
  %924 = vmatprep.subr.mxu0 0.0
  %925 = vmatpush2.msra.mxu0 0.0
  %926 = vmatprep.subr.mxu0 0.0
  %927 = vmatpush2.msra.mxu0 0.0
  %928 = vmatprep.subr.mxu0 0.0
  %929 = vmatpush2.msra.mxu0 0.0
  %930 = vmatprep.subr.mxu0 0.0
  %931 = vmatpush2.msra.mxu0 0.0
  %932 = vmatprep.subr.mxu0 0.0
  %933 = vmatpush2.msra.mxu0 0.0
  %934 = vmatprep.subr.mxu0 0.0
  %935 = vmatpush2.msra.mxu0 0.0
  %936 = vmatprep.subr.mxu0 0.0
  %937 = vmatpush2.msra.mxu0 0.0
  %938 = vmatprep.subr.mxu0 0.0
  %939 = vmatpush2.msra.mxu0 0.0
  %940 = vmatprep.subr.mxu0 0.0
  %941 = vmatpush2.msra.mxu0 0.0
  %942 = vmatprep.subr.mxu0 0.0
  %943 = vmatpush2.msra.mxu0 0.0
  %944 = vmatprep.subr.mxu0 0.0
  %945 = vmatpush2.msra.mxu0 0.0
  %946 = vmatprep.mubr.f32.mxu0 0.0
  %v947 = vand.u32 %v55, 4294901760
  %948 = vmatmul.mubr.f32.gmra.mxu0 %v947
  %v949 = vpop.f32.mrf.mxu0
  %v950 = vadd.f32 %v753, %v949
  %v951 = vpop.f32.mrf.mxu0
  %952 = vmatprep.mubr.f32.mxu0 0.0
  %v953 = vand.u32 %v58, 4294901760
  %954 = vmatmul.mubr.f32.gmra.mxu0 %v953
  %v955 = vpop.f32.mrf.mxu0
  %v956 = vadd.f32 %v761, %v955
  %v957 = vpop.f32.mrf.mxu0
  %958 = vmatprep.mubr.f32.mxu0 0.0
  %v959 = vand.u32 %v61, 4294901760
  %960 = vmatmul.mubr.f32.gmra.mxu0 %v959
  %v961 = vpop.f32.mrf.mxu0
  %v962 = vadd.f32 %v769, %v961
  %v963 = vpop.f32.mrf.mxu0
  %964 = vmatprep.mubr.f32.mxu0 0.0
  %v965 = vand.u32 %v64, 4294901760
  %966 = vmatmul.mubr.f32.gmra.mxu0 %v965
  %v967 = vpop.f32.mrf.mxu0
  %v968 = vadd.f32 %v777, %v967
  %v969 = vpop.f32.mrf.mxu0
  %970 = vmatprep.mubr.f32.mxu0 0.0
  %v971 = vand.u32 %v67, 4294901760
  %972 = vmatmul.mubr.f32.gmra.mxu0 %v971
  %v973 = vpop.f32.mrf.mxu0
  %v974 = vadd.f32 %v785, %v973
  %v975 = vpop.f32.mrf.mxu0
  %976 = vmatprep.mubr.f32.mxu0 0.0
  %v977 = vand.u32 %v70, 4294901760
  %978 = vmatmul.mubr.f32.gmra.mxu0 %v977
  %v979 = vpop.f32.mrf.mxu0
  %v980 = vadd.f32 %v793, %v979
  %v981 = vpop.f32.mrf.mxu0
  %982 = vmatprep.mubr.f32.mxu0 0.0
  %v983 = vand.u32 %v73, 4294901760
  %984 = vmatmul.mubr.f32.gmra.mxu0 %v983
  %v985 = vpop.f32.mrf.mxu0
  %v986 = vadd.f32 %v801, %v985
  %v987 = vpop.f32.mrf.mxu0
  %988 = vmatprep.mubr.f32.mxu0 0.0
  %v989 = vand.u32 %v76, 4294901760
  %990 = vmatmul.mubr.f32.gmra.mxu0 %v989
  %v991 = vpop.f32.mrf.mxu0
  %v992 = vadd.f32 %v809, %v991
  %v993 = vpop.f32.mrf.mxu0
  %994 = vmatprep.mubr.f32.mxu0 0.0
  %v995 = vand.u32 %v79, 4294901760
  %996 = vmatmul.mubr.f32.gmra.mxu0 %v995
  %v997 = vpop.f32.mrf.mxu0
  %v998 = vadd.f32 %v817, %v997
  %v999 = vpop.f32.mrf.mxu0
  %1000 = vmatprep.mubr.f32.mxu0 0.0
  %v1001 = vand.u32 %v82, 4294901760
  %1002 = vmatmul.mubr.f32.gmra.mxu0 %v1001
  %v1003 = vpop.f32.mrf.mxu0
  %v1004 = vadd.f32 %v825, %v1003
  %v1005 = vpop.f32.mrf.mxu0
  %1006 = vmatprep.mubr.f32.mxu0 0.0
  %v1007 = vand.u32 %v85, 4294901760
  %1008 = vmatmul.mubr.f32.gmra.mxu0 %v1007
  %v1009 = vpop.f32.mrf.mxu0
  %v1010 = vadd.f32 %v833, %v1009
  %v1011 = vpop.f32.mrf.mxu0
  %1012 = vmatprep.mubr.f32.mxu0 0.0
  %v1013 = vand.u32 %v88, 4294901760
  %1014 = vmatmul.mubr.f32.gmra.mxu0 %v1013
  %v1015 = vpop.f32.mrf.mxu0
  %v1016 = vadd.f32 %v841, %v1015
  %v1017 = vpop.f32.mrf.mxu0
  %1018 = vmatprep.mubr.f32.mxu0 0.0
  %v1019 = vand.u32 %v91, 4294901760
  %1020 = vmatmul.mubr.f32.gmra.mxu0 %v1019
  %v1021 = vpop.f32.mrf.mxu0
  %v1022 = vadd.f32 %v849, %v1021
  %v1023 = vpop.f32.mrf.mxu0
  %1024 = vmatprep.mubr.f32.mxu0 0.0
  %v1025 = vand.u32 %v94, 4294901760
  %1026 = vmatmul.mubr.f32.gmra.mxu0 %v1025
  %v1027 = vpop.f32.mrf.mxu0
  %v1028 = vadd.f32 %v857, %v1027
  %v1029 = vpop.f32.mrf.mxu0
  %1030 = vmatprep.mubr.f32.mxu0 0.0
  %v1031 = vand.u32 %v97, 4294901760
  %1032 = vmatmul.mubr.f32.gmra.mxu0 %v1031
  %v1033 = vpop.f32.mrf.mxu0
  %v1034 = vadd.f32 %v865, %v1033
  %v1035 = vpop.f32.mrf.mxu0
  %1036 = vmatprep.mubr.f32.mxu0 0.0
  %v1037 = vand.u32 %v100, 4294901760
  %1038 = vmatmul.mubr.f32.gmra.mxu0 %v1037
  %v1039 = vpop.f32.mrf.mxu0
  %v1040 = vadd.f32 %v873, %v1039
  %v1041 = vpop.f32.mrf.mxu0
  %1042 = vdwg.mxu0
  %1043 = vmatprep.subr.mxu0 0.0
  %1044 = vmatpush1.msra.mxu0 0.0
  %1045 = vmatprep.subr.mxu0 0.0
  %1046 = vmatpush1.msra.mxu0 0.0
  %1047 = vmatprep.subr.mxu0 0.0
  %1048 = vmatpush1.msra.mxu0 0.0
  %1049 = vmatprep.subr.mxu0 0.0
  %1050 = vmatpush1.msra.mxu0 0.0
  %1051 = vmatprep.subr.mxu0 0.0
  %1052 = vmatpush1.msra.mxu0 0.0
  %1053 = vmatprep.subr.mxu0 0.0
  %1054 = vmatpush1.msra.mxu0 0.0
  %1055 = vmatprep.subr.mxu0 0.0
  %1056 = vmatpush1.msra.mxu0 0.0
  %1057 = vmatprep.subr.mxu0 0.0
  %1058 = vmatpush1.msra.mxu0 0.0
  %1059 = vmatprep.subr.mxu0 0.0
  %1060 = vmatpush1.msra.mxu0 0.0
  %1061 = vmatprep.subr.mxu0 0.0
  %1062 = vmatpush1.msra.mxu0 0.0
  %1063 = vmatprep.subr.mxu0 0.0
  %1064 = vmatpush1.msra.mxu0 0.0
  %1065 = vmatprep.subr.mxu0 0.0
  %1066 = vmatpush1.msra.mxu0 0.0
  %1067 = vmatprep.subr.mxu0 0.0
  %1068 = vmatpush1.msra.mxu0 0.0
  %1069 = vmatprep.subr.mxu0 0.0
  %1070 = vmatpush1.msra.mxu0 0.0
  %1071 = vmatprep.subr.mxu0 0.0
  %v1072 = vand.u32 %v45, 4294901760
  %1073 = vmatpush1.msra.mxu0 %v1072
  %1074 = vmatprep.subr.mxu0 0.0
  %v1075 = vand.u32 %v44, 4294901760
  %1076 = vmatpush1.msra.mxu0 %v1075
  %1077 = vmatprep.subr.mxu0 0.0
  %1078 = vmatpush2.msra.mxu0 0.0
  %1079 = vmatprep.subr.mxu0 0.0
  %1080 = vmatpush2.msra.mxu0 0.0
  %1081 = vmatprep.subr.mxu0 0.0
  %1082 = vmatpush2.msra.mxu0 0.0
  %1083 = vmatprep.subr.mxu0 0.0
  %1084 = vmatpush2.msra.mxu0 0.0
  %1085 = vmatprep.subr.mxu0 0.0
  %1086 = vmatpush2.msra.mxu0 0.0
  %1087 = vmatprep.subr.mxu0 0.0
  %1088 = vmatpush2.msra.mxu0 0.0
  %1089 = vmatprep.subr.mxu0 0.0
  %1090 = vmatpush2.msra.mxu0 0.0
  %1091 = vmatprep.subr.mxu0 0.0
  %1092 = vmatpush2.msra.mxu0 0.0
  %1093 = vmatprep.subr.mxu0 0.0
  %1094 = vmatpush2.msra.mxu0 0.0
  %1095 = vmatprep.subr.mxu0 0.0
  %1096 = vmatpush2.msra.mxu0 0.0
  %1097 = vmatprep.subr.mxu0 0.0
  %1098 = vmatpush2.msra.mxu0 0.0
  %1099 = vmatprep.subr.mxu0 0.0
  %1100 = vmatpush2.msra.mxu0 0.0
  %1101 = vmatprep.subr.mxu0 0.0
  %1102 = vmatpush2.msra.mxu0 0.0
  %1103 = vmatprep.subr.mxu0 0.0
  %1104 = vmatpush2.msra.mxu0 0.0
  %1105 = vmatprep.subr.mxu0 0.0
  %1106 = vmatpush2.msra.mxu0 0.0
  %1107 = vmatprep.subr.mxu0 0.0
  %1108 = vmatpush2.msra.mxu0 0.0
  %1109 = vmatprep.mubr.f32.mxu0 0.0
  %v1110 = vand.u32 %v55, 4294901760
  %1111 = vmatmul.mubr.f32.gmra.mxu0 %v1110
  %v1112 = vpop.f32.mrf.mxu0
  %v1113 = vadd.f32 %v950, %v1112
  %v1114 = vpop.f32.mrf.mxu0
  %1115 = vmatprep.mubr.f32.mxu0 0.0
  %v1116 = vand.u32 %v58, 4294901760
  %1117 = vmatmul.mubr.f32.gmra.mxu0 %v1116
  %v1118 = vpop.f32.mrf.mxu0
  %v1119 = vadd.f32 %v956, %v1118
  %v1120 = vpop.f32.mrf.mxu0
  %1121 = vmatprep.mubr.f32.mxu0 0.0
  %v1122 = vand.u32 %v61, 4294901760
  %1123 = vmatmul.mubr.f32.gmra.mxu0 %v1122
  %v1124 = vpop.f32.mrf.mxu0
  %v1125 = vadd.f32 %v962, %v1124
  %v1126 = vpop.f32.mrf.mxu0
  %1127 = vmatprep.mubr.f32.mxu0 0.0
  %v1128 = vand.u32 %v64, 4294901760
  %1129 = vmatmul.mubr.f32.gmra.mxu0 %v1128
  %v1130 = vpop.f32.mrf.mxu0
  %v1131 = vadd.f32 %v968, %v1130
  %v1132 = vpop.f32.mrf.mxu0
  %1133 = vmatprep.mubr.f32.mxu0 0.0
  %v1134 = vand.u32 %v67, 4294901760
  %1135 = vmatmul.mubr.f32.gmra.mxu0 %v1134
  %v1136 = vpop.f32.mrf.mxu0
  %v1137 = vadd.f32 %v974, %v1136
  %v1138 = vpop.f32.mrf.mxu0
  %1139 = vmatprep.mubr.f32.mxu0 0.0
  %v1140 = vand.u32 %v70, 4294901760
  %1141 = vmatmul.mubr.f32.gmra.mxu0 %v1140
  %v1142 = vpop.f32.mrf.mxu0
  %v1143 = vadd.f32 %v980, %v1142
  %v1144 = vpop.f32.mrf.mxu0
  %1145 = vmatprep.mubr.f32.mxu0 0.0
  %v1146 = vand.u32 %v73, 4294901760
  %1147 = vmatmul.mubr.f32.gmra.mxu0 %v1146
  %v1148 = vpop.f32.mrf.mxu0
  %v1149 = vadd.f32 %v986, %v1148
  %v1150 = vpop.f32.mrf.mxu0
  %1151 = vmatprep.mubr.f32.mxu0 0.0
  %v1152 = vand.u32 %v76, 4294901760
  %1153 = vmatmul.mubr.f32.gmra.mxu0 %v1152
  %v1154 = vpop.f32.mrf.mxu0
  %v1155 = vadd.f32 %v992, %v1154
  %v1156 = vpop.f32.mrf.mxu0
  %1157 = vmatprep.mubr.f32.mxu0 0.0
  %v1158 = vand.u32 %v79, 4294901760
  %1159 = vmatmul.mubr.f32.gmra.mxu0 %v1158
  %v1160 = vpop.f32.mrf.mxu0
  %v1161 = vadd.f32 %v998, %v1160
  %v1162 = vpop.f32.mrf.mxu0
  %1163 = vmatprep.mubr.f32.mxu0 0.0
  %v1164 = vand.u32 %v82, 4294901760
  %1165 = vmatmul.mubr.f32.gmra.mxu0 %v1164
  %v1166 = vpop.f32.mrf.mxu0
  %v1167 = vadd.f32 %v1004, %v1166
  %v1168 = vpop.f32.mrf.mxu0
  %1169 = vmatprep.mubr.f32.mxu0 0.0
  %v1170 = vand.u32 %v85, 4294901760
  %1171 = vmatmul.mubr.f32.gmra.mxu0 %v1170
  %v1172 = vpop.f32.mrf.mxu0
  %v1173 = vadd.f32 %v1010, %v1172
  %v1174 = vpop.f32.mrf.mxu0
  %1175 = vmatprep.mubr.f32.mxu0 0.0
  %v1176 = vand.u32 %v88, 4294901760
  %1177 = vmatmul.mubr.f32.gmra.mxu0 %v1176
  %v1178 = vpop.f32.mrf.mxu0
  %v1179 = vadd.f32 %v1016, %v1178
  %v1180 = vpop.f32.mrf.mxu0
  %1181 = vmatprep.mubr.f32.mxu0 0.0
  %v1182 = vand.u32 %v91, 4294901760
  %1183 = vmatmul.mubr.f32.gmra.mxu0 %v1182
  %v1184 = vpop.f32.mrf.mxu0
  %v1185 = vadd.f32 %v1022, %v1184
  %v1186 = vpop.f32.mrf.mxu0
  %1187 = vmatprep.mubr.f32.mxu0 0.0
  %v1188 = vand.u32 %v94, 4294901760
  %1189 = vmatmul.mubr.f32.gmra.mxu0 %v1188
  %v1190 = vpop.f32.mrf.mxu0
  %v1191 = vadd.f32 %v1028, %v1190
  %v1192 = vpop.f32.mrf.mxu0
  %1193 = vmatprep.mubr.f32.mxu0 0.0
  %v1194 = vand.u32 %v97, 4294901760
  %1195 = vmatmul.mubr.f32.gmra.mxu0 %v1194
  %v1196 = vpop.f32.mrf.mxu0
  %v1197 = vadd.f32 %v1034, %v1196
  %v1198 = vpop.f32.mrf.mxu0
  %1199 = vmatprep.mubr.f32.mxu0 0.0
  %v1200 = vand.u32 %v100, 4294901760
  %1201 = vmatmul.mubr.f32.gmra.mxu0 %v1200
  %v1202 = vpop.f32.mrf.mxu0
  %v1203 = vadd.f32 %v1040, %v1202
  %v1204 = vpop.f32.mrf.mxu0
  %1205 = vdwg.mxu0
  %vm1206 = vcmp.gt.f32.partialorder %v1113, 0.0
  %vm1207 = vcmp.gt.f32.partialorder %v1119, 0.0
  %vm1208 = vcmp.gt.f32.partialorder %v1125, 0.0
  %vm1209 = vcmp.gt.f32.partialorder %v1131, 0.0
  %vm1210 = vcmp.gt.f32.partialorder %v1137, 0.0
  %vm1211 = vcmp.gt.f32.partialorder %v1143, 0.0
  %vm1212 = vcmp.gt.f32.partialorder %v1149, 0.0
  %vm1213 = vcmp.gt.f32.partialorder %v1155, 0.0
  %vm1214 = vcmp.gt.f32.partialorder %v1161, 0.0
  %vm1215 = vcmp.gt.f32.partialorder %v1167, 0.0
  %vm1216 = vcmp.gt.f32.partialorder %v1173, 0.0
  %vm1217 = vcmp.gt.f32.partialorder %v1179, 0.0
  %vm1218 = vcmp.gt.f32.partialorder %v1185, 0.0
  %vm1219 = vcmp.gt.f32.partialorder %v1191, 0.0
  %vm1220 = vcmp.gt.f32.partialorder %v1197, 0.0
  %vm1221 = vcmp.gt.f32.partialorder %v1203, 0.0
  %v1222 = vmul.f32 %v1113, 0.1
  %v1223 = vmul.f32 %v1119, 0.1
  %v1224 = vmul.f32 %v1125, 0.1
  %v1225 = vmul.f32 %v1131, 0.1
  %v1226 = vmul.f32 %v1137, 0.1
  %v1227 = vmul.f32 %v1143, 0.1
  %v1228 = vmul.f32 %v1149, 0.1
  %v1229 = vmul.f32 %v1155, 0.1
  %v1230 = vmul.f32 %v1161, 0.1
  %v1231 = vmul.f32 %v1167, 0.1
  %v1232 = vmul.f32 %v1173, 0.1
  %v1233 = vmul.f32 %v1179, 0.1
  %v1234 = vmul.f32 %v1185, 0.1
  %v1235 = vmul.f32 %v1191, 0.1
  %v1236 = vmul.f32 %v1197, 0.1
  %v1237 = vmul.f32 %v1203, 0.1
  %v1238 = vsel %vm1206, %v1113, %v1222
  %v1239 = vsel %vm1207, %v1119, %v1223
  %v1240 = vsel %vm1208, %v1125, %v1224
  %v1241 = vsel %vm1209, %v1131, %v1225
  %v1242 = vsel %vm1210, %v1137, %v1226
  %v1243 = vsel %vm1211, %v1143, %v1227
  %v1244 = vsel %vm1212, %v1149, %v1228
  %v1245 = vsel %vm1213, %v1155, %v1229
  %v1246 = vsel %vm1214, %v1161, %v1230
  %v1247 = vsel %vm1215, %v1167, %v1231
  %v1248 = vsel %vm1216, %v1173, %v1232
  %v1249 = vsel %vm1217, %v1179, %v1233
  %v1250 = vsel %vm1218, %v1185, %v1234
  %v1251 = vsel %vm1219, %v1191, %v1235
  %v1252 = vsel %vm1220, %v1197, %v1236
  %v1253 = vsel %vm1221, %v1203, %v1237
  %v1254 = vld [vmem:[%s3] sm:$0xff]
  %v1255 = vld [vmem:[%s3 + $0x8] sm:$0xff]
  %v1256 = vld [vmem:[%s3 + $0x10] sm:$0xff]
  %v1257 = vld [vmem:[%s3 + $0x18] sm:$0xff]
  %v1258 = vld [vmem:[%s4] sm:$0x1]
  %v1260 = vlaneseq
  %v1261 = vshrl.u32 %v1260, 7
  %v1262 = vsub.s32 0, %v1261
  %v1263 = vrot.slane %v1258, %v1262
  %vm1265 = vcmask 261120
  %v1267 = vsel %vm1265, %v1238, 0
  %v1270 = vsel %vm1265, %v1239, 0
  %v1273 = vsel %vm1265, %v1240, 0
  %v1276 = vsel %vm1265, %v1241, 0
  %v1279 = vsel %vm1265, %v1242, 0
  %v1282 = vsel %vm1265, %v1243, 0
  %v1285 = vsel %vm1265, %v1244, 0
  %v1288 = vsel %vm1265, %v1245, 0
  %v1291 = vsel %vm1265, %v1246, 0
  %v1294 = vsel %vm1265, %v1247, 0
  %v1297 = vsel %vm1265, %v1248, 0
  %v1300 = vsel %vm1265, %v1249, 0
  %v1303 = vsel %vm1265, %v1250, 0
  %v1306 = vsel %vm1265, %v1251, 0
  %v1309 = vsel %vm1265, %v1252, 0
  %v1312 = vsel %vm1265, %v1253, 0
  %1314 = vmatprep.subr.mxu0 0.0
  %1315 = vmatpush1.msra.mxu0 0.0
  %1316 = vmatprep.subr.mxu0 0.0
  %1317 = vmatpush1.msra.mxu0 0.0
  %1318 = vmatprep.subr.mxu0 0.0
  %1319 = vmatpush1.msra.mxu0 0.0
  %1320 = vmatprep.subr.mxu0 0.0
  %1321 = vmatpush1.msra.mxu0 0.0
  %1322 = vmatprep.subr.mxu0 0.0
  %1323 = vmatpush1.msra.mxu0 0.0
  %1324 = vmatprep.subr.mxu0 0.0
  %1325 = vmatpush1.msra.mxu0 0.0
  %1326 = vmatprep.subr.mxu0 0.0
  %1327 = vmatpush1.msra.mxu0 0.0
  %1328 = vmatprep.subr.mxu0 0.0
  %1329 = vmatpush1.msra.mxu0 0.0
  %1330 = vmatprep.subr.mxu0 0.0
  %1331 = vmatpush1.msra.mxu0 0.0
  %1332 = vmatprep.subr.mxu0 0.0
  %1333 = vmatpush1.msra.mxu0 0.0
  %1334 = vmatprep.subr.mxu0 0.0
  %1335 = vmatpush1.msra.mxu0 0.0
  %1336 = vmatprep.subr.mxu0 0.0
  %1337 = vmatpush1.msra.mxu0 0.0
  %1338 = vmatprep.subr.mxu0 0.0
  %v1339 = vand.u32 %v1257, 4294901760
  %1340 = vmatpush1.msra.mxu0 %v1339
  %1341 = vmatprep.subr.mxu0 0.0
  %v1342 = vand.u32 %v1256, 4294901760
  %1343 = vmatpush1.msra.mxu0 %v1342
  %1344 = vmatprep.subr.mxu0 0.0
  %v1345 = vand.u32 %v1255, 4294901760
  %1346 = vmatpush1.msra.mxu0 %v1345
  %1347 = vmatprep.subr.mxu0 0.0
  %v1348 = vand.u32 %v1254, 4294901760
  %1349 = vmatpush1.msra.mxu0 %v1348
  %1350 = vmatprep.subr.mxu0 0.0
  %1351 = vmatpush2.msra.mxu0 0.0
  %1352 = vmatprep.subr.mxu0 0.0
  %1353 = vmatpush2.msra.mxu0 0.0
  %1354 = vmatprep.subr.mxu0 0.0
  %1355 = vmatpush2.msra.mxu0 0.0
  %1356 = vmatprep.subr.mxu0 0.0
  %1357 = vmatpush2.msra.mxu0 0.0
  %1358 = vmatprep.subr.mxu0 0.0
  %1359 = vmatpush2.msra.mxu0 0.0
  %1360 = vmatprep.subr.mxu0 0.0
  %1361 = vmatpush2.msra.mxu0 0.0
  %1362 = vmatprep.subr.mxu0 0.0
  %1363 = vmatpush2.msra.mxu0 0.0
  %1364 = vmatprep.subr.mxu0 0.0
  %1365 = vmatpush2.msra.mxu0 0.0
  %1366 = vmatprep.subr.mxu0 0.0
  %1367 = vmatpush2.msra.mxu0 0.0
  %1368 = vmatprep.subr.mxu0 0.0
  %1369 = vmatpush2.msra.mxu0 0.0
  %1370 = vmatprep.subr.mxu0 0.0
  %1371 = vmatpush2.msra.mxu0 0.0
  %1372 = vmatprep.subr.mxu0 0.0
  %1373 = vmatpush2.msra.mxu0 0.0
  %1374 = vmatprep.subr.mxu0 0.0
  %1375 = vmatpush2.msra.mxu0 0.0
  %1376 = vmatprep.subr.mxu0 0.0
  %1377 = vmatpush2.msra.mxu0 0.0
  %1378 = vmatprep.subr.mxu0 0.0
  %1379 = vmatpush2.msra.mxu0 0.0
  %1380 = vmatprep.subr.mxu0 0.0
  %1381 = vmatpush2.msra.mxu0 0.0
  %1382 = vmatprep.mubr.f32.mxu0 0.0
  %v1383 = vand.u32 %v1267, 4294901760
  %v1384 = vsub.f32 %v1267, %v1383
  %v1385 = vand.u32 %v1384, 4294901760
  %v1386 = vsub.f32 %v1384, %v1385
  %v1387 = vand.u32 %v1386, 4294901760
  %1388 = vmatmul.mubr.f32.gmra.mxu0 %v1387
  %v1389 = vpop.f32.mrf.mxu0
  %v1390 = vadd.f32 %v1263, %v1389
  %v1391 = vpop.f32.mrf.mxu0
  %1392 = vmatprep.mubr.f32.mxu0 0.0
  %v1393 = vand.u32 %v1270, 4294901760
  %v1394 = vsub.f32 %v1270, %v1393
  %v1395 = vand.u32 %v1394, 4294901760
  %v1396 = vsub.f32 %v1394, %v1395
  %v1397 = vand.u32 %v1396, 4294901760
  %1398 = vmatmul.mubr.f32.gmra.mxu0 %v1397
  %v1399 = vpop.f32.mrf.mxu0
  %v1400 = vadd.f32 %v1263, %v1399
  %v1401 = vpop.f32.mrf.mxu0
  %1402 = vmatprep.mubr.f32.mxu0 0.0
  %v1403 = vand.u32 %v1273, 4294901760
  %v1404 = vsub.f32 %v1273, %v1403
  %v1405 = vand.u32 %v1404, 4294901760
  %v1406 = vsub.f32 %v1404, %v1405
  %v1407 = vand.u32 %v1406, 4294901760
  %1408 = vmatmul.mubr.f32.gmra.mxu0 %v1407
  %v1409 = vpop.f32.mrf.mxu0
  %v1410 = vadd.f32 %v1263, %v1409
  %v1411 = vpop.f32.mrf.mxu0
  %1412 = vmatprep.mubr.f32.mxu0 0.0
  %v1413 = vand.u32 %v1276, 4294901760
  %v1414 = vsub.f32 %v1276, %v1413
  %v1415 = vand.u32 %v1414, 4294901760
  %v1416 = vsub.f32 %v1414, %v1415
  %v1417 = vand.u32 %v1416, 4294901760
  %1418 = vmatmul.mubr.f32.gmra.mxu0 %v1417
  %v1419 = vpop.f32.mrf.mxu0
  %v1420 = vadd.f32 %v1263, %v1419
  %v1421 = vpop.f32.mrf.mxu0
  %1422 = vmatprep.mubr.f32.mxu0 0.0
  %v1423 = vand.u32 %v1279, 4294901760
  %v1424 = vsub.f32 %v1279, %v1423
  %v1425 = vand.u32 %v1424, 4294901760
  %v1426 = vsub.f32 %v1424, %v1425
  %v1427 = vand.u32 %v1426, 4294901760
  %1428 = vmatmul.mubr.f32.gmra.mxu0 %v1427
  %v1429 = vpop.f32.mrf.mxu0
  %v1430 = vadd.f32 %v1263, %v1429
  %v1431 = vpop.f32.mrf.mxu0
  %1432 = vmatprep.mubr.f32.mxu0 0.0
  %v1433 = vand.u32 %v1282, 4294901760
  %v1434 = vsub.f32 %v1282, %v1433
  %v1435 = vand.u32 %v1434, 4294901760
  %v1436 = vsub.f32 %v1434, %v1435
  %v1437 = vand.u32 %v1436, 4294901760
  %1438 = vmatmul.mubr.f32.gmra.mxu0 %v1437
  %v1439 = vpop.f32.mrf.mxu0
  %v1440 = vadd.f32 %v1263, %v1439
  %v1441 = vpop.f32.mrf.mxu0
  %1442 = vmatprep.mubr.f32.mxu0 0.0
  %v1443 = vand.u32 %v1285, 4294901760
  %v1444 = vsub.f32 %v1285, %v1443
  %v1445 = vand.u32 %v1444, 4294901760
  %v1446 = vsub.f32 %v1444, %v1445
  %v1447 = vand.u32 %v1446, 4294901760
  %1448 = vmatmul.mubr.f32.gmra.mxu0 %v1447
  %v1449 = vpop.f32.mrf.mxu0
  %v1450 = vadd.f32 %v1263, %v1449
  %v1451 = vpop.f32.mrf.mxu0
  %1452 = vmatprep.mubr.f32.mxu0 0.0
  %v1453 = vand.u32 %v1288, 4294901760
  %v1454 = vsub.f32 %v1288, %v1453
  %v1455 = vand.u32 %v1454, 4294901760
  %v1456 = vsub.f32 %v1454, %v1455
  %v1457 = vand.u32 %v1456, 4294901760
  %1458 = vmatmul.mubr.f32.gmra.mxu0 %v1457
  %v1459 = vpop.f32.mrf.mxu0
  %v1460 = vadd.f32 %v1263, %v1459
  %v1461 = vpop.f32.mrf.mxu0
  %1462 = vmatprep.mubr.f32.mxu0 0.0
  %v1463 = vand.u32 %v1291, 4294901760
  %v1464 = vsub.f32 %v1291, %v1463
  %v1465 = vand.u32 %v1464, 4294901760
  %v1466 = vsub.f32 %v1464, %v1465
  %v1467 = vand.u32 %v1466, 4294901760
  %1468 = vmatmul.mubr.f32.gmra.mxu0 %v1467
  %v1469 = vpop.f32.mrf.mxu0
  %v1470 = vadd.f32 %v1263, %v1469
  %v1471 = vpop.f32.mrf.mxu0
  %1472 = vmatprep.mubr.f32.mxu0 0.0
  %v1473 = vand.u32 %v1294, 4294901760
  %v1474 = vsub.f32 %v1294, %v1473
  %v1475 = vand.u32 %v1474, 4294901760
  %v1476 = vsub.f32 %v1474, %v1475
  %v1477 = vand.u32 %v1476, 4294901760
  %1478 = vmatmul.mubr.f32.gmra.mxu0 %v1477
  %v1479 = vpop.f32.mrf.mxu0
  %v1480 = vadd.f32 %v1263, %v1479
  %v1481 = vpop.f32.mrf.mxu0
  %1482 = vmatprep.mubr.f32.mxu0 0.0
  %v1483 = vand.u32 %v1297, 4294901760
  %v1484 = vsub.f32 %v1297, %v1483
  %v1485 = vand.u32 %v1484, 4294901760
  %v1486 = vsub.f32 %v1484, %v1485
  %v1487 = vand.u32 %v1486, 4294901760
  %1488 = vmatmul.mubr.f32.gmra.mxu0 %v1487
  %v1489 = vpop.f32.mrf.mxu0
  %v1490 = vadd.f32 %v1263, %v1489
  %v1491 = vpop.f32.mrf.mxu0
  %1492 = vmatprep.mubr.f32.mxu0 0.0
  %v1493 = vand.u32 %v1300, 4294901760
  %v1494 = vsub.f32 %v1300, %v1493
  %v1495 = vand.u32 %v1494, 4294901760
  %v1496 = vsub.f32 %v1494, %v1495
  %v1497 = vand.u32 %v1496, 4294901760
  %1498 = vmatmul.mubr.f32.gmra.mxu0 %v1497
  %v1499 = vpop.f32.mrf.mxu0
  %v1500 = vadd.f32 %v1263, %v1499
  %v1501 = vpop.f32.mrf.mxu0
  %1502 = vmatprep.mubr.f32.mxu0 0.0
  %v1503 = vand.u32 %v1303, 4294901760
  %v1504 = vsub.f32 %v1303, %v1503
  %v1505 = vand.u32 %v1504, 4294901760
  %v1506 = vsub.f32 %v1504, %v1505
  %v1507 = vand.u32 %v1506, 4294901760
  %1508 = vmatmul.mubr.f32.gmra.mxu0 %v1507
  %v1509 = vpop.f32.mrf.mxu0
  %v1510 = vadd.f32 %v1263, %v1509
  %v1511 = vpop.f32.mrf.mxu0
  %1512 = vmatprep.mubr.f32.mxu0 0.0
  %v1513 = vand.u32 %v1306, 4294901760
  %v1514 = vsub.f32 %v1306, %v1513
  %v1515 = vand.u32 %v1514, 4294901760
  %v1516 = vsub.f32 %v1514, %v1515
  %v1517 = vand.u32 %v1516, 4294901760
  %1518 = vmatmul.mubr.f32.gmra.mxu0 %v1517
  %v1519 = vpop.f32.mrf.mxu0
  %v1520 = vadd.f32 %v1263, %v1519
  %v1521 = vpop.f32.mrf.mxu0
  %1522 = vmatprep.mubr.f32.mxu0 0.0
  %v1523 = vand.u32 %v1309, 4294901760
  %v1524 = vsub.f32 %v1309, %v1523
  %v1525 = vand.u32 %v1524, 4294901760
  %v1526 = vsub.f32 %v1524, %v1525
  %v1527 = vand.u32 %v1526, 4294901760
  %1528 = vmatmul.mubr.f32.gmra.mxu0 %v1527
  %v1529 = vpop.f32.mrf.mxu0
  %v1530 = vadd.f32 %v1263, %v1529
  %v1531 = vpop.f32.mrf.mxu0
  %1532 = vmatprep.mubr.f32.mxu0 0.0
  %v1533 = vand.u32 %v1312, 4294901760
  %v1534 = vsub.f32 %v1312, %v1533
  %v1535 = vand.u32 %v1534, 4294901760
  %v1536 = vsub.f32 %v1534, %v1535
  %v1537 = vand.u32 %v1536, 4294901760
  %1538 = vmatmul.mubr.f32.gmra.mxu0 %v1537
  %v1539 = vpop.f32.mrf.mxu0
  %v1540 = vadd.f32 %v1263, %v1539
  %v1541 = vpop.f32.mrf.mxu0
  %1542 = vdwg.mxu0
  %1543 = vmatprep.subr.mxu0 0.0
  %1544 = vmatpush1.msra.mxu0 0.0
  %1545 = vmatprep.subr.mxu0 0.0
  %1546 = vmatpush1.msra.mxu0 0.0
  %1547 = vmatprep.subr.mxu0 0.0
  %1548 = vmatpush1.msra.mxu0 0.0
  %1549 = vmatprep.subr.mxu0 0.0
  %1550 = vmatpush1.msra.mxu0 0.0
  %1551 = vmatprep.subr.mxu0 0.0
  %1552 = vmatpush1.msra.mxu0 0.0
  %1553 = vmatprep.subr.mxu0 0.0
  %1554 = vmatpush1.msra.mxu0 0.0
  %1555 = vmatprep.subr.mxu0 0.0
  %1556 = vmatpush1.msra.mxu0 0.0
  %1557 = vmatprep.subr.mxu0 0.0
  %1558 = vmatpush1.msra.mxu0 0.0
  %1559 = vmatprep.subr.mxu0 0.0
  %1560 = vmatpush1.msra.mxu0 0.0
  %1561 = vmatprep.subr.mxu0 0.0
  %1562 = vmatpush1.msra.mxu0 0.0
  %1563 = vmatprep.subr.mxu0 0.0
  %1564 = vmatpush1.msra.mxu0 0.0
  %1565 = vmatprep.subr.mxu0 0.0
  %1566 = vmatpush1.msra.mxu0 0.0
  %1567 = vmatprep.subr.mxu0 0.0
  %v1568 = vand.u32 %v1257, 4294901760
  %v1569 = vsub.f32 %v1257, %v1568
  %v1570 = vand.u32 %v1569, 4294901760
  %v1571 = vsub.f32 %v1569, %v1570
  %v1572 = vand.u32 %v1571, 4294901760
  %1573 = vmatpush1.msra.mxu0 %v1572
  %1574 = vmatprep.subr.mxu0 0.0
  %v1575 = vand.u32 %v1256, 4294901760
  %v1576 = vsub.f32 %v1256, %v1575
  %v1577 = vand.u32 %v1576, 4294901760
  %v1578 = vsub.f32 %v1576, %v1577
  %v1579 = vand.u32 %v1578, 4294901760
  %1580 = vmatpush1.msra.mxu0 %v1579
  %1581 = vmatprep.subr.mxu0 0.0
  %v1582 = vand.u32 %v1255, 4294901760
  %v1583 = vsub.f32 %v1255, %v1582
  %v1584 = vand.u32 %v1583, 4294901760
  %v1585 = vsub.f32 %v1583, %v1584
  %v1586 = vand.u32 %v1585, 4294901760
  %1587 = vmatpush1.msra.mxu0 %v1586
  %1588 = vmatprep.subr.mxu0 0.0
  %v1589 = vand.u32 %v1254, 4294901760
  %v1590 = vsub.f32 %v1254, %v1589
  %v1591 = vand.u32 %v1590, 4294901760
  %v1592 = vsub.f32 %v1590, %v1591
  %v1593 = vand.u32 %v1592, 4294901760
  %1594 = vmatpush1.msra.mxu0 %v1593
  %1595 = vmatprep.subr.mxu0 0.0
  %1596 = vmatpush2.msra.mxu0 0.0
  %1597 = vmatprep.subr.mxu0 0.0
  %1598 = vmatpush2.msra.mxu0 0.0
  %1599 = vmatprep.subr.mxu0 0.0
  %1600 = vmatpush2.msra.mxu0 0.0
  %1601 = vmatprep.subr.mxu0 0.0
  %1602 = vmatpush2.msra.mxu0 0.0
  %1603 = vmatprep.subr.mxu0 0.0
  %1604 = vmatpush2.msra.mxu0 0.0
  %1605 = vmatprep.subr.mxu0 0.0
  %1606 = vmatpush2.msra.mxu0 0.0
  %1607 = vmatprep.subr.mxu0 0.0
  %1608 = vmatpush2.msra.mxu0 0.0
  %1609 = vmatprep.subr.mxu0 0.0
  %1610 = vmatpush2.msra.mxu0 0.0
  %1611 = vmatprep.subr.mxu0 0.0
  %1612 = vmatpush2.msra.mxu0 0.0
  %1613 = vmatprep.subr.mxu0 0.0
  %1614 = vmatpush2.msra.mxu0 0.0
  %1615 = vmatprep.subr.mxu0 0.0
  %1616 = vmatpush2.msra.mxu0 0.0
  %1617 = vmatprep.subr.mxu0 0.0
  %1618 = vmatpush2.msra.mxu0 0.0
  %1619 = vmatprep.subr.mxu0 0.0
  %1620 = vmatpush2.msra.mxu0 0.0
  %1621 = vmatprep.subr.mxu0 0.0
  %1622 = vmatpush2.msra.mxu0 0.0
  %1623 = vmatprep.subr.mxu0 0.0
  %1624 = vmatpush2.msra.mxu0 0.0
  %1625 = vmatprep.subr.mxu0 0.0
  %1626 = vmatpush2.msra.mxu0 0.0
  %1627 = vmatprep.mubr.f32.mxu0 0.0
  %v1628 = vand.u32 %v1267, 4294901760
  %1629 = vmatmul.mubr.f32.gmra.mxu0 %v1628
  %v1630 = vpop.f32.mrf.mxu0
  %v1631 = vadd.f32 %v1390, %v1630
  %v1632 = vpop.f32.mrf.mxu0
  %1633 = vmatprep.mubr.f32.mxu0 0.0
  %v1634 = vand.u32 %v1270, 4294901760
  %1635 = vmatmul.mubr.f32.gmra.mxu0 %v1634
  %v1636 = vpop.f32.mrf.mxu0
  %v1637 = vadd.f32 %v1400, %v1636
  %v1638 = vpop.f32.mrf.mxu0
  %1639 = vmatprep.mubr.f32.mxu0 0.0
  %v1640 = vand.u32 %v1273, 4294901760
  %1641 = vmatmul.mubr.f32.gmra.mxu0 %v1640
  %v1642 = vpop.f32.mrf.mxu0
  %v1643 = vadd.f32 %v1410, %v1642
  %v1644 = vpop.f32.mrf.mxu0
  %1645 = vmatprep.mubr.f32.mxu0 0.0
  %v1646 = vand.u32 %v1276, 4294901760
  %1647 = vmatmul.mubr.f32.gmra.mxu0 %v1646
  %v1648 = vpop.f32.mrf.mxu0
  %v1649 = vadd.f32 %v1420, %v1648
  %v1650 = vpop.f32.mrf.mxu0
  %1651 = vmatprep.mubr.f32.mxu0 0.0
  %v1652 = vand.u32 %v1279, 4294901760
  %1653 = vmatmul.mubr.f32.gmra.mxu0 %v1652
  %v1654 = vpop.f32.mrf.mxu0
  %v1655 = vadd.f32 %v1430, %v1654
  %v1656 = vpop.f32.mrf.mxu0
  %1657 = vmatprep.mubr.f32.mxu0 0.0
  %v1658 = vand.u32 %v1282, 4294901760
  %1659 = vmatmul.mubr.f32.gmra.mxu0 %v1658
  %v1660 = vpop.f32.mrf.mxu0
  %v1661 = vadd.f32 %v1440, %v1660
  %v1662 = vpop.f32.mrf.mxu0
  %1663 = vmatprep.mubr.f32.mxu0 0.0
  %v1664 = vand.u32 %v1285, 4294901760
  %1665 = vmatmul.mubr.f32.gmra.mxu0 %v1664
  %v1666 = vpop.f32.mrf.mxu0
  %v1667 = vadd.f32 %v1450, %v1666
  %v1668 = vpop.f32.mrf.mxu0
  %1669 = vmatprep.mubr.f32.mxu0 0.0
  %v1670 = vand.u32 %v1288, 4294901760
  %1671 = vmatmul.mubr.f32.gmra.mxu0 %v1670
  %v1672 = vpop.f32.mrf.mxu0
  %v1673 = vadd.f32 %v1460, %v1672
  %v1674 = vpop.f32.mrf.mxu0
  %1675 = vmatprep.mubr.f32.mxu0 0.0
  %v1676 = vand.u32 %v1291, 4294901760
  %1677 = vmatmul.mubr.f32.gmra.mxu0 %v1676
  %v1678 = vpop.f32.mrf.mxu0
  %v1679 = vadd.f32 %v1470, %v1678
  %v1680 = vpop.f32.mrf.mxu0
  %1681 = vmatprep.mubr.f32.mxu0 0.0
  %v1682 = vand.u32 %v1294, 4294901760
  %1683 = vmatmul.mubr.f32.gmra.mxu0 %v1682
  %v1684 = vpop.f32.mrf.mxu0
  %v1685 = vadd.f32 %v1480, %v1684
  %v1686 = vpop.f32.mrf.mxu0
  %1687 = vmatprep.mubr.f32.mxu0 0.0
  %v1688 = vand.u32 %v1297, 4294901760
  %1689 = vmatmul.mubr.f32.gmra.mxu0 %v1688
  %v1690 = vpop.f32.mrf.mxu0
  %v1691 = vadd.f32 %v1490, %v1690
  %v1692 = vpop.f32.mrf.mxu0
  %1693 = vmatprep.mubr.f32.mxu0 0.0
  %v1694 = vand.u32 %v1300, 4294901760
  %1695 = vmatmul.mubr.f32.gmra.mxu0 %v1694
  %v1696 = vpop.f32.mrf.mxu0
  %v1697 = vadd.f32 %v1500, %v1696
  %v1698 = vpop.f32.mrf.mxu0
  %1699 = vmatprep.mubr.f32.mxu0 0.0
  %v1700 = vand.u32 %v1303, 4294901760
  %1701 = vmatmul.mubr.f32.gmra.mxu0 %v1700
  %v1702 = vpop.f32.mrf.mxu0
  %v1703 = vadd.f32 %v1510, %v1702
  %v1704 = vpop.f32.mrf.mxu0
  %1705 = vmatprep.mubr.f32.mxu0 0.0
  %v1706 = vand.u32 %v1306, 4294901760
  %1707 = vmatmul.mubr.f32.gmra.mxu0 %v1706
  %v1708 = vpop.f32.mrf.mxu0
  %v1709 = vadd.f32 %v1520, %v1708
  %v1710 = vpop.f32.mrf.mxu0
  %1711 = vmatprep.mubr.f32.mxu0 0.0
  %v1712 = vand.u32 %v1309, 4294901760
  %1713 = vmatmul.mubr.f32.gmra.mxu0 %v1712
  %v1714 = vpop.f32.mrf.mxu0
  %v1715 = vadd.f32 %v1530, %v1714
  %v1716 = vpop.f32.mrf.mxu0
  %1717 = vmatprep.mubr.f32.mxu0 0.0
  %v1718 = vand.u32 %v1312, 4294901760
  %1719 = vmatmul.mubr.f32.gmra.mxu0 %v1718
  %v1720 = vpop.f32.mrf.mxu0
  %v1721 = vadd.f32 %v1540, %v1720
  %v1722 = vpop.f32.mrf.mxu0
  %1723 = vdwg.mxu0
  %1724 = vmatprep.subr.mxu0 0.0
  %1725 = vmatpush1.msra.mxu0 0.0
  %1726 = vmatprep.subr.mxu0 0.0
  %1727 = vmatpush1.msra.mxu0 0.0
  %1728 = vmatprep.subr.mxu0 0.0
  %1729 = vmatpush1.msra.mxu0 0.0
  %1730 = vmatprep.subr.mxu0 0.0
  %1731 = vmatpush1.msra.mxu0 0.0
  %1732 = vmatprep.subr.mxu0 0.0
  %1733 = vmatpush1.msra.mxu0 0.0
  %1734 = vmatprep.subr.mxu0 0.0
  %1735 = vmatpush1.msra.mxu0 0.0
  %1736 = vmatprep.subr.mxu0 0.0
  %1737 = vmatpush1.msra.mxu0 0.0
  %1738 = vmatprep.subr.mxu0 0.0
  %1739 = vmatpush1.msra.mxu0 0.0
  %1740 = vmatprep.subr.mxu0 0.0
  %1741 = vmatpush1.msra.mxu0 0.0
  %1742 = vmatprep.subr.mxu0 0.0
  %1743 = vmatpush1.msra.mxu0 0.0
  %1744 = vmatprep.subr.mxu0 0.0
  %1745 = vmatpush1.msra.mxu0 0.0
  %1746 = vmatprep.subr.mxu0 0.0
  %1747 = vmatpush1.msra.mxu0 0.0
  %1748 = vmatprep.subr.mxu0 0.0
  %v1749 = vand.u32 %v1257, 4294901760
  %v1750 = vsub.f32 %v1257, %v1749
  %1751 = vmatpush1.msra.mxu0 %v1750
  %1752 = vmatprep.subr.mxu0 0.0
  %v1753 = vand.u32 %v1256, 4294901760
  %v1754 = vsub.f32 %v1256, %v1753
  %1755 = vmatpush1.msra.mxu0 %v1754
  %1756 = vmatprep.subr.mxu0 0.0
  %v1757 = vand.u32 %v1255, 4294901760
  %v1758 = vsub.f32 %v1255, %v1757
  %1759 = vmatpush1.msra.mxu0 %v1758
  %1760 = vmatprep.subr.mxu0 0.0
  %v1761 = vand.u32 %v1254, 4294901760
  %v1762 = vsub.f32 %v1254, %v1761
  %1763 = vmatpush1.msra.mxu0 %v1762
  %1764 = vmatprep.subr.mxu0 0.0
  %1765 = vmatpush2.msra.mxu0 0.0
  %1766 = vmatprep.subr.mxu0 0.0
  %1767 = vmatpush2.msra.mxu0 0.0
  %1768 = vmatprep.subr.mxu0 0.0
  %1769 = vmatpush2.msra.mxu0 0.0
  %1770 = vmatprep.subr.mxu0 0.0
  %1771 = vmatpush2.msra.mxu0 0.0
  %1772 = vmatprep.subr.mxu0 0.0
  %1773 = vmatpush2.msra.mxu0 0.0
  %1774 = vmatprep.subr.mxu0 0.0
  %1775 = vmatpush2.msra.mxu0 0.0
  %1776 = vmatprep.subr.mxu0 0.0
  %1777 = vmatpush2.msra.mxu0 0.0
  %1778 = vmatprep.subr.mxu0 0.0
  %1779 = vmatpush2.msra.mxu0 0.0
  %1780 = vmatprep.subr.mxu0 0.0
  %1781 = vmatpush2.msra.mxu0 0.0
  %1782 = vmatprep.subr.mxu0 0.0
  %1783 = vmatpush2.msra.mxu0 0.0
  %1784 = vmatprep.subr.mxu0 0.0
  %1785 = vmatpush2.msra.mxu0 0.0
  %1786 = vmatprep.subr.mxu0 0.0
  %1787 = vmatpush2.msra.mxu0 0.0
  %1788 = vmatprep.subr.mxu0 0.0
  %1789 = vmatpush2.msra.mxu0 0.0
  %1790 = vmatprep.subr.mxu0 0.0
  %1791 = vmatpush2.msra.mxu0 0.0
  %1792 = vmatprep.subr.mxu0 0.0
  %1793 = vmatpush2.msra.mxu0 0.0
  %1794 = vmatprep.subr.mxu0 0.0
  %1795 = vmatpush2.msra.mxu0 0.0
  %1796 = vmatprep.mubr.f32.mxu0 0.0
  %v1797 = vand.u32 %v1267, 4294901760
  %v1798 = vsub.f32 %v1267, %v1797
  %1799 = vmatmul.mubr.f32.gmra.mxu0 %v1798
  %v1800 = vpop.f32.mrf.mxu0
  %v1801 = vadd.f32 %v1631, %v1800
  %v1802 = vpop.f32.mrf.mxu0
  %1803 = vmatprep.mubr.f32.mxu0 0.0
  %v1804 = vand.u32 %v1270, 4294901760
  %v1805 = vsub.f32 %v1270, %v1804
  %1806 = vmatmul.mubr.f32.gmra.mxu0 %v1805
  %v1807 = vpop.f32.mrf.mxu0
  %v1808 = vadd.f32 %v1637, %v1807
  %v1809 = vpop.f32.mrf.mxu0
  %1810 = vmatprep.mubr.f32.mxu0 0.0
  %v1811 = vand.u32 %v1273, 4294901760
  %v1812 = vsub.f32 %v1273, %v1811
  %1813 = vmatmul.mubr.f32.gmra.mxu0 %v1812
  %v1814 = vpop.f32.mrf.mxu0
  %v1815 = vadd.f32 %v1643, %v1814
  %v1816 = vpop.f32.mrf.mxu0
  %1817 = vmatprep.mubr.f32.mxu0 0.0
  %v1818 = vand.u32 %v1276, 4294901760
  %v1819 = vsub.f32 %v1276, %v1818
  %1820 = vmatmul.mubr.f32.gmra.mxu0 %v1819
  %v1821 = vpop.f32.mrf.mxu0
  %v1822 = vadd.f32 %v1649, %v1821
  %v1823 = vpop.f32.mrf.mxu0
  %1824 = vmatprep.mubr.f32.mxu0 0.0
  %v1825 = vand.u32 %v1279, 4294901760
  %v1826 = vsub.f32 %v1279, %v1825
  %1827 = vmatmul.mubr.f32.gmra.mxu0 %v1826
  %v1828 = vpop.f32.mrf.mxu0
  %v1829 = vadd.f32 %v1655, %v1828
  %v1830 = vpop.f32.mrf.mxu0
  %1831 = vmatprep.mubr.f32.mxu0 0.0
  %v1832 = vand.u32 %v1282, 4294901760
  %v1833 = vsub.f32 %v1282, %v1832
  %1834 = vmatmul.mubr.f32.gmra.mxu0 %v1833
  %v1835 = vpop.f32.mrf.mxu0
  %v1836 = vadd.f32 %v1661, %v1835
  %v1837 = vpop.f32.mrf.mxu0
  %1838 = vmatprep.mubr.f32.mxu0 0.0
  %v1839 = vand.u32 %v1285, 4294901760
  %v1840 = vsub.f32 %v1285, %v1839
  %1841 = vmatmul.mubr.f32.gmra.mxu0 %v1840
  %v1842 = vpop.f32.mrf.mxu0
  %v1843 = vadd.f32 %v1667, %v1842
  %v1844 = vpop.f32.mrf.mxu0
  %1845 = vmatprep.mubr.f32.mxu0 0.0
  %v1846 = vand.u32 %v1288, 4294901760
  %v1847 = vsub.f32 %v1288, %v1846
  %1848 = vmatmul.mubr.f32.gmra.mxu0 %v1847
  %v1849 = vpop.f32.mrf.mxu0
  %v1850 = vadd.f32 %v1673, %v1849
  %v1851 = vpop.f32.mrf.mxu0
  %1852 = vmatprep.mubr.f32.mxu0 0.0
  %v1853 = vand.u32 %v1291, 4294901760
  %v1854 = vsub.f32 %v1291, %v1853
  %1855 = vmatmul.mubr.f32.gmra.mxu0 %v1854
  %v1856 = vpop.f32.mrf.mxu0
  %v1857 = vadd.f32 %v1679, %v1856
  %v1858 = vpop.f32.mrf.mxu0
  %1859 = vmatprep.mubr.f32.mxu0 0.0
  %v1860 = vand.u32 %v1294, 4294901760
  %v1861 = vsub.f32 %v1294, %v1860
  %1862 = vmatmul.mubr.f32.gmra.mxu0 %v1861
  %v1863 = vpop.f32.mrf.mxu0
  %v1864 = vadd.f32 %v1685, %v1863
  %v1865 = vpop.f32.mrf.mxu0
  %1866 = vmatprep.mubr.f32.mxu0 0.0
  %v1867 = vand.u32 %v1297, 4294901760
  %v1868 = vsub.f32 %v1297, %v1867
  %1869 = vmatmul.mubr.f32.gmra.mxu0 %v1868
  %v1870 = vpop.f32.mrf.mxu0
  %v1871 = vadd.f32 %v1691, %v1870
  %v1872 = vpop.f32.mrf.mxu0
  %1873 = vmatprep.mubr.f32.mxu0 0.0
  %v1874 = vand.u32 %v1300, 4294901760
  %v1875 = vsub.f32 %v1300, %v1874
  %1876 = vmatmul.mubr.f32.gmra.mxu0 %v1875
  %v1877 = vpop.f32.mrf.mxu0
  %v1878 = vadd.f32 %v1697, %v1877
  %v1879 = vpop.f32.mrf.mxu0
  %1880 = vmatprep.mubr.f32.mxu0 0.0
  %v1881 = vand.u32 %v1303, 4294901760
  %v1882 = vsub.f32 %v1303, %v1881
  %1883 = vmatmul.mubr.f32.gmra.mxu0 %v1882
  %v1884 = vpop.f32.mrf.mxu0
  %v1885 = vadd.f32 %v1703, %v1884
  %v1886 = vpop.f32.mrf.mxu0
  %1887 = vmatprep.mubr.f32.mxu0 0.0
  %v1888 = vand.u32 %v1306, 4294901760
  %v1889 = vsub.f32 %v1306, %v1888
  %1890 = vmatmul.mubr.f32.gmra.mxu0 %v1889
  %v1891 = vpop.f32.mrf.mxu0
  %v1892 = vadd.f32 %v1709, %v1891
  %v1893 = vpop.f32.mrf.mxu0
  %1894 = vmatprep.mubr.f32.mxu0 0.0
  %v1895 = vand.u32 %v1309, 4294901760
  %v1896 = vsub.f32 %v1309, %v1895
  %1897 = vmatmul.mubr.f32.gmra.mxu0 %v1896
  %v1898 = vpop.f32.mrf.mxu0
  %v1899 = vadd.f32 %v1715, %v1898
  %v1900 = vpop.f32.mrf.mxu0
  %1901 = vmatprep.mubr.f32.mxu0 0.0
  %v1902 = vand.u32 %v1312, 4294901760
  %v1903 = vsub.f32 %v1312, %v1902
  %1904 = vmatmul.mubr.f32.gmra.mxu0 %v1903
  %v1905 = vpop.f32.mrf.mxu0
  %v1906 = vadd.f32 %v1721, %v1905
  %v1907 = vpop.f32.mrf.mxu0
  %1908 = vdwg.mxu0
  %1909 = vmatprep.subr.mxu0 0.0
  %1910 = vmatpush1.msra.mxu0 0.0
  %1911 = vmatprep.subr.mxu0 0.0
  %1912 = vmatpush1.msra.mxu0 0.0
  %1913 = vmatprep.subr.mxu0 0.0
  %1914 = vmatpush1.msra.mxu0 0.0
  %1915 = vmatprep.subr.mxu0 0.0
  %1916 = vmatpush1.msra.mxu0 0.0
  %1917 = vmatprep.subr.mxu0 0.0
  %1918 = vmatpush1.msra.mxu0 0.0
  %1919 = vmatprep.subr.mxu0 0.0
  %1920 = vmatpush1.msra.mxu0 0.0
  %1921 = vmatprep.subr.mxu0 0.0
  %1922 = vmatpush1.msra.mxu0 0.0
  %1923 = vmatprep.subr.mxu0 0.0
  %1924 = vmatpush1.msra.mxu0 0.0
  %1925 = vmatprep.subr.mxu0 0.0
  %1926 = vmatpush1.msra.mxu0 0.0
  %1927 = vmatprep.subr.mxu0 0.0
  %1928 = vmatpush1.msra.mxu0 0.0
  %1929 = vmatprep.subr.mxu0 0.0
  %1930 = vmatpush1.msra.mxu0 0.0
  %1931 = vmatprep.subr.mxu0 0.0
  %1932 = vmatpush1.msra.mxu0 0.0
  %1933 = vmatprep.subr.mxu0 0.0
  %v1934 = vand.u32 %v1257, 4294901760
  %1935 = vmatpush1.msra.mxu0 %v1934
  %1936 = vmatprep.subr.mxu0 0.0
  %v1937 = vand.u32 %v1256, 4294901760
  %1938 = vmatpush1.msra.mxu0 %v1937
  %1939 = vmatprep.subr.mxu0 0.0
  %v1940 = vand.u32 %v1255, 4294901760
  %1941 = vmatpush1.msra.mxu0 %v1940
  %1942 = vmatprep.subr.mxu0 0.0
  %v1943 = vand.u32 %v1254, 4294901760
  %1944 = vmatpush1.msra.mxu0 %v1943
  %1945 = vmatprep.subr.mxu0 0.0
  %1946 = vmatpush2.msra.mxu0 0.0
  %1947 = vmatprep.subr.mxu0 0.0
  %1948 = vmatpush2.msra.mxu0 0.0
  %1949 = vmatprep.subr.mxu0 0.0
  %1950 = vmatpush2.msra.mxu0 0.0
  %1951 = vmatprep.subr.mxu0 0.0
  %1952 = vmatpush2.msra.mxu0 0.0
  %1953 = vmatprep.subr.mxu0 0.0
  %1954 = vmatpush2.msra.mxu0 0.0
  %1955 = vmatprep.subr.mxu0 0.0
  %1956 = vmatpush2.msra.mxu0 0.0
  %1957 = vmatprep.subr.mxu0 0.0
  %1958 = vmatpush2.msra.mxu0 0.0
  %1959 = vmatprep.subr.mxu0 0.0
  %1960 = vmatpush2.msra.mxu0 0.0
  %1961 = vmatprep.subr.mxu0 0.0
  %1962 = vmatpush2.msra.mxu0 0.0
  %1963 = vmatprep.subr.mxu0 0.0
  %1964 = vmatpush2.msra.mxu0 0.0
  %1965 = vmatprep.subr.mxu0 0.0
  %1966 = vmatpush2.msra.mxu0 0.0
  %1967 = vmatprep.subr.mxu0 0.0
  %1968 = vmatpush2.msra.mxu0 0.0
  %1969 = vmatprep.subr.mxu0 0.0
  %1970 = vmatpush2.msra.mxu0 0.0
  %1971 = vmatprep.subr.mxu0 0.0
  %1972 = vmatpush2.msra.mxu0 0.0
  %1973 = vmatprep.subr.mxu0 0.0
  %1974 = vmatpush2.msra.mxu0 0.0
  %1975 = vmatprep.subr.mxu0 0.0
  %1976 = vmatpush2.msra.mxu0 0.0
  %1977 = vmatprep.mubr.f32.mxu0 0.0
  %v1978 = vand.u32 %v1267, 4294901760
  %v1979 = vsub.f32 %v1267, %v1978
  %v1980 = vand.u32 %v1979, 4294901760
  %1981 = vmatmul.mubr.f32.gmra.mxu0 %v1980
  %v1982 = vpop.f32.mrf.mxu0
  %v1983 = vadd.f32 %v1801, %v1982
  %v1984 = vpop.f32.mrf.mxu0
  %1985 = vmatprep.mubr.f32.mxu0 0.0
  %v1986 = vand.u32 %v1270, 4294901760
  %v1987 = vsub.f32 %v1270, %v1986
  %v1988 = vand.u32 %v1987, 4294901760
  %1989 = vmatmul.mubr.f32.gmra.mxu0 %v1988
  %v1990 = vpop.f32.mrf.mxu0
  %v1991 = vadd.f32 %v1808, %v1990
  %v1992 = vpop.f32.mrf.mxu0
  %1993 = vmatprep.mubr.f32.mxu0 0.0
  %v1994 = vand.u32 %v1273, 4294901760
  %v1995 = vsub.f32 %v1273, %v1994
  %v1996 = vand.u32 %v1995, 4294901760
  %1997 = vmatmul.mubr.f32.gmra.mxu0 %v1996
  %v1998 = vpop.f32.mrf.mxu0
  %v1999 = vadd.f32 %v1815, %v1998
  %v2000 = vpop.f32.mrf.mxu0
  %2001 = vmatprep.mubr.f32.mxu0 0.0
  %v2002 = vand.u32 %v1276, 4294901760
  %v2003 = vsub.f32 %v1276, %v2002
  %v2004 = vand.u32 %v2003, 4294901760
  %2005 = vmatmul.mubr.f32.gmra.mxu0 %v2004
  %v2006 = vpop.f32.mrf.mxu0
  %v2007 = vadd.f32 %v1822, %v2006
  %v2008 = vpop.f32.mrf.mxu0
  %2009 = vmatprep.mubr.f32.mxu0 0.0
  %v2010 = vand.u32 %v1279, 4294901760
  %v2011 = vsub.f32 %v1279, %v2010
  %v2012 = vand.u32 %v2011, 4294901760
  %2013 = vmatmul.mubr.f32.gmra.mxu0 %v2012
  %v2014 = vpop.f32.mrf.mxu0
  %v2015 = vadd.f32 %v1829, %v2014
  %v2016 = vpop.f32.mrf.mxu0
  %2017 = vmatprep.mubr.f32.mxu0 0.0
  %v2018 = vand.u32 %v1282, 4294901760
  %v2019 = vsub.f32 %v1282, %v2018
  %v2020 = vand.u32 %v2019, 4294901760
  %2021 = vmatmul.mubr.f32.gmra.mxu0 %v2020
  %v2022 = vpop.f32.mrf.mxu0
  %v2023 = vadd.f32 %v1836, %v2022
  %v2024 = vpop.f32.mrf.mxu0
  %2025 = vmatprep.mubr.f32.mxu0 0.0
  %v2026 = vand.u32 %v1285, 4294901760
  %v2027 = vsub.f32 %v1285, %v2026
  %v2028 = vand.u32 %v2027, 4294901760
  %2029 = vmatmul.mubr.f32.gmra.mxu0 %v2028
  %v2030 = vpop.f32.mrf.mxu0
  %v2031 = vadd.f32 %v1843, %v2030
  %v2032 = vpop.f32.mrf.mxu0
  %2033 = vmatprep.mubr.f32.mxu0 0.0
  %v2034 = vand.u32 %v1288, 4294901760
  %v2035 = vsub.f32 %v1288, %v2034
  %v2036 = vand.u32 %v2035, 4294901760
  %2037 = vmatmul.mubr.f32.gmra.mxu0 %v2036
  %v2038 = vpop.f32.mrf.mxu0
  %v2039 = vadd.f32 %v1850, %v2038
  %v2040 = vpop.f32.mrf.mxu0
  %2041 = vmatprep.mubr.f32.mxu0 0.0
  %v2042 = vand.u32 %v1291, 4294901760
  %v2043 = vsub.f32 %v1291, %v2042
  %v2044 = vand.u32 %v2043, 4294901760
  %2045 = vmatmul.mubr.f32.gmra.mxu0 %v2044
  %v2046 = vpop.f32.mrf.mxu0
  %v2047 = vadd.f32 %v1857, %v2046
  %v2048 = vpop.f32.mrf.mxu0
  %2049 = vmatprep.mubr.f32.mxu0 0.0
  %v2050 = vand.u32 %v1294, 4294901760
  %v2051 = vsub.f32 %v1294, %v2050
  %v2052 = vand.u32 %v2051, 4294901760
  %2053 = vmatmul.mubr.f32.gmra.mxu0 %v2052
  %v2054 = vpop.f32.mrf.mxu0
  %v2055 = vadd.f32 %v1864, %v2054
  %v2056 = vpop.f32.mrf.mxu0
  %2057 = vmatprep.mubr.f32.mxu0 0.0
  %v2058 = vand.u32 %v1297, 4294901760
  %v2059 = vsub.f32 %v1297, %v2058
  %v2060 = vand.u32 %v2059, 4294901760
  %2061 = vmatmul.mubr.f32.gmra.mxu0 %v2060
  %v2062 = vpop.f32.mrf.mxu0
  %v2063 = vadd.f32 %v1871, %v2062
  %v2064 = vpop.f32.mrf.mxu0
  %2065 = vmatprep.mubr.f32.mxu0 0.0
  %v2066 = vand.u32 %v1300, 4294901760
  %v2067 = vsub.f32 %v1300, %v2066
  %v2068 = vand.u32 %v2067, 4294901760
  %2069 = vmatmul.mubr.f32.gmra.mxu0 %v2068
  %v2070 = vpop.f32.mrf.mxu0
  %v2071 = vadd.f32 %v1878, %v2070
  %v2072 = vpop.f32.mrf.mxu0
  %2073 = vmatprep.mubr.f32.mxu0 0.0
  %v2074 = vand.u32 %v1303, 4294901760
  %v2075 = vsub.f32 %v1303, %v2074
  %v2076 = vand.u32 %v2075, 4294901760
  %2077 = vmatmul.mubr.f32.gmra.mxu0 %v2076
  %v2078 = vpop.f32.mrf.mxu0
  %v2079 = vadd.f32 %v1885, %v2078
  %v2080 = vpop.f32.mrf.mxu0
  %2081 = vmatprep.mubr.f32.mxu0 0.0
  %v2082 = vand.u32 %v1306, 4294901760
  %v2083 = vsub.f32 %v1306, %v2082
  %v2084 = vand.u32 %v2083, 4294901760
  %2085 = vmatmul.mubr.f32.gmra.mxu0 %v2084
  %v2086 = vpop.f32.mrf.mxu0
  %v2087 = vadd.f32 %v1892, %v2086
  %v2088 = vpop.f32.mrf.mxu0
  %2089 = vmatprep.mubr.f32.mxu0 0.0
  %v2090 = vand.u32 %v1309, 4294901760
  %v2091 = vsub.f32 %v1309, %v2090
  %v2092 = vand.u32 %v2091, 4294901760
  %2093 = vmatmul.mubr.f32.gmra.mxu0 %v2092
  %v2094 = vpop.f32.mrf.mxu0
  %v2095 = vadd.f32 %v1899, %v2094
  %v2096 = vpop.f32.mrf.mxu0
  %2097 = vmatprep.mubr.f32.mxu0 0.0
  %v2098 = vand.u32 %v1312, 4294901760
  %v2099 = vsub.f32 %v1312, %v2098
  %v2100 = vand.u32 %v2099, 4294901760
  %2101 = vmatmul.mubr.f32.gmra.mxu0 %v2100
  %v2102 = vpop.f32.mrf.mxu0
  %v2103 = vadd.f32 %v1906, %v2102
  %v2104 = vpop.f32.mrf.mxu0
  %2105 = vdwg.mxu0
  %2106 = vmatprep.subr.mxu0 0.0
  %2107 = vmatpush1.msra.mxu0 0.0
  %2108 = vmatprep.subr.mxu0 0.0
  %2109 = vmatpush1.msra.mxu0 0.0
  %2110 = vmatprep.subr.mxu0 0.0
  %2111 = vmatpush1.msra.mxu0 0.0
  %2112 = vmatprep.subr.mxu0 0.0
  %2113 = vmatpush1.msra.mxu0 0.0
  %2114 = vmatprep.subr.mxu0 0.0
  %2115 = vmatpush1.msra.mxu0 0.0
  %2116 = vmatprep.subr.mxu0 0.0
  %2117 = vmatpush1.msra.mxu0 0.0
  %2118 = vmatprep.subr.mxu0 0.0
  %2119 = vmatpush1.msra.mxu0 0.0
  %2120 = vmatprep.subr.mxu0 0.0
  %2121 = vmatpush1.msra.mxu0 0.0
  %2122 = vmatprep.subr.mxu0 0.0
  %2123 = vmatpush1.msra.mxu0 0.0
  %2124 = vmatprep.subr.mxu0 0.0
  %2125 = vmatpush1.msra.mxu0 0.0
  %2126 = vmatprep.subr.mxu0 0.0
  %2127 = vmatpush1.msra.mxu0 0.0
  %2128 = vmatprep.subr.mxu0 0.0
  %2129 = vmatpush1.msra.mxu0 0.0
  %2130 = vmatprep.subr.mxu0 0.0
  %v2131 = vand.u32 %v1257, 4294901760
  %v2132 = vsub.f32 %v1257, %v2131
  %v2133 = vand.u32 %v2132, 4294901760
  %2134 = vmatpush1.msra.mxu0 %v2133
  %2135 = vmatprep.subr.mxu0 0.0
  %v2136 = vand.u32 %v1256, 4294901760
  %v2137 = vsub.f32 %v1256, %v2136
  %v2138 = vand.u32 %v2137, 4294901760
  %2139 = vmatpush1.msra.mxu0 %v2138
  %2140 = vmatprep.subr.mxu0 0.0
  %v2141 = vand.u32 %v1255, 4294901760
  %v2142 = vsub.f32 %v1255, %v2141
  %v2143 = vand.u32 %v2142, 4294901760
  %2144 = vmatpush1.msra.mxu0 %v2143
  %2145 = vmatprep.subr.mxu0 0.0
  %v2146 = vand.u32 %v1254, 4294901760
  %v2147 = vsub.f32 %v1254, %v2146
  %v2148 = vand.u32 %v2147, 4294901760
  %2149 = vmatpush1.msra.mxu0 %v2148
  %2150 = vmatprep.subr.mxu0 0.0
  %2151 = vmatpush2.msra.mxu0 0.0
  %2152 = vmatprep.subr.mxu0 0.0
  %2153 = vmatpush2.msra.mxu0 0.0
  %2154 = vmatprep.subr.mxu0 0.0
  %2155 = vmatpush2.msra.mxu0 0.0
  %2156 = vmatprep.subr.mxu0 0.0
  %2157 = vmatpush2.msra.mxu0 0.0
  %2158 = vmatprep.subr.mxu0 0.0
  %2159 = vmatpush2.msra.mxu0 0.0
  %2160 = vmatprep.subr.mxu0 0.0
  %2161 = vmatpush2.msra.mxu0 0.0
  %2162 = vmatprep.subr.mxu0 0.0
  %2163 = vmatpush2.msra.mxu0 0.0
  %2164 = vmatprep.subr.mxu0 0.0
  %2165 = vmatpush2.msra.mxu0 0.0
  %2166 = vmatprep.subr.mxu0 0.0
  %2167 = vmatpush2.msra.mxu0 0.0
  %2168 = vmatprep.subr.mxu0 0.0
  %2169 = vmatpush2.msra.mxu0 0.0
  %2170 = vmatprep.subr.mxu0 0.0
  %2171 = vmatpush2.msra.mxu0 0.0
  %2172 = vmatprep.subr.mxu0 0.0
  %2173 = vmatpush2.msra.mxu0 0.0
  %2174 = vmatprep.subr.mxu0 0.0
  %2175 = vmatpush2.msra.mxu0 0.0
  %2176 = vmatprep.subr.mxu0 0.0
  %2177 = vmatpush2.msra.mxu0 0.0
  %2178 = vmatprep.subr.mxu0 0.0
  %2179 = vmatpush2.msra.mxu0 0.0
  %2180 = vmatprep.subr.mxu0 0.0
  %2181 = vmatpush2.msra.mxu0 0.0
  %2182 = vmatprep.mubr.f32.mxu0 0.0
  %v2183 = vand.u32 %v1267, 4294901760
  %2184 = vmatmul.mubr.f32.gmra.mxu0 %v2183
  %v2185 = vpop.f32.mrf.mxu0
  %v2186 = vadd.f32 %v1983, %v2185
  %v2187 = vpop.f32.mrf.mxu0
  %2188 = vmatprep.mubr.f32.mxu0 0.0
  %v2189 = vand.u32 %v1270, 4294901760
  %2190 = vmatmul.mubr.f32.gmra.mxu0 %v2189
  %v2191 = vpop.f32.mrf.mxu0
  %v2192 = vadd.f32 %v1991, %v2191
  %v2193 = vpop.f32.mrf.mxu0
  %2194 = vmatprep.mubr.f32.mxu0 0.0
  %v2195 = vand.u32 %v1273, 4294901760
  %2196 = vmatmul.mubr.f32.gmra.mxu0 %v2195
  %v2197 = vpop.f32.mrf.mxu0
  %v2198 = vadd.f32 %v1999, %v2197
  %v2199 = vpop.f32.mrf.mxu0
  %2200 = vmatprep.mubr.f32.mxu0 0.0
  %v2201 = vand.u32 %v1276, 4294901760
  %2202 = vmatmul.mubr.f32.gmra.mxu0 %v2201
  %v2203 = vpop.f32.mrf.mxu0
  %v2204 = vadd.f32 %v2007, %v2203
  %v2205 = vpop.f32.mrf.mxu0
  %2206 = vmatprep.mubr.f32.mxu0 0.0
  %v2207 = vand.u32 %v1279, 4294901760
  %2208 = vmatmul.mubr.f32.gmra.mxu0 %v2207
  %v2209 = vpop.f32.mrf.mxu0
  %v2210 = vadd.f32 %v2015, %v2209
  %v2211 = vpop.f32.mrf.mxu0
  %2212 = vmatprep.mubr.f32.mxu0 0.0
  %v2213 = vand.u32 %v1282, 4294901760
  %2214 = vmatmul.mubr.f32.gmra.mxu0 %v2213
  %v2215 = vpop.f32.mrf.mxu0
  %v2216 = vadd.f32 %v2023, %v2215
  %v2217 = vpop.f32.mrf.mxu0
  %2218 = vmatprep.mubr.f32.mxu0 0.0
  %v2219 = vand.u32 %v1285, 4294901760
  %2220 = vmatmul.mubr.f32.gmra.mxu0 %v2219
  %v2221 = vpop.f32.mrf.mxu0
  %v2222 = vadd.f32 %v2031, %v2221
  %v2223 = vpop.f32.mrf.mxu0
  %2224 = vmatprep.mubr.f32.mxu0 0.0
  %v2225 = vand.u32 %v1288, 4294901760
  %2226 = vmatmul.mubr.f32.gmra.mxu0 %v2225
  %v2227 = vpop.f32.mrf.mxu0
  %v2228 = vadd.f32 %v2039, %v2227
  %v2229 = vpop.f32.mrf.mxu0
  %2230 = vmatprep.mubr.f32.mxu0 0.0
  %v2231 = vand.u32 %v1291, 4294901760
  %2232 = vmatmul.mubr.f32.gmra.mxu0 %v2231
  %v2233 = vpop.f32.mrf.mxu0
  %v2234 = vadd.f32 %v2047, %v2233
  %v2235 = vpop.f32.mrf.mxu0
  %2236 = vmatprep.mubr.f32.mxu0 0.0
  %v2237 = vand.u32 %v1294, 4294901760
  %2238 = vmatmul.mubr.f32.gmra.mxu0 %v2237
  %v2239 = vpop.f32.mrf.mxu0
  %v2240 = vadd.f32 %v2055, %v2239
  %v2241 = vpop.f32.mrf.mxu0
  %2242 = vmatprep.mubr.f32.mxu0 0.0
  %v2243 = vand.u32 %v1297, 4294901760
  %2244 = vmatmul.mubr.f32.gmra.mxu0 %v2243
  %v2245 = vpop.f32.mrf.mxu0
  %v2246 = vadd.f32 %v2063, %v2245
  %v2247 = vpop.f32.mrf.mxu0
  %2248 = vmatprep.mubr.f32.mxu0 0.0
  %v2249 = vand.u32 %v1300, 4294901760
  %2250 = vmatmul.mubr.f32.gmra.mxu0 %v2249
  %v2251 = vpop.f32.mrf.mxu0
  %v2252 = vadd.f32 %v2071, %v2251
  %v2253 = vpop.f32.mrf.mxu0
  %2254 = vmatprep.mubr.f32.mxu0 0.0
  %v2255 = vand.u32 %v1303, 4294901760
  %2256 = vmatmul.mubr.f32.gmra.mxu0 %v2255
  %v2257 = vpop.f32.mrf.mxu0
  %v2258 = vadd.f32 %v2079, %v2257
  %v2259 = vpop.f32.mrf.mxu0
  %2260 = vmatprep.mubr.f32.mxu0 0.0
  %v2261 = vand.u32 %v1306, 4294901760
  %2262 = vmatmul.mubr.f32.gmra.mxu0 %v2261
  %v2263 = vpop.f32.mrf.mxu0
  %v2264 = vadd.f32 %v2087, %v2263
  %v2265 = vpop.f32.mrf.mxu0
  %2266 = vmatprep.mubr.f32.mxu0 0.0
  %v2267 = vand.u32 %v1309, 4294901760
  %2268 = vmatmul.mubr.f32.gmra.mxu0 %v2267
  %v2269 = vpop.f32.mrf.mxu0
  %v2270 = vadd.f32 %v2095, %v2269
  %v2271 = vpop.f32.mrf.mxu0
  %2272 = vmatprep.mubr.f32.mxu0 0.0
  %v2273 = vand.u32 %v1312, 4294901760
  %2274 = vmatmul.mubr.f32.gmra.mxu0 %v2273
  %v2275 = vpop.f32.mrf.mxu0
  %v2276 = vadd.f32 %v2103, %v2275
  %v2277 = vpop.f32.mrf.mxu0
  %2278 = vdwg.mxu0
  %2279 = vmatprep.subr.mxu0 0.0
  %2280 = vmatpush1.msra.mxu0 0.0
  %2281 = vmatprep.subr.mxu0 0.0
  %2282 = vmatpush1.msra.mxu0 0.0
  %2283 = vmatprep.subr.mxu0 0.0
  %2284 = vmatpush1.msra.mxu0 0.0
  %2285 = vmatprep.subr.mxu0 0.0
  %2286 = vmatpush1.msra.mxu0 0.0
  %2287 = vmatprep.subr.mxu0 0.0
  %2288 = vmatpush1.msra.mxu0 0.0
  %2289 = vmatprep.subr.mxu0 0.0
  %2290 = vmatpush1.msra.mxu0 0.0
  %2291 = vmatprep.subr.mxu0 0.0
  %2292 = vmatpush1.msra.mxu0 0.0
  %2293 = vmatprep.subr.mxu0 0.0
  %2294 = vmatpush1.msra.mxu0 0.0
  %2295 = vmatprep.subr.mxu0 0.0
  %2296 = vmatpush1.msra.mxu0 0.0
  %2297 = vmatprep.subr.mxu0 0.0
  %2298 = vmatpush1.msra.mxu0 0.0
  %2299 = vmatprep.subr.mxu0 0.0
  %2300 = vmatpush1.msra.mxu0 0.0
  %2301 = vmatprep.subr.mxu0 0.0
  %2302 = vmatpush1.msra.mxu0 0.0
  %2303 = vmatprep.subr.mxu0 0.0
  %v2304 = vand.u32 %v1257, 4294901760
  %2305 = vmatpush1.msra.mxu0 %v2304
  %2306 = vmatprep.subr.mxu0 0.0
  %v2307 = vand.u32 %v1256, 4294901760
  %2308 = vmatpush1.msra.mxu0 %v2307
  %2309 = vmatprep.subr.mxu0 0.0
  %v2310 = vand.u32 %v1255, 4294901760
  %2311 = vmatpush1.msra.mxu0 %v2310
  %2312 = vmatprep.subr.mxu0 0.0
  %v2313 = vand.u32 %v1254, 4294901760
  %2314 = vmatpush1.msra.mxu0 %v2313
  %2315 = vmatprep.subr.mxu0 0.0
  %2316 = vmatpush2.msra.mxu0 0.0
  %2317 = vmatprep.subr.mxu0 0.0
  %2318 = vmatpush2.msra.mxu0 0.0
  %2319 = vmatprep.subr.mxu0 0.0
  %2320 = vmatpush2.msra.mxu0 0.0
  %2321 = vmatprep.subr.mxu0 0.0
  %2322 = vmatpush2.msra.mxu0 0.0
  %2323 = vmatprep.subr.mxu0 0.0
  %2324 = vmatpush2.msra.mxu0 0.0
  %2325 = vmatprep.subr.mxu0 0.0
  %2326 = vmatpush2.msra.mxu0 0.0
  %2327 = vmatprep.subr.mxu0 0.0
  %2328 = vmatpush2.msra.mxu0 0.0
  %2329 = vmatprep.subr.mxu0 0.0
  %2330 = vmatpush2.msra.mxu0 0.0
  %2331 = vmatprep.subr.mxu0 0.0
  %2332 = vmatpush2.msra.mxu0 0.0
  %2333 = vmatprep.subr.mxu0 0.0
  %2334 = vmatpush2.msra.mxu0 0.0
  %2335 = vmatprep.subr.mxu0 0.0
  %2336 = vmatpush2.msra.mxu0 0.0
  %2337 = vmatprep.subr.mxu0 0.0
  %2338 = vmatpush2.msra.mxu0 0.0
  %2339 = vmatprep.subr.mxu0 0.0
  %2340 = vmatpush2.msra.mxu0 0.0
  %2341 = vmatprep.subr.mxu0 0.0
  %2342 = vmatpush2.msra.mxu0 0.0
  %2343 = vmatprep.subr.mxu0 0.0
  %2344 = vmatpush2.msra.mxu0 0.0
  %2345 = vmatprep.subr.mxu0 0.0
  %2346 = vmatpush2.msra.mxu0 0.0
  %2347 = vmatprep.mubr.f32.mxu0 0.0
  %v2348 = vand.u32 %v1267, 4294901760
  %2349 = vmatmul.mubr.f32.gmra.mxu0 %v2348
  %v2350 = vpop.f32.mrf.mxu0
  %v2351 = vadd.f32 %v2186, %v2350
  %v2352 = vpop.f32.mrf.mxu0
  %2353 = vmatprep.mubr.f32.mxu0 0.0
  %v2354 = vand.u32 %v1270, 4294901760
  %2355 = vmatmul.mubr.f32.gmra.mxu0 %v2354
  %v2356 = vpop.f32.mrf.mxu0
  %v2357 = vadd.f32 %v2192, %v2356
  %v2358 = vpop.f32.mrf.mxu0
  %2359 = vmatprep.mubr.f32.mxu0 0.0
  %v2360 = vand.u32 %v1273, 4294901760
  %2361 = vmatmul.mubr.f32.gmra.mxu0 %v2360
  %v2362 = vpop.f32.mrf.mxu0
  %v2363 = vadd.f32 %v2198, %v2362
  %v2364 = vpop.f32.mrf.mxu0
  %2365 = vmatprep.mubr.f32.mxu0 0.0
  %v2366 = vand.u32 %v1276, 4294901760
  %2367 = vmatmul.mubr.f32.gmra.mxu0 %v2366
  %v2368 = vpop.f32.mrf.mxu0
  %v2369 = vadd.f32 %v2204, %v2368
  %v2370 = vpop.f32.mrf.mxu0
  %2371 = vmatprep.mubr.f32.mxu0 0.0
  %v2372 = vand.u32 %v1279, 4294901760
  %2373 = vmatmul.mubr.f32.gmra.mxu0 %v2372
  %v2374 = vpop.f32.mrf.mxu0
  %v2375 = vadd.f32 %v2210, %v2374
  %v2376 = vpop.f32.mrf.mxu0
  %2377 = vmatprep.mubr.f32.mxu0 0.0
  %v2378 = vand.u32 %v1282, 4294901760
  %2379 = vmatmul.mubr.f32.gmra.mxu0 %v2378
  %v2380 = vpop.f32.mrf.mxu0
  %v2381 = vadd.f32 %v2216, %v2380
  %v2382 = vpop.f32.mrf.mxu0
  %2383 = vmatprep.mubr.f32.mxu0 0.0
  %v2384 = vand.u32 %v1285, 4294901760
  %2385 = vmatmul.mubr.f32.gmra.mxu0 %v2384
  %v2386 = vpop.f32.mrf.mxu0
  %v2387 = vadd.f32 %v2222, %v2386
  %v2388 = vpop.f32.mrf.mxu0
  %2389 = vmatprep.mubr.f32.mxu0 0.0
  %v2390 = vand.u32 %v1288, 4294901760
  %2391 = vmatmul.mubr.f32.gmra.mxu0 %v2390
  %v2392 = vpop.f32.mrf.mxu0
  %v2393 = vadd.f32 %v2228, %v2392
  %v2394 = vpop.f32.mrf.mxu0
  %2395 = vmatprep.mubr.f32.mxu0 0.0
  %v2396 = vand.u32 %v1291, 4294901760
  %2397 = vmatmul.mubr.f32.gmra.mxu0 %v2396
  %v2398 = vpop.f32.mrf.mxu0
  %v2399 = vadd.f32 %v2234, %v2398
  %v2400 = vpop.f32.mrf.mxu0
  %2401 = vmatprep.mubr.f32.mxu0 0.0
  %v2402 = vand.u32 %v1294, 4294901760
  %2403 = vmatmul.mubr.f32.gmra.mxu0 %v2402
  %v2404 = vpop.f32.mrf.mxu0
  %v2405 = vadd.f32 %v2240, %v2404
  %v2406 = vpop.f32.mrf.mxu0
  %2407 = vmatprep.mubr.f32.mxu0 0.0
  %v2408 = vand.u32 %v1297, 4294901760
  %2409 = vmatmul.mubr.f32.gmra.mxu0 %v2408
  %v2410 = vpop.f32.mrf.mxu0
  %v2411 = vadd.f32 %v2246, %v2410
  %v2412 = vpop.f32.mrf.mxu0
  %2413 = vmatprep.mubr.f32.mxu0 0.0
  %v2414 = vand.u32 %v1300, 4294901760
  %2415 = vmatmul.mubr.f32.gmra.mxu0 %v2414
  %v2416 = vpop.f32.mrf.mxu0
  %v2417 = vadd.f32 %v2252, %v2416
  %v2418 = vpop.f32.mrf.mxu0
  %2419 = vmatprep.mubr.f32.mxu0 0.0
  %v2420 = vand.u32 %v1303, 4294901760
  %2421 = vmatmul.mubr.f32.gmra.mxu0 %v2420
  %v2422 = vpop.f32.mrf.mxu0
  %v2423 = vadd.f32 %v2258, %v2422
  %v2424 = vpop.f32.mrf.mxu0
  %2425 = vmatprep.mubr.f32.mxu0 0.0
  %v2426 = vand.u32 %v1306, 4294901760
  %2427 = vmatmul.mubr.f32.gmra.mxu0 %v2426
  %v2428 = vpop.f32.mrf.mxu0
  %v2429 = vadd.f32 %v2264, %v2428
  %v2430 = vpop.f32.mrf.mxu0
  %2431 = vmatprep.mubr.f32.mxu0 0.0
  %v2432 = vand.u32 %v1309, 4294901760
  %2433 = vmatmul.mubr.f32.gmra.mxu0 %v2432
  %v2434 = vpop.f32.mrf.mxu0
  %v2435 = vadd.f32 %v2270, %v2434
  %v2436 = vpop.f32.mrf.mxu0
  %2437 = vmatprep.mubr.f32.mxu0 0.0
  %v2438 = vand.u32 %v1312, 4294901760
  %2439 = vmatmul.mubr.f32.gmra.mxu0 %v2438
  %v2440 = vpop.f32.mrf.mxu0
  %v2441 = vadd.f32 %v2276, %v2440
  %v2442 = vpop.f32.mrf.mxu0
  %2443 = vdwg.mxu0
  %vm2444 = vcmp.gt.f32.partialorder %v2351, 0.0
  %vm2445 = vcmp.gt.f32.partialorder %v2357, 0.0
  %vm2446 = vcmp.gt.f32.partialorder %v2363, 0.0
  %vm2447 = vcmp.gt.f32.partialorder %v2369, 0.0
  %vm2448 = vcmp.gt.f32.partialorder %v2375, 0.0
  %vm2449 = vcmp.gt.f32.partialorder %v2381, 0.0
  %vm2450 = vcmp.gt.f32.partialorder %v2387, 0.0
  %vm2451 = vcmp.gt.f32.partialorder %v2393, 0.0
  %vm2452 = vcmp.gt.f32.partialorder %v2399, 0.0
  %vm2453 = vcmp.gt.f32.partialorder %v2405, 0.0
  %vm2454 = vcmp.gt.f32.partialorder %v2411, 0.0
  %vm2455 = vcmp.gt.f32.partialorder %v2417, 0.0
  %vm2456 = vcmp.gt.f32.partialorder %v2423, 0.0
  %vm2457 = vcmp.gt.f32.partialorder %v2429, 0.0
  %vm2458 = vcmp.gt.f32.partialorder %v2435, 0.0
  %vm2459 = vcmp.gt.f32.partialorder %v2441, 0.0
  %v2460 = vmul.f32 %v2351, 0.1
  %v2461 = vmul.f32 %v2357, 0.1
  %v2462 = vmul.f32 %v2363, 0.1
  %v2463 = vmul.f32 %v2369, 0.1
  %v2464 = vmul.f32 %v2375, 0.1
  %v2465 = vmul.f32 %v2381, 0.1
  %v2466 = vmul.f32 %v2387, 0.1
  %v2467 = vmul.f32 %v2393, 0.1
  %v2468 = vmul.f32 %v2399, 0.1
  %v2469 = vmul.f32 %v2405, 0.1
  %v2470 = vmul.f32 %v2411, 0.1
  %v2471 = vmul.f32 %v2417, 0.1
  %v2472 = vmul.f32 %v2423, 0.1
  %v2473 = vmul.f32 %v2429, 0.1
  %v2474 = vmul.f32 %v2435, 0.1
  %v2475 = vmul.f32 %v2441, 0.1
  %v2476 = vsel %vm2444, %v2351, %v2460
  %v2477 = vsel %vm2445, %v2357, %v2461
  %v2478 = vsel %vm2446, %v2363, %v2462
  %v2479 = vsel %vm2447, %v2369, %v2463
  %v2480 = vsel %vm2448, %v2375, %v2464
  %v2481 = vsel %vm2449, %v2381, %v2465
  %v2482 = vsel %vm2450, %v2387, %v2466
  %v2483 = vsel %vm2451, %v2393, %v2467
  %v2484 = vsel %vm2452, %v2399, %v2468
  %v2485 = vsel %vm2453, %v2405, %v2469
  %v2486 = vsel %vm2454, %v2411, %v2470
  %v2487 = vsel %vm2455, %v2417, %v2471
  %v2488 = vsel %vm2456, %v2423, %v2472
  %v2489 = vsel %vm2457, %v2429, %v2473
  %v2490 = vsel %vm2458, %v2435, %v2474
  %v2491 = vsel %vm2459, %v2441, %v2475
  %v2492 = vld [vmem:[%s5] sm:$0x1]
  %v2493 = vld [vmem:[#allocation2] sm:$0x1]
  %2495 = vset.pattern.permute.xlu0 0
  %2496 = vperm.xlu0 %2495, %v2493
  %v2497 = vpop.permute.xlu0 %2496
  %v2499 = vlaneseq
  %v2500 = vshrl.u32 %v2499, 7
  %v2501 = vsub.s32 0, %v2500
  %v2502 = vrot.slane %v2497, %v2501
  %v2504 = vsel %vm1265, %v2492, 0
  %v2507 = vsel %vm1265, %v2476, 0
  %v2510 = vsel %vm1265, %v2477, 0
  %v2513 = vsel %vm1265, %v2478, 0
  %v2516 = vsel %vm1265, %v2479, 0
  %v2519 = vsel %vm1265, %v2480, 0
  %v2522 = vsel %vm1265, %v2481, 0
  %v2525 = vsel %vm1265, %v2482, 0
  %v2528 = vsel %vm1265, %v2483, 0
  %v2531 = vsel %vm1265, %v2484, 0
  %v2534 = vsel %vm1265, %v2485, 0
  %v2537 = vsel %vm1265, %v2486, 0
  %v2540 = vsel %vm1265, %v2487, 0
  %v2543 = vsel %vm1265, %v2488, 0
  %v2546 = vsel %vm1265, %v2489, 0
  %v2549 = vsel %vm1265, %v2490, 0
  %v2552 = vsel %vm1265, %v2491, 0
  %2554 = vmatprep.subr.mxu0 0.0
  %v2555 = vand.u32 %v2552, 4294901760
  %2556 = vmatpush1.xpose.msra.mxu0 %v2555
  %2557 = vmatprep.subr.mxu0 0.0
  %v2558 = vand.u32 %v2549, 4294901760
  %2559 = vmatpush1.xpose.msra.mxu0 %v2558
  %2560 = vmatprep.subr.mxu0 0.0
  %v2561 = vand.u32 %v2546, 4294901760
  %2562 = vmatpush1.xpose.msra.mxu0 %v2561
  %2563 = vmatprep.subr.mxu0 0.0
  %v2564 = vand.u32 %v2543, 4294901760
  %2565 = vmatpush1.xpose.msra.mxu0 %v2564
  %2566 = vmatprep.subr.mxu0 0.0
  %v2567 = vand.u32 %v2540, 4294901760
  %2568 = vmatpush1.xpose.msra.mxu0 %v2567
  %2569 = vmatprep.subr.mxu0 0.0
  %v2570 = vand.u32 %v2537, 4294901760
  %2571 = vmatpush1.xpose.msra.mxu0 %v2570
  %2572 = vmatprep.subr.mxu0 0.0
  %v2573 = vand.u32 %v2534, 4294901760
  %2574 = vmatpush1.xpose.msra.mxu0 %v2573
  %2575 = vmatprep.subr.mxu0 0.0
  %v2576 = vand.u32 %v2531, 4294901760
  %2577 = vmatpush1.xpose.msra.mxu0 %v2576
  %2578 = vmatprep.subr.mxu0 0.0
  %v2579 = vand.u32 %v2528, 4294901760
  %2580 = vmatpush1.xpose.msra.mxu0 %v2579
  %2581 = vmatprep.subr.mxu0 0.0
  %v2582 = vand.u32 %v2525, 4294901760
  %2583 = vmatpush1.xpose.msra.mxu0 %v2582
  %2584 = vmatprep.subr.mxu0 0.0
  %v2585 = vand.u32 %v2522, 4294901760
  %2586 = vmatpush1.xpose.msra.mxu0 %v2585
  %2587 = vmatprep.subr.mxu0 0.0
  %v2588 = vand.u32 %v2519, 4294901760
  %2589 = vmatpush1.xpose.msra.mxu0 %v2588
  %2590 = vmatprep.subr.mxu0 0.0
  %v2591 = vand.u32 %v2516, 4294901760
  %2592 = vmatpush1.xpose.msra.mxu0 %v2591
  %2593 = vmatprep.subr.mxu0 0.0
  %v2594 = vand.u32 %v2513, 4294901760
  %2595 = vmatpush1.xpose.msra.mxu0 %v2594
  %2596 = vmatprep.subr.mxu0 0.0
  %v2597 = vand.u32 %v2510, 4294901760
  %2598 = vmatpush1.xpose.msra.mxu0 %v2597
  %2599 = vmatprep.subr.mxu0 0.0
  %v2600 = vand.u32 %v2507, 4294901760
  %2601 = vmatpush1.xpose.msra.mxu0 %v2600
  %2602 = vmatprep.subr.mxu0 0.0
  %2603 = vmatpush2.xpose.msra.mxu0 0.0
  %2604 = vmatprep.subr.mxu0 0.0
  %2605 = vmatpush2.xpose.msra.mxu0 0.0
  %2606 = vmatprep.subr.mxu0 0.0
  %2607 = vmatpush2.xpose.msra.mxu0 0.0
  %2608 = vmatprep.subr.mxu0 0.0
  %2609 = vmatpush2.xpose.msra.mxu0 0.0
  %2610 = vmatprep.subr.mxu0 0.0
  %2611 = vmatpush2.xpose.msra.mxu0 0.0
  %2612 = vmatprep.subr.mxu0 0.0
  %2613 = vmatpush2.xpose.msra.mxu0 0.0
  %2614 = vmatprep.subr.mxu0 0.0
  %2615 = vmatpush2.xpose.msra.mxu0 0.0
  %2616 = vmatprep.subr.mxu0 0.0
  %2617 = vmatpush2.xpose.msra.mxu0 0.0
  %2618 = vmatprep.subr.mxu0 0.0
  %2619 = vmatpush2.xpose.msra.mxu0 0.0
  %2620 = vmatprep.subr.mxu0 0.0
  %2621 = vmatpush2.xpose.msra.mxu0 0.0
  %2622 = vmatprep.subr.mxu0 0.0
  %2623 = vmatpush2.xpose.msra.mxu0 0.0
  %2624 = vmatprep.subr.mxu0 0.0
  %2625 = vmatpush2.xpose.msra.mxu0 0.0
  %2626 = vmatprep.subr.mxu0 0.0
  %2627 = vmatpush2.xpose.msra.mxu0 0.0
  %2628 = vmatprep.subr.mxu0 0.0
  %2629 = vmatpush2.xpose.msra.mxu0 0.0
  %2630 = vmatprep.subr.mxu0 0.0
  %2631 = vmatpush2.xpose.msra.mxu0 0.0
  %2632 = vmatprep.subr.mxu0 0.0
  %2633 = vmatpush2.xpose.msra.mxu0 0.0
  %2634 = vmatprep.mubr.f32.mxu0 0.0
  %v2635 = vand.u32 %v2504, 4294901760
  %v2636 = vsub.f32 %v2504, %v2635
  %v2637 = vand.u32 %v2636, 4294901760
  %v2638 = vsub.f32 %v2636, %v2637
  %v2639 = vand.u32 %v2638, 4294901760
  %2640 = vmatmul.mubr.f32.gmra.mxu0 %v2639
  %v2641 = vpop.f32.mrf.mxu0
  %v2642 = vadd.f32 %v2502, %v2641
  %v2643 = vpop.f32.mrf.mxu0
  %2644 = vdwg.mxu0
  %2645 = vmatprep.subr.mxu0 0.0
  %v2646 = vand.u32 %v2552, 4294901760
  %v2647 = vsub.f32 %v2552, %v2646
  %v2648 = vand.u32 %v2647, 4294901760
  %v2649 = vsub.f32 %v2647, %v2648
  %v2650 = vand.u32 %v2649, 4294901760
  %2651 = vmatpush1.xpose.msra.mxu0 %v2650
  %2652 = vmatprep.subr.mxu0 0.0
  %v2653 = vand.u32 %v2549, 4294901760
  %v2654 = vsub.f32 %v2549, %v2653
  %v2655 = vand.u32 %v2654, 4294901760
  %v2656 = vsub.f32 %v2654, %v2655
  %v2657 = vand.u32 %v2656, 4294901760
  %2658 = vmatpush1.xpose.msra.mxu0 %v2657
  %2659 = vmatprep.subr.mxu0 0.0
  %v2660 = vand.u32 %v2546, 4294901760
  %v2661 = vsub.f32 %v2546, %v2660
  %v2662 = vand.u32 %v2661, 4294901760
  %v2663 = vsub.f32 %v2661, %v2662
  %v2664 = vand.u32 %v2663, 4294901760
  %2665 = vmatpush1.xpose.msra.mxu0 %v2664
  %2666 = vmatprep.subr.mxu0 0.0
  %v2667 = vand.u32 %v2543, 4294901760
  %v2668 = vsub.f32 %v2543, %v2667
  %v2669 = vand.u32 %v2668, 4294901760
  %v2670 = vsub.f32 %v2668, %v2669
  %v2671 = vand.u32 %v2670, 4294901760
  %2672 = vmatpush1.xpose.msra.mxu0 %v2671
  %2673 = vmatprep.subr.mxu0 0.0
  %v2674 = vand.u32 %v2540, 4294901760
  %v2675 = vsub.f32 %v2540, %v2674
  %v2676 = vand.u32 %v2675, 4294901760
  %v2677 = vsub.f32 %v2675, %v2676
  %v2678 = vand.u32 %v2677, 4294901760
  %2679 = vmatpush1.xpose.msra.mxu0 %v2678
  %2680 = vmatprep.subr.mxu0 0.0
  %v2681 = vand.u32 %v2537, 4294901760
  %v2682 = vsub.f32 %v2537, %v2681
  %v2683 = vand.u32 %v2682, 4294901760
  %v2684 = vsub.f32 %v2682, %v2683
  %v2685 = vand.u32 %v2684, 4294901760
  %2686 = vmatpush1.xpose.msra.mxu0 %v2685
  %2687 = vmatprep.subr.mxu0 0.0
  %v2688 = vand.u32 %v2534, 4294901760
  %v2689 = vsub.f32 %v2534, %v2688
  %v2690 = vand.u32 %v2689, 4294901760
  %v2691 = vsub.f32 %v2689, %v2690
  %v2692 = vand.u32 %v2691, 4294901760
  %2693 = vmatpush1.xpose.msra.mxu0 %v2692
  %2694 = vmatprep.subr.mxu0 0.0
  %v2695 = vand.u32 %v2531, 4294901760
  %v2696 = vsub.f32 %v2531, %v2695
  %v2697 = vand.u32 %v2696, 4294901760
  %v2698 = vsub.f32 %v2696, %v2697
  %v2699 = vand.u32 %v2698, 4294901760
  %2700 = vmatpush1.xpose.msra.mxu0 %v2699
  %2701 = vmatprep.subr.mxu0 0.0
  %v2702 = vand.u32 %v2528, 4294901760
  %v2703 = vsub.f32 %v2528, %v2702
  %v2704 = vand.u32 %v2703, 4294901760
  %v2705 = vsub.f32 %v2703, %v2704
  %v2706 = vand.u32 %v2705, 4294901760
  %2707 = vmatpush1.xpose.msra.mxu0 %v2706
  %2708 = vmatprep.subr.mxu0 0.0
  %v2709 = vand.u32 %v2525, 4294901760
  %v2710 = vsub.f32 %v2525, %v2709
  %v2711 = vand.u32 %v2710, 4294901760
  %v2712 = vsub.f32 %v2710, %v2711
  %v2713 = vand.u32 %v2712, 4294901760
  %2714 = vmatpush1.xpose.msra.mxu0 %v2713
  %2715 = vmatprep.subr.mxu0 0.0
  %v2716 = vand.u32 %v2522, 4294901760
  %v2717 = vsub.f32 %v2522, %v2716
  %v2718 = vand.u32 %v2717, 4294901760
  %v2719 = vsub.f32 %v2717, %v2718
  %v2720 = vand.u32 %v2719, 4294901760
  %2721 = vmatpush1.xpose.msra.mxu0 %v2720
  %2722 = vmatprep.subr.mxu0 0.0
  %v2723 = vand.u32 %v2519, 4294901760
  %v2724 = vsub.f32 %v2519, %v2723
  %v2725 = vand.u32 %v2724, 4294901760
  %v2726 = vsub.f32 %v2724, %v2725
  %v2727 = vand.u32 %v2726, 4294901760
  %2728 = vmatpush1.xpose.msra.mxu0 %v2727
  %2729 = vmatprep.subr.mxu0 0.0
  %v2730 = vand.u32 %v2516, 4294901760
  %v2731 = vsub.f32 %v2516, %v2730
  %v2732 = vand.u32 %v2731, 4294901760
  %v2733 = vsub.f32 %v2731, %v2732
  %v2734 = vand.u32 %v2733, 4294901760
  %2735 = vmatpush1.xpose.msra.mxu0 %v2734
  %2736 = vmatprep.subr.mxu0 0.0
  %v2737 = vand.u32 %v2513, 4294901760
  %v2738 = vsub.f32 %v2513, %v2737
  %v2739 = vand.u32 %v2738, 4294901760
  %v2740 = vsub.f32 %v2738, %v2739
  %v2741 = vand.u32 %v2740, 4294901760
  %2742 = vmatpush1.xpose.msra.mxu0 %v2741
  %2743 = vmatprep.subr.mxu0 0.0
  %v2744 = vand.u32 %v2510, 4294901760
  %v2745 = vsub.f32 %v2510, %v2744
  %v2746 = vand.u32 %v2745, 4294901760
  %v2747 = vsub.f32 %v2745, %v2746
  %v2748 = vand.u32 %v2747, 4294901760
  %2749 = vmatpush1.xpose.msra.mxu0 %v2748
  %2750 = vmatprep.subr.mxu0 0.0
  %v2751 = vand.u32 %v2507, 4294901760
  %v2752 = vsub.f32 %v2507, %v2751
  %v2753 = vand.u32 %v2752, 4294901760
  %v2754 = vsub.f32 %v2752, %v2753
  %v2755 = vand.u32 %v2754, 4294901760
  %2756 = vmatpush1.xpose.msra.mxu0 %v2755
  %2757 = vmatprep.subr.mxu0 0.0
  %2758 = vmatpush2.xpose.msra.mxu0 0.0
  %2759 = vmatprep.subr.mxu0 0.0
  %2760 = vmatpush2.xpose.msra.mxu0 0.0
  %2761 = vmatprep.subr.mxu0 0.0
  %2762 = vmatpush2.xpose.msra.mxu0 0.0
  %2763 = vmatprep.subr.mxu0 0.0
  %2764 = vmatpush2.xpose.msra.mxu0 0.0
  %2765 = vmatprep.subr.mxu0 0.0
  %2766 = vmatpush2.xpose.msra.mxu0 0.0
  %2767 = vmatprep.subr.mxu0 0.0
  %2768 = vmatpush2.xpose.msra.mxu0 0.0
  %2769 = vmatprep.subr.mxu0 0.0
  %2770 = vmatpush2.xpose.msra.mxu0 0.0
  %2771 = vmatprep.subr.mxu0 0.0
  %2772 = vmatpush2.xpose.msra.mxu0 0.0
  %2773 = vmatprep.subr.mxu0 0.0
  %2774 = vmatpush2.xpose.msra.mxu0 0.0
  %2775 = vmatprep.subr.mxu0 0.0
  %2776 = vmatpush2.xpose.msra.mxu0 0.0
  %2777 = vmatprep.subr.mxu0 0.0
  %2778 = vmatpush2.xpose.msra.mxu0 0.0
  %2779 = vmatprep.subr.mxu0 0.0
  %2780 = vmatpush2.xpose.msra.mxu0 0.0
  %2781 = vmatprep.subr.mxu0 0.0
  %2782 = vmatpush2.xpose.msra.mxu0 0.0
  %2783 = vmatprep.subr.mxu0 0.0
  %2784 = vmatpush2.xpose.msra.mxu0 0.0
  %2785 = vmatprep.subr.mxu0 0.0
  %2786 = vmatpush2.xpose.msra.mxu0 0.0
  %2787 = vmatprep.subr.mxu0 0.0
  %2788 = vmatpush2.xpose.msra.mxu0 0.0
  %2789 = vmatprep.mubr.f32.mxu0 0.0
  %v2790 = vand.u32 %v2504, 4294901760
  %2791 = vmatmul.mubr.f32.gmra.mxu0 %v2790
  %v2792 = vpop.f32.mrf.mxu0
  %v2793 = vadd.f32 %v2642, %v2792
  %v2794 = vpop.f32.mrf.mxu0
  %2795 = vdwg.mxu0
  %2796 = vmatprep.subr.mxu0 0.0
  %v2797 = vand.u32 %v2552, 4294901760
  %v2798 = vsub.f32 %v2552, %v2797
  %2799 = vmatpush1.xpose.msra.mxu0 %v2798
  %2800 = vmatprep.subr.mxu0 0.0
  %v2801 = vand.u32 %v2549, 4294901760
  %v2802 = vsub.f32 %v2549, %v2801
  %2803 = vmatpush1.xpose.msra.mxu0 %v2802
  %2804 = vmatprep.subr.mxu0 0.0
  %v2805 = vand.u32 %v2546, 4294901760
  %v2806 = vsub.f32 %v2546, %v2805
  %2807 = vmatpush1.xpose.msra.mxu0 %v2806
  %2808 = vmatprep.subr.mxu0 0.0
  %v2809 = vand.u32 %v2543, 4294901760
  %v2810 = vsub.f32 %v2543, %v2809
  %2811 = vmatpush1.xpose.msra.mxu0 %v2810
  %2812 = vmatprep.subr.mxu0 0.0
  %v2813 = vand.u32 %v2540, 4294901760
  %v2814 = vsub.f32 %v2540, %v2813
  %2815 = vmatpush1.xpose.msra.mxu0 %v2814
  %2816 = vmatprep.subr.mxu0 0.0
  %v2817 = vand.u32 %v2537, 4294901760
  %v2818 = vsub.f32 %v2537, %v2817
  %2819 = vmatpush1.xpose.msra.mxu0 %v2818
  %2820 = vmatprep.subr.mxu0 0.0
  %v2821 = vand.u32 %v2534, 4294901760
  %v2822 = vsub.f32 %v2534, %v2821
  %2823 = vmatpush1.xpose.msra.mxu0 %v2822
  %2824 = vmatprep.subr.mxu0 0.0
  %v2825 = vand.u32 %v2531, 4294901760
  %v2826 = vsub.f32 %v2531, %v2825
  %2827 = vmatpush1.xpose.msra.mxu0 %v2826
  %2828 = vmatprep.subr.mxu0 0.0
  %v2829 = vand.u32 %v2528, 4294901760
  %v2830 = vsub.f32 %v2528, %v2829
  %2831 = vmatpush1.xpose.msra.mxu0 %v2830
  %2832 = vmatprep.subr.mxu0 0.0
  %v2833 = vand.u32 %v2525, 4294901760
  %v2834 = vsub.f32 %v2525, %v2833
  %2835 = vmatpush1.xpose.msra.mxu0 %v2834
  %2836 = vmatprep.subr.mxu0 0.0
  %v2837 = vand.u32 %v2522, 4294901760
  %v2838 = vsub.f32 %v2522, %v2837
  %2839 = vmatpush1.xpose.msra.mxu0 %v2838
  %2840 = vmatprep.subr.mxu0 0.0
  %v2841 = vand.u32 %v2519, 4294901760
  %v2842 = vsub.f32 %v2519, %v2841
  %2843 = vmatpush1.xpose.msra.mxu0 %v2842
  %2844 = vmatprep.subr.mxu0 0.0
  %v2845 = vand.u32 %v2516, 4294901760
  %v2846 = vsub.f32 %v2516, %v2845
  %2847 = vmatpush1.xpose.msra.mxu0 %v2846
  %2848 = vmatprep.subr.mxu0 0.0
  %v2849 = vand.u32 %v2513, 4294901760
  %v2850 = vsub.f32 %v2513, %v2849
  %2851 = vmatpush1.xpose.msra.mxu0 %v2850
  %2852 = vmatprep.subr.mxu0 0.0
  %v2853 = vand.u32 %v2510, 4294901760
  %v2854 = vsub.f32 %v2510, %v2853
  %2855 = vmatpush1.xpose.msra.mxu0 %v2854
  %2856 = vmatprep.subr.mxu0 0.0
  %v2857 = vand.u32 %v2507, 4294901760
  %v2858 = vsub.f32 %v2507, %v2857
  %2859 = vmatpush1.xpose.msra.mxu0 %v2858
  %2860 = vmatprep.subr.mxu0 0.0
  %2861 = vmatpush2.xpose.msra.mxu0 0.0
  %2862 = vmatprep.subr.mxu0 0.0
  %2863 = vmatpush2.xpose.msra.mxu0 0.0
  %2864 = vmatprep.subr.mxu0 0.0
  %2865 = vmatpush2.xpose.msra.mxu0 0.0
  %2866 = vmatprep.subr.mxu0 0.0
  %2867 = vmatpush2.xpose.msra.mxu0 0.0
  %2868 = vmatprep.subr.mxu0 0.0
  %2869 = vmatpush2.xpose.msra.mxu0 0.0
  %2870 = vmatprep.subr.mxu0 0.0
  %2871 = vmatpush2.xpose.msra.mxu0 0.0
  %2872 = vmatprep.subr.mxu0 0.0
  %2873 = vmatpush2.xpose.msra.mxu0 0.0
  %2874 = vmatprep.subr.mxu0 0.0
  %2875 = vmatpush2.xpose.msra.mxu0 0.0
  %2876 = vmatprep.subr.mxu0 0.0
  %2877 = vmatpush2.xpose.msra.mxu0 0.0
  %2878 = vmatprep.subr.mxu0 0.0
  %2879 = vmatpush2.xpose.msra.mxu0 0.0
  %2880 = vmatprep.subr.mxu0 0.0
  %2881 = vmatpush2.xpose.msra.mxu0 0.0
  %2882 = vmatprep.subr.mxu0 0.0
  %2883 = vmatpush2.xpose.msra.mxu0 0.0
  %2884 = vmatprep.subr.mxu0 0.0
  %2885 = vmatpush2.xpose.msra.mxu0 0.0
  %2886 = vmatprep.subr.mxu0 0.0
  %2887 = vmatpush2.xpose.msra.mxu0 0.0
  %2888 = vmatprep.subr.mxu0 0.0
  %2889 = vmatpush2.xpose.msra.mxu0 0.0
  %2890 = vmatprep.subr.mxu0 0.0
  %2891 = vmatpush2.xpose.msra.mxu0 0.0
  %2892 = vmatprep.mubr.f32.mxu0 0.0
  %v2893 = vand.u32 %v2504, 4294901760
  %v2894 = vsub.f32 %v2504, %v2893
  %2895 = vmatmul.mubr.f32.gmra.mxu0 %v2894
  %v2896 = vpop.f32.mrf.mxu0
  %v2897 = vadd.f32 %v2793, %v2896
  %v2898 = vpop.f32.mrf.mxu0
  %2899 = vdwg.mxu0
  %2900 = vmatprep.subr.mxu0 0.0
  %v2901 = vand.u32 %v2552, 4294901760
  %2902 = vmatpush1.xpose.msra.mxu0 %v2901
  %2903 = vmatprep.subr.mxu0 0.0
  %v2904 = vand.u32 %v2549, 4294901760
  %2905 = vmatpush1.xpose.msra.mxu0 %v2904
  %2906 = vmatprep.subr.mxu0 0.0
  %v2907 = vand.u32 %v2546, 4294901760
  %2908 = vmatpush1.xpose.msra.mxu0 %v2907
  %2909 = vmatprep.subr.mxu0 0.0
  %v2910 = vand.u32 %v2543, 4294901760
  %2911 = vmatpush1.xpose.msra.mxu0 %v2910
  %2912 = vmatprep.subr.mxu0 0.0
  %v2913 = vand.u32 %v2540, 4294901760
  %2914 = vmatpush1.xpose.msra.mxu0 %v2913
  %2915 = vmatprep.subr.mxu0 0.0
  %v2916 = vand.u32 %v2537, 4294901760
  %2917 = vmatpush1.xpose.msra.mxu0 %v2916
  %2918 = vmatprep.subr.mxu0 0.0
  %v2919 = vand.u32 %v2534, 4294901760
  %2920 = vmatpush1.xpose.msra.mxu0 %v2919
  %2921 = vmatprep.subr.mxu0 0.0
  %v2922 = vand.u32 %v2531, 4294901760
  %2923 = vmatpush1.xpose.msra.mxu0 %v2922
  %2924 = vmatprep.subr.mxu0 0.0
  %v2925 = vand.u32 %v2528, 4294901760
  %2926 = vmatpush1.xpose.msra.mxu0 %v2925
  %2927 = vmatprep.subr.mxu0 0.0
  %v2928 = vand.u32 %v2525, 4294901760
  %2929 = vmatpush1.xpose.msra.mxu0 %v2928
  %2930 = vmatprep.subr.mxu0 0.0
  %v2931 = vand.u32 %v2522, 4294901760
  %2932 = vmatpush1.xpose.msra.mxu0 %v2931
  %2933 = vmatprep.subr.mxu0 0.0
  %v2934 = vand.u32 %v2519, 4294901760
  %2935 = vmatpush1.xpose.msra.mxu0 %v2934
  %2936 = vmatprep.subr.mxu0 0.0
  %v2937 = vand.u32 %v2516, 4294901760
  %2938 = vmatpush1.xpose.msra.mxu0 %v2937
  %2939 = vmatprep.subr.mxu0 0.0
  %v2940 = vand.u32 %v2513, 4294901760
  %2941 = vmatpush1.xpose.msra.mxu0 %v2940
  %2942 = vmatprep.subr.mxu0 0.0
  %v2943 = vand.u32 %v2510, 4294901760
  %2944 = vmatpush1.xpose.msra.mxu0 %v2943
  %2945 = vmatprep.subr.mxu0 0.0
  %v2946 = vand.u32 %v2507, 4294901760
  %2947 = vmatpush1.xpose.msra.mxu0 %v2946
  %2948 = vmatprep.subr.mxu0 0.0
  %2949 = vmatpush2.xpose.msra.mxu0 0.0
  %2950 = vmatprep.subr.mxu0 0.0
  %2951 = vmatpush2.xpose.msra.mxu0 0.0
  %2952 = vmatprep.subr.mxu0 0.0
  %2953 = vmatpush2.xpose.msra.mxu0 0.0
  %2954 = vmatprep.subr.mxu0 0.0
  %2955 = vmatpush2.xpose.msra.mxu0 0.0
  %2956 = vmatprep.subr.mxu0 0.0
  %2957 = vmatpush2.xpose.msra.mxu0 0.0
  %2958 = vmatprep.subr.mxu0 0.0
  %2959 = vmatpush2.xpose.msra.mxu0 0.0
  %2960 = vmatprep.subr.mxu0 0.0
  %2961 = vmatpush2.xpose.msra.mxu0 0.0
  %2962 = vmatprep.subr.mxu0 0.0
  %2963 = vmatpush2.xpose.msra.mxu0 0.0
  %2964 = vmatprep.subr.mxu0 0.0
  %2965 = vmatpush2.xpose.msra.mxu0 0.0
  %2966 = vmatprep.subr.mxu0 0.0
  %2967 = vmatpush2.xpose.msra.mxu0 0.0
  %2968 = vmatprep.subr.mxu0 0.0
  %2969 = vmatpush2.xpose.msra.mxu0 0.0
  %2970 = vmatprep.subr.mxu0 0.0
  %2971 = vmatpush2.xpose.msra.mxu0 0.0
  %2972 = vmatprep.subr.mxu0 0.0
  %2973 = vmatpush2.xpose.msra.mxu0 0.0
  %2974 = vmatprep.subr.mxu0 0.0
  %2975 = vmatpush2.xpose.msra.mxu0 0.0
  %2976 = vmatprep.subr.mxu0 0.0
  %2977 = vmatpush2.xpose.msra.mxu0 0.0
  %2978 = vmatprep.subr.mxu0 0.0
  %2979 = vmatpush2.xpose.msra.mxu0 0.0
  %2980 = vmatprep.mubr.f32.mxu0 0.0
  %v2981 = vand.u32 %v2504, 4294901760
  %v2982 = vsub.f32 %v2504, %v2981
  %v2983 = vand.u32 %v2982, 4294901760
  %2984 = vmatmul.mubr.f32.gmra.mxu0 %v2983
  %v2985 = vpop.f32.mrf.mxu0
  %v2986 = vadd.f32 %v2897, %v2985
  %v2987 = vpop.f32.mrf.mxu0
  %2988 = vdwg.mxu0
  %2989 = vmatprep.subr.mxu0 0.0
  %v2990 = vand.u32 %v2552, 4294901760
  %v2991 = vsub.f32 %v2552, %v2990
  %v2992 = vand.u32 %v2991, 4294901760
  %2993 = vmatpush1.xpose.msra.mxu0 %v2992
  %2994 = vmatprep.subr.mxu0 0.0
  %v2995 = vand.u32 %v2549, 4294901760
  %v2996 = vsub.f32 %v2549, %v2995
  %v2997 = vand.u32 %v2996, 4294901760
  %2998 = vmatpush1.xpose.msra.mxu0 %v2997
  %2999 = vmatprep.subr.mxu0 0.0
  %v3000 = vand.u32 %v2546, 4294901760
  %v3001 = vsub.f32 %v2546, %v3000
  %v3002 = vand.u32 %v3001, 4294901760
  %3003 = vmatpush1.xpose.msra.mxu0 %v3002
  %3004 = vmatprep.subr.mxu0 0.0
  %v3005 = vand.u32 %v2543, 4294901760
  %v3006 = vsub.f32 %v2543, %v3005
  %v3007 = vand.u32 %v3006, 4294901760
  %3008 = vmatpush1.xpose.msra.mxu0 %v3007
  %3009 = vmatprep.subr.mxu0 0.0
  %v3010 = vand.u32 %v2540, 4294901760
  %v3011 = vsub.f32 %v2540, %v3010
  %v3012 = vand.u32 %v3011, 4294901760
  %3013 = vmatpush1.xpose.msra.mxu0 %v3012
  %3014 = vmatprep.subr.mxu0 0.0
  %v3015 = vand.u32 %v2537, 4294901760
  %v3016 = vsub.f32 %v2537, %v3015
  %v3017 = vand.u32 %v3016, 4294901760
  %3018 = vmatpush1.xpose.msra.mxu0 %v3017
  %3019 = vmatprep.subr.mxu0 0.0
  %v3020 = vand.u32 %v2534, 4294901760
  %v3021 = vsub.f32 %v2534, %v3020
  %v3022 = vand.u32 %v3021, 4294901760
  %3023 = vmatpush1.xpose.msra.mxu0 %v3022
  %3024 = vmatprep.subr.mxu0 0.0
  %v3025 = vand.u32 %v2531, 4294901760
  %v3026 = vsub.f32 %v2531, %v3025
  %v3027 = vand.u32 %v3026, 4294901760
  %3028 = vmatpush1.xpose.msra.mxu0 %v3027
  %3029 = vmatprep.subr.mxu0 0.0
  %v3030 = vand.u32 %v2528, 4294901760
  %v3031 = vsub.f32 %v2528, %v3030
  %v3032 = vand.u32 %v3031, 4294901760
  %3033 = vmatpush1.xpose.msra.mxu0 %v3032
  %3034 = vmatprep.subr.mxu0 0.0
  %v3035 = vand.u32 %v2525, 4294901760
  %v3036 = vsub.f32 %v2525, %v3035
  %v3037 = vand.u32 %v3036, 4294901760
  %3038 = vmatpush1.xpose.msra.mxu0 %v3037
  %3039 = vmatprep.subr.mxu0 0.0
  %v3040 = vand.u32 %v2522, 4294901760
  %v3041 = vsub.f32 %v2522, %v3040
  %v3042 = vand.u32 %v3041, 4294901760
  %3043 = vmatpush1.xpose.msra.mxu0 %v3042
  %3044 = vmatprep.subr.mxu0 0.0
  %v3045 = vand.u32 %v2519, 4294901760
  %v3046 = vsub.f32 %v2519, %v3045
  %v3047 = vand.u32 %v3046, 4294901760
  %3048 = vmatpush1.xpose.msra.mxu0 %v3047
  %3049 = vmatprep.subr.mxu0 0.0
  %v3050 = vand.u32 %v2516, 4294901760
  %v3051 = vsub.f32 %v2516, %v3050
  %v3052 = vand.u32 %v3051, 4294901760
  %3053 = vmatpush1.xpose.msra.mxu0 %v3052
  %3054 = vmatprep.subr.mxu0 0.0
  %v3055 = vand.u32 %v2513, 4294901760
  %v3056 = vsub.f32 %v2513, %v3055
  %v3057 = vand.u32 %v3056, 4294901760
  %3058 = vmatpush1.xpose.msra.mxu0 %v3057
  %3059 = vmatprep.subr.mxu0 0.0
  %v3060 = vand.u32 %v2510, 4294901760
  %v3061 = vsub.f32 %v2510, %v3060
  %v3062 = vand.u32 %v3061, 4294901760
  %3063 = vmatpush1.xpose.msra.mxu0 %v3062
  %3064 = vmatprep.subr.mxu0 0.0
  %v3065 = vand.u32 %v2507, 4294901760
  %v3066 = vsub.f32 %v2507, %v3065
  %v3067 = vand.u32 %v3066, 4294901760
  %3068 = vmatpush1.xpose.msra.mxu0 %v3067
  %3069 = vmatprep.subr.mxu0 0.0
  %3070 = vmatpush2.xpose.msra.mxu0 0.0
  %3071 = vmatprep.subr.mxu0 0.0
  %3072 = vmatpush2.xpose.msra.mxu0 0.0
  %3073 = vmatprep.subr.mxu0 0.0
  %3074 = vmatpush2.xpose.msra.mxu0 0.0
  %3075 = vmatprep.subr.mxu0 0.0
  %3076 = vmatpush2.xpose.msra.mxu0 0.0
  %3077 = vmatprep.subr.mxu0 0.0
  %3078 = vmatpush2.xpose.msra.mxu0 0.0
  %3079 = vmatprep.subr.mxu0 0.0
  %3080 = vmatpush2.xpose.msra.mxu0 0.0
  %3081 = vmatprep.subr.mxu0 0.0
  %3082 = vmatpush2.xpose.msra.mxu0 0.0
  %3083 = vmatprep.subr.mxu0 0.0
  %3084 = vmatpush2.xpose.msra.mxu0 0.0
  %3085 = vmatprep.subr.mxu0 0.0
  %3086 = vmatpush2.xpose.msra.mxu0 0.0
  %3087 = vmatprep.subr.mxu0 0.0
  %3088 = vmatpush2.xpose.msra.mxu0 0.0
  %3089 = vmatprep.subr.mxu0 0.0
  %3090 = vmatpush2.xpose.msra.mxu0 0.0
  %3091 = vmatprep.subr.mxu0 0.0
  %3092 = vmatpush2.xpose.msra.mxu0 0.0
  %3093 = vmatprep.subr.mxu0 0.0
  %3094 = vmatpush2.xpose.msra.mxu0 0.0
  %3095 = vmatprep.subr.mxu0 0.0
  %3096 = vmatpush2.xpose.msra.mxu0 0.0
  %3097 = vmatprep.subr.mxu0 0.0
  %3098 = vmatpush2.xpose.msra.mxu0 0.0
  %3099 = vmatprep.subr.mxu0 0.0
  %3100 = vmatpush2.xpose.msra.mxu0 0.0
  %3101 = vmatprep.mubr.f32.mxu0 0.0
  %v3102 = vand.u32 %v2504, 4294901760
  %3103 = vmatmul.mubr.f32.gmra.mxu0 %v3102
  %v3104 = vpop.f32.mrf.mxu0
  %v3105 = vadd.f32 %v2986, %v3104
  %v3106 = vpop.f32.mrf.mxu0
  %3107 = vdwg.mxu0
  %3108 = vmatprep.subr.mxu0 0.0
  %v3109 = vand.u32 %v2552, 4294901760
  %3110 = vmatpush1.xpose.msra.mxu0 %v3109
  %3111 = vmatprep.subr.mxu0 0.0
  %v3112 = vand.u32 %v2549, 4294901760
  %3113 = vmatpush1.xpose.msra.mxu0 %v3112
  %3114 = vmatprep.subr.mxu0 0.0
  %v3115 = vand.u32 %v2546, 4294901760
  %3116 = vmatpush1.xpose.msra.mxu0 %v3115
  %3117 = vmatprep.subr.mxu0 0.0
  %v3118 = vand.u32 %v2543, 4294901760
  %3119 = vmatpush1.xpose.msra.mxu0 %v3118
  %3120 = vmatprep.subr.mxu0 0.0
  %v3121 = vand.u32 %v2540, 4294901760
  %3122 = vmatpush1.xpose.msra.mxu0 %v3121
  %3123 = vmatprep.subr.mxu0 0.0
  %v3124 = vand.u32 %v2537, 4294901760
  %3125 = vmatpush1.xpose.msra.mxu0 %v3124
  %3126 = vmatprep.subr.mxu0 0.0
  %v3127 = vand.u32 %v2534, 4294901760
  %3128 = vmatpush1.xpose.msra.mxu0 %v3127
  %3129 = vmatprep.subr.mxu0 0.0
  %v3130 = vand.u32 %v2531, 4294901760
  %3131 = vmatpush1.xpose.msra.mxu0 %v3130
  %3132 = vmatprep.subr.mxu0 0.0
  %v3133 = vand.u32 %v2528, 4294901760
  %3134 = vmatpush1.xpose.msra.mxu0 %v3133
  %3135 = vmatprep.subr.mxu0 0.0
  %v3136 = vand.u32 %v2525, 4294901760
  %3137 = vmatpush1.xpose.msra.mxu0 %v3136
  %3138 = vmatprep.subr.mxu0 0.0
  %v3139 = vand.u32 %v2522, 4294901760
  %3140 = vmatpush1.xpose.msra.mxu0 %v3139
  %3141 = vmatprep.subr.mxu0 0.0
  %v3142 = vand.u32 %v2519, 4294901760
  %3143 = vmatpush1.xpose.msra.mxu0 %v3142
  %3144 = vmatprep.subr.mxu0 0.0
  %v3145 = vand.u32 %v2516, 4294901760
  %3146 = vmatpush1.xpose.msra.mxu0 %v3145
  %3147 = vmatprep.subr.mxu0 0.0
  %v3148 = vand.u32 %v2513, 4294901760
  %3149 = vmatpush1.xpose.msra.mxu0 %v3148
  %3150 = vmatprep.subr.mxu0 0.0
  %v3151 = vand.u32 %v2510, 4294901760
  %3152 = vmatpush1.xpose.msra.mxu0 %v3151
  %3153 = vmatprep.subr.mxu0 0.0
  %v3154 = vand.u32 %v2507, 4294901760
  %3155 = vmatpush1.xpose.msra.mxu0 %v3154
  %3156 = vmatprep.subr.mxu0 0.0
  %3157 = vmatpush2.xpose.msra.mxu0 0.0
  %3158 = vmatprep.subr.mxu0 0.0
  %3159 = vmatpush2.xpose.msra.mxu0 0.0
  %3160 = vmatprep.subr.mxu0 0.0
  %3161 = vmatpush2.xpose.msra.mxu0 0.0
  %3162 = vmatprep.subr.mxu0 0.0
  %3163 = vmatpush2.xpose.msra.mxu0 0.0
  %3164 = vmatprep.subr.mxu0 0.0
  %3165 = vmatpush2.xpose.msra.mxu0 0.0
  %3166 = vmatprep.subr.mxu0 0.0
  %3167 = vmatpush2.xpose.msra.mxu0 0.0
  %3168 = vmatprep.subr.mxu0 0.0
  %3169 = vmatpush2.xpose.msra.mxu0 0.0
  %3170 = vmatprep.subr.mxu0 0.0
  %3171 = vmatpush2.xpose.msra.mxu0 0.0
  %3172 = vmatprep.subr.mxu0 0.0
  %3173 = vmatpush2.xpose.msra.mxu0 0.0
  %3174 = vmatprep.subr.mxu0 0.0
  %3175 = vmatpush2.xpose.msra.mxu0 0.0
  %3176 = vmatprep.subr.mxu0 0.0
  %3177 = vmatpush2.xpose.msra.mxu0 0.0
  %3178 = vmatprep.subr.mxu0 0.0
  %3179 = vmatpush2.xpose.msra.mxu0 0.0
  %3180 = vmatprep.subr.mxu0 0.0
  %3181 = vmatpush2.xpose.msra.mxu0 0.0
  %3182 = vmatprep.subr.mxu0 0.0
  %3183 = vmatpush2.xpose.msra.mxu0 0.0
  %3184 = vmatprep.subr.mxu0 0.0
  %3185 = vmatpush2.xpose.msra.mxu0 0.0
  %3186 = vmatprep.subr.mxu0 0.0
  %3187 = vmatpush2.xpose.msra.mxu0 0.0
  %3188 = vmatprep.mubr.f32.mxu0 0.0
  %v3189 = vand.u32 %v2504, 4294901760
  %3190 = vmatmul.mubr.f32.gmra.mxu0 %v3189
  %v3191 = vpop.f32.mrf.mxu0
  %v3192 = vadd.f32 %v3105, %v3191
  %v3193 = vpop.f32.mrf.mxu0
  %3194 = vdwg.mxu0
  %3195 = vst [vmem:[%s7] sm:$0x1] %v3192
  // Predicated region
  $region30: #{discriminator_forward.1} parent=0 // pred_check
    _
  $region31: #{discriminator_forward.1} parent=0 // pred_check_branch
    %3197 = sbr.rel (0) target = $region33
  $region32: #{discriminator_forward.1} parent=0 // pred_region
    _
  $region33: #{discriminator_forward.1} parent=0 // pred_fallthru
    _
  // Predicated region
  $region34: #{discriminator_forward.1} parent=0 // pred_check
    _
  $region35: #{discriminator_forward.1} parent=0 // pred_check_branch
    %3199 = sbr.rel (0) target = $region37
  $region36: #{discriminator_forward.1} parent=0 // pred_region
    _
  $region37: #{discriminator_forward.1} parent=0 // pred_fallthru
    _

</llo_original>
